<compile_context>
chip_gen: v7x
topology: tpu7x:2x2x1
jax: 0.10.0
libtpu: 0.0.40
codegen_flags: <defaults>
</compile_context>

<pallas_src>
import functools

import jax
import jax.numpy as jnp
from jax.experimental import pallas as pl
from jax.experimental.pallas import tpu as pltpu

# ---- small BERT config (scaled-down, shapes consistent with the module) ----
VOCAB = 100
TYPE_VOCAB = 2
MAX_POS = 32
HIDDEN = 32
HEADS = 2
HEAD_DIM = HIDDEN // HEADS
LAYERS = 2
INTER = 64
NUM_LABELS = 6
LN_EPS = 1e-12
MASK_NEG = -10000.0


# --------------------------- in-kernel helpers -------------------------------

def _layernorm(x, g, b):
    mu = jnp.mean(x, axis=-1, keepdims=True)
    var = jnp.mean((x - mu) ** 2, axis=-1, keepdims=True)
    return (x - mu) * jax.lax.rsqrt(var + LN_EPS) * g + b


def _gelu(y):  # exact (erf) GELU, as in HF BERT
    return 0.5 * y * (1.0 + jax.lax.erf(y * 0.7071067811865476))


# --------------------------- fused Pallas kernel ------------------------------

def _nli_fused_kernel(
    emb_ref, mask_ref, emb_ln_g_ref, emb_ln_b_ref,
    wqkv_ref, bqkv_ref, wo_ref, bo_ref, ln1_g_ref, ln1_b_ref,
    wi_ref, bi_ref, wo2_ref, bo2_ref, ln2_g_ref, ln2_b_ref,
    pool_w_ref, pool_b_ref, cls_w_ref, cls_b_ref,
    out_ref, ctx_ref, *, batch, seq,
):
    """Entire BERT-classifier forward; everything VMEM-resident, one launch."""
    scale = 1.0 / (HEAD_DIM ** 0.5)

    # Embedding LayerNorm (no residual stream yet).
    h = _layernorm(emb_ref[...], emb_ln_g_ref[...], emb_ln_b_ref[...])

    mask = mask_ref[...]  # (B, S) additive mask (0 / -10000), broadcast in-kernel

    for layer in range(LAYERS):
        # ---- fused QKV projection: one MXU matmul, 3*HIDDEN-wide output ----
        qkv = jnp.dot(h, wqkv_ref[layer],
                      preferred_element_type=jnp.float32) + bqkv_ref[layer]

        # ---- per-(batch, head) attention; heads reassembled lane-dense ----
        for b in range(batch):
            row0 = b * seq
            mrow = mask[b:b + 1, :]                      # (1, S) -> bcast over queries
            for hd in range(HEADS):
                c0 = hd * HEAD_DIM
                q = qkv[row0:row0 + seq, c0:c0 + HEAD_DIM]
                k = qkv[row0:row0 + seq, HIDDEN + c0:HIDDEN + c0 + HEAD_DIM]
                v = qkv[row0:row0 + seq, 2 * HIDDEN + c0:2 * HIDDEN + c0 + HEAD_DIM]
                s = jax.lax.dot_general(                 # q @ k^T, (S, S)
                    q, k, (((1,), (1,)), ((), ())),
                    preferred_element_type=jnp.float32) * scale + mrow
                m = jnp.max(s, axis=-1, keepdims=True)
                p = jnp.exp(s - m)
                p = p / jnp.sum(p, axis=-1, keepdims=True)
                ctx_ref[pl.ds(row0, seq), pl.ds(c0, HEAD_DIM)] = jnp.dot(
                    p, v, preferred_element_type=jnp.float32)

        # ---- attention output projection + residual + LN ----
        ctx = ctx_ref[...]                               # (B*S, HIDDEN), lane-dense
        attn_out = jnp.dot(ctx, wo_ref[layer],
                           preferred_element_type=jnp.float32) + bo_ref[layer]
        h = _layernorm(attn_out + h, ln1_g_ref[layer], ln1_b_ref[layer])

        # ---- feed-forward + residual + LN ----
        inter = _gelu(jnp.dot(h, wi_ref[layer],
                              preferred_element_type=jnp.float32) + bi_ref[layer])
        ffn = jnp.dot(inter, wo2_ref[layer],
                      preferred_element_type=jnp.float32) + bo2_ref[layer]
        h = _layernorm(ffn + h, ln2_g_ref[layer], ln2_b_ref[layer])

    # ---- pooler on [CLS] rows (0, S, 2S, ...) then classifier ----
    cls = jnp.concatenate([h[b * seq:b * seq + 1, :] for b in range(batch)], axis=0)
    pooled = jnp.tanh(jnp.dot(cls, pool_w_ref[...],
                              preferred_element_type=jnp.float32) + pool_b_ref[...])
    out_ref[...] = jnp.dot(pooled, cls_w_ref[...],
                           preferred_element_type=jnp.float32) + cls_b_ref[...]


# --------------------------- parameter init / packing ------------------------

def init_params(key):
    std = 0.02
    keys = iter(jax.random.split(key, 3 + LAYERS * 6 + 2))

    def lin(din, dout):
        return (jax.random.normal(next(keys), (din, dout), jnp.float32) * std,
                jnp.zeros((dout,), jnp.float32))

    p = {
        "word_emb": jax.random.normal(next(keys), (VOCAB, HIDDEN), jnp.float32) * std,
        "pos_emb": jax.random.normal(next(keys), (MAX_POS, HIDDEN), jnp.float32) * std,
        "type_emb": jax.random.normal(next(keys), (TYPE_VOCAB, HIDDEN), jnp.float32) * std,
        "emb_ln_g": jnp.ones((HIDDEN,), jnp.float32),
        "emb_ln_b": jnp.zeros((HIDDEN,), jnp.float32),
        "layers": [],
    }
    for _ in range(LAYERS):
        layer = {}
        layer["wq"], layer["bq"] = lin(HIDDEN, HIDDEN)
        layer["wk"], layer["bk"] = lin(HIDDEN, HIDDEN)
        layer["wv"], layer["bv"] = lin(HIDDEN, HIDDEN)
        layer["wo"], layer["bo"] = lin(HIDDEN, HIDDEN)
        layer["ln1_g"] = jnp.ones((HIDDEN,), jnp.float32)
        layer["ln1_b"] = jnp.zeros((HIDDEN,), jnp.float32)
        layer["wi"], layer["bi"] = lin(HIDDEN, INTER)
        layer["wo2"], layer["bo2"] = lin(INTER, HIDDEN)
        layer["ln2_g"] = jnp.ones((HIDDEN,), jnp.float32)
        layer["ln2_b"] = jnp.zeros((HIDDEN,), jnp.float32)
        p["layers"].append(layer)
    p["pool_w"], p["pool_b"] = lin(HIDDEN, HIDDEN)
    p["cls_w"], p["cls_b"] = lin(HIDDEN, NUM_LABELS)
    return p


def pack_params(p):
    """Fuse QKV and stack per-layer weights so the fused kernel takes few inputs."""
    L = p["layers"]
    return {
        "word_emb": p["word_emb"], "pos_emb": p["pos_emb"], "type_emb": p["type_emb"],
        "emb_ln_g": p["emb_ln_g"].reshape(1, HIDDEN),
        "emb_ln_b": p["emb_ln_b"].reshape(1, HIDDEN),
        "wqkv": jnp.stack([jnp.concatenate([l["wq"], l["wk"], l["wv"]], axis=1) for l in L]),
        "bqkv": jnp.stack([jnp.concatenate([l["bq"], l["bk"], l["bv"]]).reshape(1, 3 * HIDDEN)
                           for l in L]),
        "wo": jnp.stack([l["wo"] for l in L]),
        "bo": jnp.stack([l["bo"].reshape(1, HIDDEN) for l in L]),
        "ln1_g": jnp.stack([l["ln1_g"].reshape(1, HIDDEN) for l in L]),
        "ln1_b": jnp.stack([l["ln1_b"].reshape(1, HIDDEN) for l in L]),
        "wi": jnp.stack([l["wi"] for l in L]),
        "bi": jnp.stack([l["bi"].reshape(1, INTER) for l in L]),
        "wo2": jnp.stack([l["wo2"] for l in L]),
        "bo2": jnp.stack([l["bo2"].reshape(1, HIDDEN) for l in L]),
        "ln2_g": jnp.stack([l["ln2_g"].reshape(1, HIDDEN) for l in L]),
        "ln2_b": jnp.stack([l["ln2_b"].reshape(1, HIDDEN) for l in L]),
        "pool_w": p["pool_w"], "pool_b": p["pool_b"].reshape(1, HIDDEN),
        "cls_w": p["cls_w"], "cls_b": p["cls_b"].reshape(1, NUM_LABELS),
    }


# --------------------------- forward pass ------------------------------------

def nli_forward(packed, text, text_mask):
    """text: (B, S) int32 ids; text_mask: (B, S) {0,1}. Returns (B, 6) logits."""
    B, S = text.shape

    # Embedding-table gather stays in plain JAX (glue); everything else is fused.
    tok = jnp.take(packed["word_emb"], text, axis=0)                  # (B,S,H)
    pos = packed["pos_emb"][:S][None, :, :]                            # (1,S,H)
    typ = packed["type_emb"][0][None, None, :]                         # token_type_ids == 0
    emb = (tok + pos + typ).reshape(B * S, HIDDEN)
    add_mask = (1.0 - text_mask.astype(jnp.float32)) * MASK_NEG        # (B,S)

    kernel = functools.partial(_nli_fused_kernel, batch=B, seq=S)
    return pl.pallas_call(
        kernel,
        out_shape=jax.ShapeDtypeStruct((B, NUM_LABELS), jnp.float32),
        scratch_shapes=[pltpu.VMEM((B * S, HIDDEN), jnp.float32)],
    )(emb, add_mask,
      packed["emb_ln_g"], packed["emb_ln_b"],
      packed["wqkv"], packed["bqkv"], packed["wo"], packed["bo"],
      packed["ln1_g"], packed["ln1_b"],
      packed["wi"], packed["bi"], packed["wo2"], packed["bo2"],
      packed["ln2_g"], packed["ln2_b"],
      packed["pool_w"], packed["pool_b"], packed["cls_w"], packed["cls_b"])


# --------------------------- pure-JAX reference -------------------------------

def nli_reference(packed, text, text_mask):
    B, S = text.shape
    tok = jnp.take(packed["word_emb"], text, axis=0)
    emb = (tok + packed["pos_emb"][:S][None] + packed["type_emb"][0][None, None]
           ).reshape(B * S, HIDDEN)
    h = _layernorm(emb, packed["emb_ln_g"], packed["emb_ln_b"])
    add_mask = (1.0 - text_mask.astype(jnp.float32)) * MASK_NEG
    for l in range(LAYERS):
        qkv = h @ packed["wqkv"][l] + packed["bqkv"][l]
        q, k, v = (t.reshape(B, S, HEADS, HEAD_DIM) for t in jnp.split(qkv, 3, axis=-1))
        s = jnp.einsum("bqhd,bkhd->bhqk", q, k) / (HEAD_DIM ** 0.5)
        s = s + add_mask[:, None, None, :]
        p = jax.nn.softmax(s, axis=-1)
        ctx = jnp.einsum("bhqk,bkhd->bqhd", p, v).reshape(B * S, HIDDEN)
        h = _layernorm(ctx @ packed["wo"][l] + packed["bo"][l] + h,
                       packed["ln1_g"][l], packed["ln1_b"][l])
        inter = _gelu(h @ packed["wi"][l] + packed["bi"][l])
        h = _layernorm(inter @ packed["wo2"][l] + packed["bo2"][l] + h,
                       packed["ln2_g"][l], packed["ln2_b"][l])
    cls = h.reshape(B, S, HIDDEN)[:, 0, :]
    pooled = jnp.tanh(cls @ packed["pool_w"] + packed["pool_b"])
    return pooled @ packed["cls_w"] + packed["cls_b"]


# --------------------------- driver ------------------------------------------

if __name__ == "__main__":
    key = jax.random.PRNGKey(0)
    pkey, ikey = jax.random.split(key)
    packed = pack_params(init_params(pkey))

    B, S = 2, 8
    text = jax.random.randint(ikey, (B, S), 0, VOCAB, dtype=jnp.int32)
    # last two positions of sample 1 are padding
    text_mask = jnp.array([[1] * S, [1] * (S - 2) + [0, 0]], dtype=jnp.int32)

    logits = jax.jit(nli_forward)(packed, text, text_mask)
    jax.block_until_ready(logits)
    assert logits.shape == (B, NUM_LABELS) and logits.dtype == jnp.float32

    ref = jax.jit(nli_reference)(packed, text, text_mask)
    assert jnp.allclose(logits, ref, atol=1e-3, rtol=1e-3)
    print("KERNEL_OK")
</pallas_src>

<mosaic_0001>
module attributes {stable_mosaic.version = 11 : i64} {
  func.func @_nli_fused_kernel(%arg0: memref<16x32xf32, #tpu.memory_space<vmem>>, %arg1: memref<2x8xf32, #tpu.memory_space<vmem>>, %arg2: memref<1x32xf32, #tpu.memory_space<vmem>>, %arg3: memref<1x32xf32, #tpu.memory_space<vmem>>, %arg4: memref<2x32x96xf32, #tpu.memory_space<vmem>>, %arg5: memref<2x1x96xf32, #tpu.memory_space<vmem>>, %arg6: memref<2x32x32xf32, #tpu.memory_space<vmem>>, %arg7: memref<2x1x32xf32, #tpu.memory_space<vmem>>, %arg8: memref<2x1x32xf32, #tpu.memory_space<vmem>>, %arg9: memref<2x1x32xf32, #tpu.memory_space<vmem>>, %arg10: memref<2x32x64xf32, #tpu.memory_space<vmem>>, %arg11: memref<2x1x64xf32, #tpu.memory_space<vmem>>, %arg12: memref<2x64x32xf32, #tpu.memory_space<vmem>>, %arg13: memref<2x1x32xf32, #tpu.memory_space<vmem>>, %arg14: memref<2x1x32xf32, #tpu.memory_space<vmem>>, %arg15: memref<2x1x32xf32, #tpu.memory_space<vmem>>, %arg16: memref<32x32xf32, #tpu.memory_space<vmem>>, %arg17: memref<1x32xf32, #tpu.memory_space<vmem>>, %arg18: memref<32x6xf32, #tpu.memory_space<vmem>>, %arg19: memref<1x6xf32, #tpu.memory_space<vmem>>, %arg20: memref<2x6xf32, #tpu.memory_space<vmem>>, %arg21: memref<16x32xf32, #tpu.memory_space<vmem>>) attributes {dimension_semantics = [], scalar_prefetch = 0 : i64, scratch_operands = 1 : i64, tpu.core_type = #tpu.core_type<tc>} {
    %c0 = arith.constant 0 : index
    %c0_0 = arith.constant 0 : index
    %0 = vector.load %arg0[%c0, %c0_0] : memref<16x32xf32, #tpu.memory_space<vmem>>, vector<16x32xf32>
    %c0_1 = arith.constant 0 : index
    %c0_2 = arith.constant 0 : index
    %1 = vector.load %arg2[%c0_1, %c0_2] : memref<1x32xf32, #tpu.memory_space<vmem>>, vector<1x32xf32>
    %c0_3 = arith.constant 0 : index
    %c0_4 = arith.constant 0 : index
    %2 = vector.load %arg3[%c0_3, %c0_4] : memref<1x32xf32, #tpu.memory_space<vmem>>, vector<1x32xf32>
    %cst = arith.constant dense<0.000000e+00> : vector<16xf32>
    %3 = vector.multi_reduction <add>, %0, %cst [1] : vector<16x32xf32> to vector<16xf32>
    %4 = vector.shape_cast %3 : vector<16xf32> to vector<16x1xf32>
    %cst_5 = arith.constant 3.200000e+01 : f32
    %5 = vector.broadcast %cst_5 : f32 to vector<16x1xf32>
    %6 = arith.divf %4, %5 : vector<16x1xf32>
    %7 = vector.broadcast %6 : vector<16x1xf32> to vector<16x32xf32>
    %8 = arith.subf %0, %7 : vector<16x32xf32>
    %9 = arith.mulf %8, %8 : vector<16x32xf32>
    %cst_6 = arith.constant dense<0.000000e+00> : vector<16xf32>
    %10 = vector.multi_reduction <add>, %9, %cst_6 [1] : vector<16x32xf32> to vector<16xf32>
    %11 = vector.shape_cast %10 : vector<16xf32> to vector<16x1xf32>
    %cst_7 = arith.constant 3.200000e+01 : f32
    %12 = vector.broadcast %cst_7 : f32 to vector<16x1xf32>
    %13 = arith.divf %11, %12 : vector<16x1xf32>
    %14 = vector.broadcast %6 : vector<16x1xf32> to vector<16x32xf32>
    %15 = arith.subf %0, %14 : vector<16x32xf32>
    %cst_8 = arith.constant 9.99999996E-13 : f32
    %16 = vector.broadcast %cst_8 : f32 to vector<16x1xf32>
    %17 = arith.addf %13, %16 : vector<16x1xf32>
    %18 = math.rsqrt %17 : vector<16x1xf32>
    %19 = vector.broadcast %18 : vector<16x1xf32> to vector<16x32xf32>
    %20 = arith.mulf %15, %19 : vector<16x32xf32>
    %21 = vector.broadcast %1 : vector<1x32xf32> to vector<16x32xf32>
    %22 = arith.mulf %20, %21 : vector<16x32xf32>
    %23 = vector.broadcast %2 : vector<1x32xf32> to vector<16x32xf32>
    %24 = arith.addf %22, %23 : vector<16x32xf32>
    %c0_9 = arith.constant 0 : index
    %c0_10 = arith.constant 0 : index
    %25 = vector.load %arg1[%c0_9, %c0_10] : memref<2x8xf32, #tpu.memory_space<vmem>>, vector<2x8xf32>
    %c0_11 = arith.constant 0 : index
    %c0_12 = arith.constant 0 : index
    %c0_13 = arith.constant 0 : index
    %26 = vector.load %arg4[%c0_11, %c0_12, %c0_13] : memref<2x32x96xf32, #tpu.memory_space<vmem>>, vector<1x32x96xf32>
    %27 = vector.shape_cast %26 : vector<1x32x96xf32> to vector<32x96xf32>
    %cst_14 = arith.constant dense<0.000000e+00> : vector<16x96xf32>
    %28 = tpu.matmul %24, %27, %cst_14 {dimension_numbers = #tpu.dot_dimension_numbers<[1], [0], [0], [1], [0, 0, 1, 1], [], []>} : vector<16x32xf32>, vector<32x96xf32>, vector<16x96xf32> -> vector<16x96xf32>
    %c0_15 = arith.constant 0 : index
    %c0_16 = arith.constant 0 : index
    %c0_17 = arith.constant 0 : index
    %29 = vector.load %arg5[%c0_15, %c0_16, %c0_17] : memref<2x1x96xf32, #tpu.memory_space<vmem>>, vector<1x1x96xf32>
    %30 = vector.shape_cast %29 : vector<1x1x96xf32> to vector<1x96xf32>
    %31 = vector.broadcast %30 : vector<1x96xf32> to vector<16x96xf32>
    %32 = arith.addf %28, %31 : vector<16x96xf32>
    %33 = vector.extract_strided_slice %25 {offsets = [0, 0], sizes = [1, 8], strides = [1, 1]} : vector<2x8xf32> to vector<1x8xf32>
    %34 = vector.extract_strided_slice %32 {offsets = [0, 0], sizes = [8, 16], strides = [1, 1]} : vector<16x96xf32> to vector<8x16xf32>
    %35 = vector.extract_strided_slice %32 {offsets = [0, 32], sizes = [8, 16], strides = [1, 1]} : vector<16x96xf32> to vector<8x16xf32>
    %36 = vector.extract_strided_slice %32 {offsets = [0, 64], sizes = [8, 16], strides = [1, 1]} : vector<16x96xf32> to vector<8x16xf32>
    %cst_18 = arith.constant dense<0.000000e+00> : vector<8x8xf32>
    %37 = tpu.matmul %34, %35, %cst_18 {dimension_numbers = #tpu.dot_dimension_numbers<[1], [1], [0], [0], [0, 0, 1, 0], [], []>} : vector<8x16xf32>, vector<8x16xf32>, vector<8x8xf32> -> vector<8x8xf32>
    %cst_19 = arith.constant 2.500000e-01 : f32
    %38 = vector.broadcast %cst_19 : f32 to vector<8x8xf32>
    %39 = arith.mulf %37, %38 : vector<8x8xf32>
    %40 = vector.broadcast %33 : vector<1x8xf32> to vector<8x8xf32>
    %41 = arith.addf %39, %40 : vector<8x8xf32>
    %cst_20 = arith.constant dense<0xFF800000> : vector<8xf32>
    %42 = vector.multi_reduction <maximumf>, %41, %cst_20 [1] : vector<8x8xf32> to vector<8xf32>
    %43 = vector.shape_cast %42 : vector<8xf32> to vector<8x1xf32>
    %44 = vector.broadcast %43 : vector<8x1xf32> to vector<8x8xf32>
    %45 = arith.subf %41, %44 : vector<8x8xf32>
    %46 = math.exp %45 : vector<8x8xf32>
    %cst_21 = arith.constant dense<0.000000e+00> : vector<8xf32>
    %47 = vector.multi_reduction <add>, %46, %cst_21 [1] : vector<8x8xf32> to vector<8xf32>
    %48 = vector.shape_cast %47 : vector<8xf32> to vector<8x1xf32>
    %49 = vector.broadcast %48 : vector<8x1xf32> to vector<8x8xf32>
    %50 = arith.divf %46, %49 : vector<8x8xf32>
    %cst_22 = arith.constant dense<0.000000e+00> : vector<8x16xf32>
    %51 = tpu.matmul %50, %36, %cst_22 {dimension_numbers = #tpu.dot_dimension_numbers<[1], [0], [0], [1], [0, 0, 1, 1], [], []>} : vector<8x8xf32>, vector<8x16xf32>, vector<8x16xf32> -> vector<8x16xf32>
    %c0_23 = arith.constant 0 : index
    %c0_24 = arith.constant 0 : index
    %52 = vector.load %arg21[%c0_23, %c0_24] : memref<16x32xf32, #tpu.memory_space<vmem>>, vector<8x16xf32>
    tpu.vector_store %arg21[%c0_23, %c0_24], %51 {strides = array<i32>} : memref<16x32xf32, #tpu.memory_space<vmem>>, vector<8x16xf32>,
    %53 = vector.extract_strided_slice %32 {offsets = [0, 16], sizes = [8, 16], strides = [1, 1]} : vector<16x96xf32> to vector<8x16xf32>
    %54 = vector.extract_strided_slice %32 {offsets = [0, 48], sizes = [8, 16], strides = [1, 1]} : vector<16x96xf32> to vector<8x16xf32>
    %55 = vector.extract_strided_slice %32 {offsets = [0, 80], sizes = [8, 16], strides = [1, 1]} : vector<16x96xf32> to vector<8x16xf32>
    %cst_25 = arith.constant dense<0.000000e+00> : vector<8x8xf32>
    %56 = tpu.matmul %53, %54, %cst_25 {dimension_numbers = #tpu.dot_dimension_numbers<[1], [1], [0], [0], [0, 0, 1, 0], [], []>} : vector<8x16xf32>, vector<8x16xf32>, vector<8x8xf32> -> vector<8x8xf32>
    %cst_26 = arith.constant 2.500000e-01 : f32
    %57 = vector.broadcast %cst_26 : f32 to vector<8x8xf32>
    %58 = arith.mulf %56, %57 : vector<8x8xf32>
    %59 = vector.broadcast %33 : vector<1x8xf32> to vector<8x8xf32>
    %60 = arith.addf %58, %59 : vector<8x8xf32>
    %cst_27 = arith.constant dense<0xFF800000> : vector<8xf32>
    %61 = vector.multi_reduction <maximumf>, %60, %cst_27 [1] : vector<8x8xf32> to vector<8xf32>
    %62 = vector.shape_cast %61 : vector<8xf32> to vector<8x1xf32>
    %63 = vector.broadcast %62 : vector<8x1xf32> to vector<8x8xf32>
    %64 = arith.subf %60, %63 : vector<8x8xf32>
    %65 = math.exp %64 : vector<8x8xf32>
    %cst_28 = arith.constant dense<0.000000e+00> : vector<8xf32>
    %66 = vector.multi_reduction <add>, %65, %cst_28 [1] : vector<8x8xf32> to vector<8xf32>
    %67 = vector.shape_cast %66 : vector<8xf32> to vector<8x1xf32>
    %68 = vector.broadcast %67 : vector<8x1xf32> to vector<8x8xf32>
    %69 = arith.divf %65, %68 : vector<8x8xf32>
    %cst_29 = arith.constant dense<0.000000e+00> : vector<8x16xf32>
    %70 = tpu.matmul %69, %55, %cst_29 {dimension_numbers = #tpu.dot_dimension_numbers<[1], [0], [0], [1], [0, 0, 1, 1], [], []>} : vector<8x8xf32>, vector<8x16xf32>, vector<8x16xf32> -> vector<8x16xf32>
    %c0_30 = arith.constant 0 : index
    %c16 = arith.constant 16 : index
    %71 = vector.load %arg21[%c0_30, %c16] : memref<16x32xf32, #tpu.memory_space<vmem>>, vector<8x16xf32>
    tpu.vector_store %arg21[%c0_30, %c16], %70 {strides = array<i32>} : memref<16x32xf32, #tpu.memory_space<vmem>>, vector<8x16xf32>,
    %72 = vector.extract_strided_slice %25 {offsets = [1, 0], sizes = [1, 8], strides = [1, 1]} : vector<2x8xf32> to vector<1x8xf32>
    %73 = vector.extract_strided_slice %32 {offsets = [8, 0], sizes = [8, 16], strides = [1, 1]} : vector<16x96xf32> to vector<8x16xf32>
    %74 = vector.extract_strided_slice %32 {offsets = [8, 32], sizes = [8, 16], strides = [1, 1]} : vector<16x96xf32> to vector<8x16xf32>
    %75 = vector.extract_strided_slice %32 {offsets = [8, 64], sizes = [8, 16], strides = [1, 1]} : vector<16x96xf32> to vector<8x16xf32>
    %cst_31 = arith.constant dense<0.000000e+00> : vector<8x8xf32>
    %76 = tpu.matmul %73, %74, %cst_31 {dimension_numbers = #tpu.dot_dimension_numbers<[1], [1], [0], [0], [0, 0, 1, 0], [], []>} : vector<8x16xf32>, vector<8x16xf32>, vector<8x8xf32> -> vector<8x8xf32>
    %cst_32 = arith.constant 2.500000e-01 : f32
    %77 = vector.broadcast %cst_32 : f32 to vector<8x8xf32>
    %78 = arith.mulf %76, %77 : vector<8x8xf32>
    %79 = vector.broadcast %72 : vector<1x8xf32> to vector<8x8xf32>
    %80 = arith.addf %78, %79 : vector<8x8xf32>
    %cst_33 = arith.constant dense<0xFF800000> : vector<8xf32>
    %81 = vector.multi_reduction <maximumf>, %80, %cst_33 [1] : vector<8x8xf32> to vector<8xf32>
    %82 = vector.shape_cast %81 : vector<8xf32> to vector<8x1xf32>
    %83 = vector.broadcast %82 : vector<8x1xf32> to vector<8x8xf32>
    %84 = arith.subf %80, %83 : vector<8x8xf32>
    %85 = math.exp %84 : vector<8x8xf32>
    %cst_34 = arith.constant dense<0.000000e+00> : vector<8xf32>
    %86 = vector.multi_reduction <add>, %85, %cst_34 [1] : vector<8x8xf32> to vector<8xf32>
    %87 = vector.shape_cast %86 : vector<8xf32> to vector<8x1xf32>
    %88 = vector.broadcast %87 : vector<8x1xf32> to vector<8x8xf32>
    %89 = arith.divf %85, %88 : vector<8x8xf32>
    %cst_35 = arith.constant dense<0.000000e+00> : vector<8x16xf32>
    %90 = tpu.matmul %89, %75, %cst_35 {dimension_numbers = #tpu.dot_dimension_numbers<[1], [0], [0], [1], [0, 0, 1, 1], [], []>} : vector<8x8xf32>, vector<8x16xf32>, vector<8x16xf32> -> vector<8x16xf32>
    %c8 = arith.constant 8 : index
    %c0_36 = arith.constant 0 : index
    %91 = vector.load %arg21[%c8, %c0_36] : memref<16x32xf32, #tpu.memory_space<vmem>>, vector<8x16xf32>
    tpu.vector_store %arg21[%c8, %c0_36], %90 {strides = array<i32>} : memref<16x32xf32, #tpu.memory_space<vmem>>, vector<8x16xf32>,
    %92 = vector.extract_strided_slice %32 {offsets = [8, 16], sizes = [8, 16], strides = [1, 1]} : vector<16x96xf32> to vector<8x16xf32>
    %93 = vector.extract_strided_slice %32 {offsets = [8, 48], sizes = [8, 16], strides = [1, 1]} : vector<16x96xf32> to vector<8x16xf32>
    %94 = vector.extract_strided_slice %32 {offsets = [8, 80], sizes = [8, 16], strides = [1, 1]} : vector<16x96xf32> to vector<8x16xf32>
    %cst_37 = arith.constant dense<0.000000e+00> : vector<8x8xf32>
    %95 = tpu.matmul %92, %93, %cst_37 {dimension_numbers = #tpu.dot_dimension_numbers<[1], [1], [0], [0], [0, 0, 1, 0], [], []>} : vector<8x16xf32>, vector<8x16xf32>, vector<8x8xf32> -> vector<8x8xf32>
    %cst_38 = arith.constant 2.500000e-01 : f32
    %96 = vector.broadcast %cst_38 : f32 to vector<8x8xf32>
    %97 = arith.mulf %95, %96 : vector<8x8xf32>
    %98 = vector.broadcast %72 : vector<1x8xf32> to vector<8x8xf32>
    %99 = arith.addf %97, %98 : vector<8x8xf32>
    %cst_39 = arith.constant dense<0xFF800000> : vector<8xf32>
    %100 = vector.multi_reduction <maximumf>, %99, %cst_39 [1] : vector<8x8xf32> to vector<8xf32>
    %101 = vector.shape_cast %100 : vector<8xf32> to vector<8x1xf32>
    %102 = vector.broadcast %101 : vector<8x1xf32> to vector<8x8xf32>
    %103 = arith.subf %99, %102 : vector<8x8xf32>
    %104 = math.exp %103 : vector<8x8xf32>
    %cst_40 = arith.constant dense<0.000000e+00> : vector<8xf32>
    %105 = vector.multi_reduction <add>, %104, %cst_40 [1] : vector<8x8xf32> to vector<8xf32>
    %106 = vector.shape_cast %105 : vector<8xf32> to vector<8x1xf32>
    %107 = vector.broadcast %106 : vector<8x1xf32> to vector<8x8xf32>
    %108 = arith.divf %104, %107 : vector<8x8xf32>
    %cst_41 = arith.constant dense<0.000000e+00> : vector<8x16xf32>
    %109 = tpu.matmul %108, %94, %cst_41 {dimension_numbers = #tpu.dot_dimension_numbers<[1], [0], [0], [1], [0, 0, 1, 1], [], []>} : vector<8x8xf32>, vector<8x16xf32>, vector<8x16xf32> -> vector<8x16xf32>
    %c8_42 = arith.constant 8 : index
    %c16_43 = arith.constant 16 : index
    %110 = vector.load %arg21[%c8_42, %c16_43] : memref<16x32xf32, #tpu.memory_space<vmem>>, vector<8x16xf32>
    tpu.vector_store %arg21[%c8_42, %c16_43], %109 {strides = array<i32>} : memref<16x32xf32, #tpu.memory_space<vmem>>, vector<8x16xf32>,
    %c0_44 = arith.constant 0 : index
    %c0_45 = arith.constant 0 : index
    %111 = vector.load %arg21[%c0_44, %c0_45] : memref<16x32xf32, #tpu.memory_space<vmem>>, vector<16x32xf32>
    %c0_46 = arith.constant 0 : index
    %c0_47 = arith.constant 0 : index
    %c0_48 = arith.constant 0 : index
    %112 = vector.load %arg6[%c0_46, %c0_47, %c0_48] : memref<2x32x32xf32, #tpu.memory_space<vmem>>, vector<1x32x32xf32>
    %113 = vector.shape_cast %112 : vector<1x32x32xf32> to vector<32x32xf32>
    %cst_49 = arith.constant dense<0.000000e+00> : vector<16x32xf32>
    %114 = tpu.matmul %111, %113, %cst_49 {dimension_numbers = #tpu.dot_dimension_numbers<[1], [0], [0], [1], [0, 0, 1, 1], [], []>} : vector<16x32xf32>, vector<32x32xf32>, vector<16x32xf32> -> vector<16x32xf32>
    %c0_50 = arith.constant 0 : index
    %c0_51 = arith.constant 0 : index
    %c0_52 = arith.constant 0 : index
    %115 = vector.load %arg7[%c0_50, %c0_51, %c0_52] : memref<2x1x32xf32, #tpu.memory_space<vmem>>, vector<1x1x32xf32>
    %116 = vector.shape_cast %115 : vector<1x1x32xf32> to vector<1x32xf32>
    %117 = vector.broadcast %116 : vector<1x32xf32> to vector<16x32xf32>
    %118 = arith.addf %114, %117 : vector<16x32xf32>
    %119 = arith.addf %118, %24 : vector<16x32xf32>
    %c0_53 = arith.constant 0 : index
    %c0_54 = arith.constant 0 : index
    %c0_55 = arith.constant 0 : index
    %120 = vector.load %arg8[%c0_53, %c0_54, %c0_55] : memref<2x1x32xf32, #tpu.memory_space<vmem>>, vector<1x1x32xf32>
    %121 = vector.shape_cast %120 : vector<1x1x32xf32> to vector<1x32xf32>
    %c0_56 = arith.constant 0 : index
    %c0_57 = arith.constant 0 : index
    %c0_58 = arith.constant 0 : index
    %122 = vector.load %arg9[%c0_56, %c0_57, %c0_58] : memref<2x1x32xf32, #tpu.memory_space<vmem>>, vector<1x1x32xf32>
    %123 = vector.shape_cast %122 : vector<1x1x32xf32> to vector<1x32xf32>
    %cst_59 = arith.constant dense<0.000000e+00> : vector<16xf32>
    %124 = vector.multi_reduction <add>, %119, %cst_59 [1] : vector<16x32xf32> to vector<16xf32>
    %125 = vector.shape_cast %124 : vector<16xf32> to vector<16x1xf32>
    %cst_60 = arith.constant 3.200000e+01 : f32
    %126 = vector.broadcast %cst_60 : f32 to vector<16x1xf32>
    %127 = arith.divf %125, %126 : vector<16x1xf32>
    %128 = vector.broadcast %127 : vector<16x1xf32> to vector<16x32xf32>
    %129 = arith.subf %119, %128 : vector<16x32xf32>
    %130 = arith.mulf %129, %129 : vector<16x32xf32>
    %cst_61 = arith.constant dense<0.000000e+00> : vector<16xf32>
    %131 = vector.multi_reduction <add>, %130, %cst_61 [1] : vector<16x32xf32> to vector<16xf32>
    %132 = vector.shape_cast %131 : vector<16xf32> to vector<16x1xf32>
    %cst_62 = arith.constant 3.200000e+01 : f32
    %133 = vector.broadcast %cst_62 : f32 to vector<16x1xf32>
    %134 = arith.divf %132, %133 : vector<16x1xf32>
    %135 = vector.broadcast %127 : vector<16x1xf32> to vector<16x32xf32>
    %136 = arith.subf %119, %135 : vector<16x32xf32>
    %cst_63 = arith.constant 9.99999996E-13 : f32
    %137 = vector.broadcast %cst_63 : f32 to vector<16x1xf32>
    %138 = arith.addf %134, %137 : vector<16x1xf32>
    %139 = math.rsqrt %138 : vector<16x1xf32>
    %140 = vector.broadcast %139 : vector<16x1xf32> to vector<16x32xf32>
    %141 = arith.mulf %136, %140 : vector<16x32xf32>
    %142 = vector.broadcast %121 : vector<1x32xf32> to vector<16x32xf32>
    %143 = arith.mulf %141, %142 : vector<16x32xf32>
    %144 = vector.broadcast %123 : vector<1x32xf32> to vector<16x32xf32>
    %145 = arith.addf %143, %144 : vector<16x32xf32>
    %c0_64 = arith.constant 0 : index
    %c0_65 = arith.constant 0 : index
    %c0_66 = arith.constant 0 : index
    %146 = vector.load %arg10[%c0_64, %c0_65, %c0_66] : memref<2x32x64xf32, #tpu.memory_space<vmem>>, vector<1x32x64xf32>
    %147 = vector.shape_cast %146 : vector<1x32x64xf32> to vector<32x64xf32>
    %cst_67 = arith.constant dense<0.000000e+00> : vector<16x64xf32>
    %148 = tpu.matmul %145, %147, %cst_67 {dimension_numbers = #tpu.dot_dimension_numbers<[1], [0], [0], [1], [0, 0, 1, 1], [], []>} : vector<16x32xf32>, vector<32x64xf32>, vector<16x64xf32> -> vector<16x64xf32>
    %c0_68 = arith.constant 0 : index
    %c0_69 = arith.constant 0 : index
    %c0_70 = arith.constant 0 : index
    %149 = vector.load %arg11[%c0_68, %c0_69, %c0_70] : memref<2x1x64xf32, #tpu.memory_space<vmem>>, vector<1x1x64xf32>
    %150 = vector.shape_cast %149 : vector<1x1x64xf32> to vector<1x64xf32>
    %151 = vector.broadcast %150 : vector<1x64xf32> to vector<16x64xf32>
    %152 = arith.addf %148, %151 : vector<16x64xf32>
    %cst_71 = arith.constant 5.000000e-01 : f32
    %153 = vector.broadcast %cst_71 : f32 to vector<16x64xf32>
    %154 = arith.mulf %153, %152 : vector<16x64xf32>
    %cst_72 = arith.constant 0.707106769 : f32
    %155 = vector.broadcast %cst_72 : f32 to vector<16x64xf32>
    %156 = arith.mulf %152, %155 : vector<16x64xf32>
    %157 = math.erf %156 : vector<16x64xf32>
    %cst_73 = arith.constant 1.000000e+00 : f32
    %158 = vector.broadcast %cst_73 : f32 to vector<16x64xf32>
    %159 = arith.addf %158, %157 : vector<16x64xf32>
    %160 = arith.mulf %154, %159 : vector<16x64xf32>
    %c0_74 = arith.constant 0 : index
    %c0_75 = arith.constant 0 : index
    %c0_76 = arith.constant 0 : index
    %161 = vector.load %arg12[%c0_74, %c0_75, %c0_76] : memref<2x64x32xf32, #tpu.memory_space<vmem>>, vector<1x64x32xf32>
    %162 = vector.shape_cast %161 : vector<1x64x32xf32> to vector<64x32xf32>
    %cst_77 = arith.constant dense<0.000000e+00> : vector<16x32xf32>
    %163 = tpu.matmul %160, %162, %cst_77 {dimension_numbers = #tpu.dot_dimension_numbers<[1], [0], [0], [1], [0, 0, 1, 1], [], []>} : vector<16x64xf32>, vector<64x32xf32>, vector<16x32xf32> -> vector<16x32xf32>
    %c0_78 = arith.constant 0 : index
    %c0_79 = arith.constant 0 : index
    %c0_80 = arith.constant 0 : index
    %164 = vector.load %arg13[%c0_78, %c0_79, %c0_80] : memref<2x1x32xf32, #tpu.memory_space<vmem>>, vector<1x1x32xf32>
    %165 = vector.shape_cast %164 : vector<1x1x32xf32> to vector<1x32xf32>
    %166 = vector.broadcast %165 : vector<1x32xf32> to vector<16x32xf32>
    %167 = arith.addf %163, %166 : vector<16x32xf32>
    %168 = arith.addf %167, %145 : vector<16x32xf32>
    %c0_81 = arith.constant 0 : index
    %c0_82 = arith.constant 0 : index
    %c0_83 = arith.constant 0 : index
    %169 = vector.load %arg14[%c0_81, %c0_82, %c0_83] : memref<2x1x32xf32, #tpu.memory_space<vmem>>, vector<1x1x32xf32>
    %170 = vector.shape_cast %169 : vector<1x1x32xf32> to vector<1x32xf32>
    %c0_84 = arith.constant 0 : index
    %c0_85 = arith.constant 0 : index
    %c0_86 = arith.constant 0 : index
    %171 = vector.load %arg15[%c0_84, %c0_85, %c0_86] : memref<2x1x32xf32, #tpu.memory_space<vmem>>, vector<1x1x32xf32>
    %172 = vector.shape_cast %171 : vector<1x1x32xf32> to vector<1x32xf32>
    %cst_87 = arith.constant dense<0.000000e+00> : vector<16xf32>
    %173 = vector.multi_reduction <add>, %168, %cst_87 [1] : vector<16x32xf32> to vector<16xf32>
    %174 = vector.shape_cast %173 : vector<16xf32> to vector<16x1xf32>
    %cst_88 = arith.constant 3.200000e+01 : f32
    %175 = vector.broadcast %cst_88 : f32 to vector<16x1xf32>
    %176 = arith.divf %174, %175 : vector<16x1xf32>
    %177 = vector.broadcast %176 : vector<16x1xf32> to vector<16x32xf32>
    %178 = arith.subf %168, %177 : vector<16x32xf32>
    %179 = arith.mulf %178, %178 : vector<16x32xf32>
    %cst_89 = arith.constant dense<0.000000e+00> : vector<16xf32>
    %180 = vector.multi_reduction <add>, %179, %cst_89 [1] : vector<16x32xf32> to vector<16xf32>
    %181 = vector.shape_cast %180 : vector<16xf32> to vector<16x1xf32>
    %cst_90 = arith.constant 3.200000e+01 : f32
    %182 = vector.broadcast %cst_90 : f32 to vector<16x1xf32>
    %183 = arith.divf %181, %182 : vector<16x1xf32>
    %184 = vector.broadcast %176 : vector<16x1xf32> to vector<16x32xf32>
    %185 = arith.subf %168, %184 : vector<16x32xf32>
    %cst_91 = arith.constant 9.99999996E-13 : f32
    %186 = vector.broadcast %cst_91 : f32 to vector<16x1xf32>
    %187 = arith.addf %183, %186 : vector<16x1xf32>
    %188 = math.rsqrt %187 : vector<16x1xf32>
    %189 = vector.broadcast %188 : vector<16x1xf32> to vector<16x32xf32>
    %190 = arith.mulf %185, %189 : vector<16x32xf32>
    %191 = vector.broadcast %170 : vector<1x32xf32> to vector<16x32xf32>
    %192 = arith.mulf %190, %191 : vector<16x32xf32>
    %193 = vector.broadcast %172 : vector<1x32xf32> to vector<16x32xf32>
    %194 = arith.addf %192, %193 : vector<16x32xf32>
    %c1 = arith.constant 1 : index
    %c0_92 = arith.constant 0 : index
    %c0_93 = arith.constant 0 : index
    %195 = vector.load %arg4[%c1, %c0_92, %c0_93] : memref<2x32x96xf32, #tpu.memory_space<vmem>>, vector<1x32x96xf32>
    %196 = vector.shape_cast %195 : vector<1x32x96xf32> to vector<32x96xf32>
    %cst_94 = arith.constant dense<0.000000e+00> : vector<16x96xf32>
    %197 = tpu.matmul %194, %196, %cst_94 {dimension_numbers = #tpu.dot_dimension_numbers<[1], [0], [0], [1], [0, 0, 1, 1], [], []>} : vector<16x32xf32>, vector<32x96xf32>, vector<16x96xf32> -> vector<16x96xf32>
    %c1_95 = arith.constant 1 : index
    %c0_96 = arith.constant 0 : index
    %c0_97 = arith.constant 0 : index
    %198 = vector.load %arg5[%c1_95, %c0_96, %c0_97] : memref<2x1x96xf32, #tpu.memory_space<vmem>>, vector<1x1x96xf32>
    %199 = vector.shape_cast %198 : vector<1x1x96xf32> to vector<1x96xf32>
    %200 = vector.broadcast %199 : vector<1x96xf32> to vector<16x96xf32>
    %201 = arith.addf %197, %200 : vector<16x96xf32>
    %202 = vector.extract_strided_slice %25 {offsets = [0, 0], sizes = [1, 8], strides = [1, 1]} : vector<2x8xf32> to vector<1x8xf32>
    %203 = vector.extract_strided_slice %201 {offsets = [0, 0], sizes = [8, 16], strides = [1, 1]} : vector<16x96xf32> to vector<8x16xf32>
    %204 = vector.extract_strided_slice %201 {offsets = [0, 32], sizes = [8, 16], strides = [1, 1]} : vector<16x96xf32> to vector<8x16xf32>
    %205 = vector.extract_strided_slice %201 {offsets = [0, 64], sizes = [8, 16], strides = [1, 1]} : vector<16x96xf32> to vector<8x16xf32>
    %cst_98 = arith.constant dense<0.000000e+00> : vector<8x8xf32>
    %206 = tpu.matmul %203, %204, %cst_98 {dimension_numbers = #tpu.dot_dimension_numbers<[1], [1], [0], [0], [0, 0, 1, 0], [], []>} : vector<8x16xf32>, vector<8x16xf32>, vector<8x8xf32> -> vector<8x8xf32>
    %cst_99 = arith.constant 2.500000e-01 : f32
    %207 = vector.broadcast %cst_99 : f32 to vector<8x8xf32>
    %208 = arith.mulf %206, %207 : vector<8x8xf32>
    %209 = vector.broadcast %202 : vector<1x8xf32> to vector<8x8xf32>
    %210 = arith.addf %208, %209 : vector<8x8xf32>
    %cst_100 = arith.constant dense<0xFF800000> : vector<8xf32>
    %211 = vector.multi_reduction <maximumf>, %210, %cst_100 [1] : vector<8x8xf32> to vector<8xf32>
    %212 = vector.shape_cast %211 : vector<8xf32> to vector<8x1xf32>
    %213 = vector.broadcast %212 : vector<8x1xf32> to vector<8x8xf32>
    %214 = arith.subf %210, %213 : vector<8x8xf32>
    %215 = math.exp %214 : vector<8x8xf32>
    %cst_101 = arith.constant dense<0.000000e+00> : vector<8xf32>
    %216 = vector.multi_reduction <add>, %215, %cst_101 [1] : vector<8x8xf32> to vector<8xf32>
    %217 = vector.shape_cast %216 : vector<8xf32> to vector<8x1xf32>
    %218 = vector.broadcast %217 : vector<8x1xf32> to vector<8x8xf32>
    %219 = arith.divf %215, %218 : vector<8x8xf32>
    %cst_102 = arith.constant dense<0.000000e+00> : vector<8x16xf32>
    %220 = tpu.matmul %219, %205, %cst_102 {dimension_numbers = #tpu.dot_dimension_numbers<[1], [0], [0], [1], [0, 0, 1, 1], [], []>} : vector<8x8xf32>, vector<8x16xf32>, vector<8x16xf32> -> vector<8x16xf32>
    %c0_103 = arith.constant 0 : index
    %c0_104 = arith.constant 0 : index
    %221 = vector.load %arg21[%c0_103, %c0_104] : memref<16x32xf32, #tpu.memory_space<vmem>>, vector<8x16xf32>
    tpu.vector_store %arg21[%c0_103, %c0_104], %220 {strides = array<i32>} : memref<16x32xf32, #tpu.memory_space<vmem>>, vector<8x16xf32>,
    %222 = vector.extract_strided_slice %201 {offsets = [0, 16], sizes = [8, 16], strides = [1, 1]} : vector<16x96xf32> to vector<8x16xf32>
    %223 = vector.extract_strided_slice %201 {offsets = [0, 48], sizes = [8, 16], strides = [1, 1]} : vector<16x96xf32> to vector<8x16xf32>
    %224 = vector.extract_strided_slice %201 {offsets = [0, 80], sizes = [8, 16], strides = [1, 1]} : vector<16x96xf32> to vector<8x16xf32>
    %cst_105 = arith.constant dense<0.000000e+00> : vector<8x8xf32>
    %225 = tpu.matmul %222, %223, %cst_105 {dimension_numbers = #tpu.dot_dimension_numbers<[1], [1], [0], [0], [0, 0, 1, 0], [], []>} : vector<8x16xf32>, vector<8x16xf32>, vector<8x8xf32> -> vector<8x8xf32>
    %cst_106 = arith.constant 2.500000e-01 : f32
    %226 = vector.broadcast %cst_106 : f32 to vector<8x8xf32>
    %227 = arith.mulf %225, %226 : vector<8x8xf32>
    %228 = vector.broadcast %202 : vector<1x8xf32> to vector<8x8xf32>
    %229 = arith.addf %227, %228 : vector<8x8xf32>
    %cst_107 = arith.constant dense<0xFF800000> : vector<8xf32>
    %230 = vector.multi_reduction <maximumf>, %229, %cst_107 [1] : vector<8x8xf32> to vector<8xf32>
    %231 = vector.shape_cast %230 : vector<8xf32> to vector<8x1xf32>
    %232 = vector.broadcast %231 : vector<8x1xf32> to vector<8x8xf32>
    %233 = arith.subf %229, %232 : vector<8x8xf32>
    %234 = math.exp %233 : vector<8x8xf32>
    %cst_108 = arith.constant dense<0.000000e+00> : vector<8xf32>
    %235 = vector.multi_reduction <add>, %234, %cst_108 [1] : vector<8x8xf32> to vector<8xf32>
    %236 = vector.shape_cast %235 : vector<8xf32> to vector<8x1xf32>
    %237 = vector.broadcast %236 : vector<8x1xf32> to vector<8x8xf32>
    %238 = arith.divf %234, %237 : vector<8x8xf32>
    %cst_109 = arith.constant dense<0.000000e+00> : vector<8x16xf32>
    %239 = tpu.matmul %238, %224, %cst_109 {dimension_numbers = #tpu.dot_dimension_numbers<[1], [0], [0], [1], [0, 0, 1, 1], [], []>} : vector<8x8xf32>, vector<8x16xf32>, vector<8x16xf32> -> vector<8x16xf32>
    %c0_110 = arith.constant 0 : index
    %c16_111 = arith.constant 16 : index
    %240 = vector.load %arg21[%c0_110, %c16_111] : memref<16x32xf32, #tpu.memory_space<vmem>>, vector<8x16xf32>
    tpu.vector_store %arg21[%c0_110, %c16_111], %239 {strides = array<i32>} : memref<16x32xf32, #tpu.memory_space<vmem>>, vector<8x16xf32>,
    %241 = vector.extract_strided_slice %25 {offsets = [1, 0], sizes = [1, 8], strides = [1, 1]} : vector<2x8xf32> to vector<1x8xf32>
    %242 = vector.extract_strided_slice %201 {offsets = [8, 0], sizes = [8, 16], strides = [1, 1]} : vector<16x96xf32> to vector<8x16xf32>
    %243 = vector.extract_strided_slice %201 {offsets = [8, 32], sizes = [8, 16], strides = [1, 1]} : vector<16x96xf32> to vector<8x16xf32>
    %244 = vector.extract_strided_slice %201 {offsets = [8, 64], sizes = [8, 16], strides = [1, 1]} : vector<16x96xf32> to vector<8x16xf32>
    %cst_112 = arith.constant dense<0.000000e+00> : vector<8x8xf32>
    %245 = tpu.matmul %242, %243, %cst_112 {dimension_numbers = #tpu.dot_dimension_numbers<[1], [1], [0], [0], [0, 0, 1, 0], [], []>} : vector<8x16xf32>, vector<8x16xf32>, vector<8x8xf32> -> vector<8x8xf32>
    %cst_113 = arith.constant 2.500000e-01 : f32
    %246 = vector.broadcast %cst_113 : f32 to vector<8x8xf32>
    %247 = arith.mulf %245, %246 : vector<8x8xf32>
    %248 = vector.broadcast %241 : vector<1x8xf32> to vector<8x8xf32>
    %249 = arith.addf %247, %248 : vector<8x8xf32>
    %cst_114 = arith.constant dense<0xFF800000> : vector<8xf32>
    %250 = vector.multi_reduction <maximumf>, %249, %cst_114 [1] : vector<8x8xf32> to vector<8xf32>
    %251 = vector.shape_cast %250 : vector<8xf32> to vector<8x1xf32>
    %252 = vector.broadcast %251 : vector<8x1xf32> to vector<8x8xf32>
    %253 = arith.subf %249, %252 : vector<8x8xf32>
    %254 = math.exp %253 : vector<8x8xf32>
    %cst_115 = arith.constant dense<0.000000e+00> : vector<8xf32>
    %255 = vector.multi_reduction <add>, %254, %cst_115 [1] : vector<8x8xf32> to vector<8xf32>
    %256 = vector.shape_cast %255 : vector<8xf32> to vector<8x1xf32>
    %257 = vector.broadcast %256 : vector<8x1xf32> to vector<8x8xf32>
    %258 = arith.divf %254, %257 : vector<8x8xf32>
    %cst_116 = arith.constant dense<0.000000e+00> : vector<8x16xf32>
    %259 = tpu.matmul %258, %244, %cst_116 {dimension_numbers = #tpu.dot_dimension_numbers<[1], [0], [0], [1], [0, 0, 1, 1], [], []>} : vector<8x8xf32>, vector<8x16xf32>, vector<8x16xf32> -> vector<8x16xf32>
    %c8_117 = arith.constant 8 : index
    %c0_118 = arith.constant 0 : index
    %260 = vector.load %arg21[%c8_117, %c0_118] : memref<16x32xf32, #tpu.memory_space<vmem>>, vector<8x16xf32>
    tpu.vector_store %arg21[%c8_117, %c0_118], %259 {strides = array<i32>} : memref<16x32xf32, #tpu.memory_space<vmem>>, vector<8x16xf32>,
    %261 = vector.extract_strided_slice %201 {offsets = [8, 16], sizes = [8, 16], strides = [1, 1]} : vector<16x96xf32> to vector<8x16xf32>
    %262 = vector.extract_strided_slice %201 {offsets = [8, 48], sizes = [8, 16], strides = [1, 1]} : vector<16x96xf32> to vector<8x16xf32>
    %263 = vector.extract_strided_slice %201 {offsets = [8, 80], sizes = [8, 16], strides = [1, 1]} : vector<16x96xf32> to vector<8x16xf32>
    %cst_119 = arith.constant dense<0.000000e+00> : vector<8x8xf32>
    %264 = tpu.matmul %261, %262, %cst_119 {dimension_numbers = #tpu.dot_dimension_numbers<[1], [1], [0], [0], [0, 0, 1, 0], [], []>} : vector<8x16xf32>, vector<8x16xf32>, vector<8x8xf32> -> vector<8x8xf32>
    %cst_120 = arith.constant 2.500000e-01 : f32
    %265 = vector.broadcast %cst_120 : f32 to vector<8x8xf32>
    %266 = arith.mulf %264, %265 : vector<8x8xf32>
    %267 = vector.broadcast %241 : vector<1x8xf32> to vector<8x8xf32>
    %268 = arith.addf %266, %267 : vector<8x8xf32>
    %cst_121 = arith.constant dense<0xFF800000> : vector<8xf32>
    %269 = vector.multi_reduction <maximumf>, %268, %cst_121 [1] : vector<8x8xf32> to vector<8xf32>
    %270 = vector.shape_cast %269 : vector<8xf32> to vector<8x1xf32>
    %271 = vector.broadcast %270 : vector<8x1xf32> to vector<8x8xf32>
    %272 = arith.subf %268, %271 : vector<8x8xf32>
    %273 = math.exp %272 : vector<8x8xf32>
    %cst_122 = arith.constant dense<0.000000e+00> : vector<8xf32>
    %274 = vector.multi_reduction <add>, %273, %cst_122 [1] : vector<8x8xf32> to vector<8xf32>
    %275 = vector.shape_cast %274 : vector<8xf32> to vector<8x1xf32>
    %276 = vector.broadcast %275 : vector<8x1xf32> to vector<8x8xf32>
    %277 = arith.divf %273, %276 : vector<8x8xf32>
    %cst_123 = arith.constant dense<0.000000e+00> : vector<8x16xf32>
    %278 = tpu.matmul %277, %263, %cst_123 {dimension_numbers = #tpu.dot_dimension_numbers<[1], [0], [0], [1], [0, 0, 1, 1], [], []>} : vector<8x8xf32>, vector<8x16xf32>, vector<8x16xf32> -> vector<8x16xf32>
    %c8_124 = arith.constant 8 : index
    %c16_125 = arith.constant 16 : index
    %279 = vector.load %arg21[%c8_124, %c16_125] : memref<16x32xf32, #tpu.memory_space<vmem>>, vector<8x16xf32>
    tpu.vector_store %arg21[%c8_124, %c16_125], %278 {strides = array<i32>} : memref<16x32xf32, #tpu.memory_space<vmem>>, vector<8x16xf32>,
    %c0_126 = arith.constant 0 : index
    %c0_127 = arith.constant 0 : index
    %280 = vector.load %arg21[%c0_126, %c0_127] : memref<16x32xf32, #tpu.memory_space<vmem>>, vector<16x32xf32>
    %c1_128 = arith.constant 1 : index
    %c0_129 = arith.constant 0 : index
    %c0_130 = arith.constant 0 : index
    %281 = vector.load %arg6[%c1_128, %c0_129, %c0_130] : memref<2x32x32xf32, #tpu.memory_space<vmem>>, vector<1x32x32xf32>
    %282 = vector.shape_cast %281 : vector<1x32x32xf32> to vector<32x32xf32>
    %cst_131 = arith.constant dense<0.000000e+00> : vector<16x32xf32>
    %283 = tpu.matmul %280, %282, %cst_131 {dimension_numbers = #tpu.dot_dimension_numbers<[1], [0], [0], [1], [0, 0, 1, 1], [], []>} : vector<16x32xf32>, vector<32x32xf32>, vector<16x32xf32> -> vector<16x32xf32>
    %c1_132 = arith.constant 1 : index
    %c0_133 = arith.constant 0 : index
    %c0_134 = arith.constant 0 : index
    %284 = vector.load %arg7[%c1_132, %c0_133, %c0_134] : memref<2x1x32xf32, #tpu.memory_space<vmem>>, vector<1x1x32xf32>
    %285 = vector.shape_cast %284 : vector<1x1x32xf32> to vector<1x32xf32>
    %286 = vector.broadcast %285 : vector<1x32xf32> to vector<16x32xf32>
    %287 = arith.addf %283, %286 : vector<16x32xf32>
    %288 = arith.addf %287, %194 : vector<16x32xf32>
    %c1_135 = arith.constant 1 : index
    %c0_136 = arith.constant 0 : index
    %c0_137 = arith.constant 0 : index
    %289 = vector.load %arg8[%c1_135, %c0_136, %c0_137] : memref<2x1x32xf32, #tpu.memory_space<vmem>>, vector<1x1x32xf32>
    %290 = vector.shape_cast %289 : vector<1x1x32xf32> to vector<1x32xf32>
    %c1_138 = arith.constant 1 : index
    %c0_139 = arith.constant 0 : index
    %c0_140 = arith.constant 0 : index
    %291 = vector.load %arg9[%c1_138, %c0_139, %c0_140] : memref<2x1x32xf32, #tpu.memory_space<vmem>>, vector<1x1x32xf32>
    %292 = vector.shape_cast %291 : vector<1x1x32xf32> to vector<1x32xf32>
    %cst_141 = arith.constant dense<0.000000e+00> : vector<16xf32>
    %293 = vector.multi_reduction <add>, %288, %cst_141 [1] : vector<16x32xf32> to vector<16xf32>
    %294 = vector.shape_cast %293 : vector<16xf32> to vector<16x1xf32>
    %cst_142 = arith.constant 3.200000e+01 : f32
    %295 = vector.broadcast %cst_142 : f32 to vector<16x1xf32>
    %296 = arith.divf %294, %295 : vector<16x1xf32>
    %297 = vector.broadcast %296 : vector<16x1xf32> to vector<16x32xf32>
    %298 = arith.subf %288, %297 : vector<16x32xf32>
    %299 = arith.mulf %298, %298 : vector<16x32xf32>
    %cst_143 = arith.constant dense<0.000000e+00> : vector<16xf32>
    %300 = vector.multi_reduction <add>, %299, %cst_143 [1] : vector<16x32xf32> to vector<16xf32>
    %301 = vector.shape_cast %300 : vector<16xf32> to vector<16x1xf32>
    %cst_144 = arith.constant 3.200000e+01 : f32
    %302 = vector.broadcast %cst_144 : f32 to vector<16x1xf32>
    %303 = arith.divf %301, %302 : vector<16x1xf32>
    %304 = vector.broadcast %296 : vector<16x1xf32> to vector<16x32xf32>
    %305 = arith.subf %288, %304 : vector<16x32xf32>
    %cst_145 = arith.constant 9.99999996E-13 : f32
    %306 = vector.broadcast %cst_145 : f32 to vector<16x1xf32>
    %307 = arith.addf %303, %306 : vector<16x1xf32>
    %308 = math.rsqrt %307 : vector<16x1xf32>
    %309 = vector.broadcast %308 : vector<16x1xf32> to vector<16x32xf32>
    %310 = arith.mulf %305, %309 : vector<16x32xf32>
    %311 = vector.broadcast %290 : vector<1x32xf32> to vector<16x32xf32>
    %312 = arith.mulf %310, %311 : vector<16x32xf32>
    %313 = vector.broadcast %292 : vector<1x32xf32> to vector<16x32xf32>
    %314 = arith.addf %312, %313 : vector<16x32xf32>
    %c1_146 = arith.constant 1 : index
    %c0_147 = arith.constant 0 : index
    %c0_148 = arith.constant 0 : index
    %315 = vector.load %arg10[%c1_146, %c0_147, %c0_148] : memref<2x32x64xf32, #tpu.memory_space<vmem>>, vector<1x32x64xf32>
    %316 = vector.shape_cast %315 : vector<1x32x64xf32> to vector<32x64xf32>
    %cst_149 = arith.constant dense<0.000000e+00> : vector<16x64xf32>
    %317 = tpu.matmul %314, %316, %cst_149 {dimension_numbers = #tpu.dot_dimension_numbers<[1], [0], [0], [1], [0, 0, 1, 1], [], []>} : vector<16x32xf32>, vector<32x64xf32>, vector<16x64xf32> -> vector<16x64xf32>
    %c1_150 = arith.constant 1 : index
    %c0_151 = arith.constant 0 : index
    %c0_152 = arith.constant 0 : index
    %318 = vector.load %arg11[%c1_150, %c0_151, %c0_152] : memref<2x1x64xf32, #tpu.memory_space<vmem>>, vector<1x1x64xf32>
    %319 = vector.shape_cast %318 : vector<1x1x64xf32> to vector<1x64xf32>
    %320 = vector.broadcast %319 : vector<1x64xf32> to vector<16x64xf32>
    %321 = arith.addf %317, %320 : vector<16x64xf32>
    %cst_153 = arith.constant 5.000000e-01 : f32
    %322 = vector.broadcast %cst_153 : f32 to vector<16x64xf32>
    %323 = arith.mulf %322, %321 : vector<16x64xf32>
    %cst_154 = arith.constant 0.707106769 : f32
    %324 = vector.broadcast %cst_154 : f32 to vector<16x64xf32>
    %325 = arith.mulf %321, %324 : vector<16x64xf32>
    %326 = math.erf %325 : vector<16x64xf32>
    %cst_155 = arith.constant 1.000000e+00 : f32
    %327 = vector.broadcast %cst_155 : f32 to vector<16x64xf32>
    %328 = arith.addf %327, %326 : vector<16x64xf32>
    %329 = arith.mulf %323, %328 : vector<16x64xf32>
    %c1_156 = arith.constant 1 : index
    %c0_157 = arith.constant 0 : index
    %c0_158 = arith.constant 0 : index
    %330 = vector.load %arg12[%c1_156, %c0_157, %c0_158] : memref<2x64x32xf32, #tpu.memory_space<vmem>>, vector<1x64x32xf32>
    %331 = vector.shape_cast %330 : vector<1x64x32xf32> to vector<64x32xf32>
    %cst_159 = arith.constant dense<0.000000e+00> : vector<16x32xf32>
    %332 = tpu.matmul %329, %331, %cst_159 {dimension_numbers = #tpu.dot_dimension_numbers<[1], [0], [0], [1], [0, 0, 1, 1], [], []>} : vector<16x64xf32>, vector<64x32xf32>, vector<16x32xf32> -> vector<16x32xf32>
    %c1_160 = arith.constant 1 : index
    %c0_161 = arith.constant 0 : index
    %c0_162 = arith.constant 0 : index
    %333 = vector.load %arg13[%c1_160, %c0_161, %c0_162] : memref<2x1x32xf32, #tpu.memory_space<vmem>>, vector<1x1x32xf32>
    %334 = vector.shape_cast %333 : vector<1x1x32xf32> to vector<1x32xf32>
    %335 = vector.broadcast %334 : vector<1x32xf32> to vector<16x32xf32>
    %336 = arith.addf %332, %335 : vector<16x32xf32>
    %337 = arith.addf %336, %314 : vector<16x32xf32>
    %c1_163 = arith.constant 1 : index
    %c0_164 = arith.constant 0 : index
    %c0_165 = arith.constant 0 : index
    %338 = vector.load %arg14[%c1_163, %c0_164, %c0_165] : memref<2x1x32xf32, #tpu.memory_space<vmem>>, vector<1x1x32xf32>
    %339 = vector.shape_cast %338 : vector<1x1x32xf32> to vector<1x32xf32>
    %c1_166 = arith.constant 1 : index
    %c0_167 = arith.constant 0 : index
    %c0_168 = arith.constant 0 : index
    %340 = vector.load %arg15[%c1_166, %c0_167, %c0_168] : memref<2x1x32xf32, #tpu.memory_space<vmem>>, vector<1x1x32xf32>
    %341 = vector.shape_cast %340 : vector<1x1x32xf32> to vector<1x32xf32>
    %cst_169 = arith.constant dense<0.000000e+00> : vector<16xf32>
    %342 = vector.multi_reduction <add>, %337, %cst_169 [1] : vector<16x32xf32> to vector<16xf32>
    %343 = vector.shape_cast %342 : vector<16xf32> to vector<16x1xf32>
    %cst_170 = arith.constant 3.200000e+01 : f32
    %344 = vector.broadcast %cst_170 : f32 to vector<16x1xf32>
    %345 = arith.divf %343, %344 : vector<16x1xf32>
    %346 = vector.broadcast %345 : vector<16x1xf32> to vector<16x32xf32>
    %347 = arith.subf %337, %346 : vector<16x32xf32>
    %348 = arith.mulf %347, %347 : vector<16x32xf32>
    %cst_171 = arith.constant dense<0.000000e+00> : vector<16xf32>
    %349 = vector.multi_reduction <add>, %348, %cst_171 [1] : vector<16x32xf32> to vector<16xf32>
    %350 = vector.shape_cast %349 : vector<16xf32> to vector<16x1xf32>
    %cst_172 = arith.constant 3.200000e+01 : f32
    %351 = vector.broadcast %cst_172 : f32 to vector<16x1xf32>
    %352 = arith.divf %350, %351 : vector<16x1xf32>
    %353 = vector.broadcast %345 : vector<16x1xf32> to vector<16x32xf32>
    %354 = arith.subf %337, %353 : vector<16x32xf32>
    %cst_173 = arith.constant 9.99999996E-13 : f32
    %355 = vector.broadcast %cst_173 : f32 to vector<16x1xf32>
    %356 = arith.addf %352, %355 : vector<16x1xf32>
    %357 = math.rsqrt %356 : vector<16x1xf32>
    %358 = vector.broadcast %357 : vector<16x1xf32> to vector<16x32xf32>
    %359 = arith.mulf %354, %358 : vector<16x32xf32>
    %360 = vector.broadcast %339 : vector<1x32xf32> to vector<16x32xf32>
    %361 = arith.mulf %359, %360 : vector<16x32xf32>
    %362 = vector.broadcast %341 : vector<1x32xf32> to vector<16x32xf32>
    %363 = arith.addf %361, %362 : vector<16x32xf32>
    %364 = vector.extract_strided_slice %363 {offsets = [0, 0], sizes = [1, 32], strides = [1, 1]} : vector<16x32xf32> to vector<1x32xf32>
    %365 = vector.extract_strided_slice %363 {offsets = [8, 0], sizes = [1, 32], strides = [1, 1]} : vector<16x32xf32> to vector<1x32xf32>
    %366 = tpu.concatenate %364, %365 in 0 : vector<1x32xf32>, vector<1x32xf32> -> vector<2x32xf32>
    %c0_174 = arith.constant 0 : index
    %c0_175 = arith.constant 0 : index
    %367 = vector.load %arg16[%c0_174, %c0_175] : memref<32x32xf32, #tpu.memory_space<vmem>>, vector<32x32xf32>
    %cst_176 = arith.constant dense<0.000000e+00> : vector<2x32xf32>
    %368 = tpu.matmul %366, %367, %cst_176 {dimension_numbers = #tpu.dot_dimension_numbers<[1], [0], [0], [1], [0, 0, 1, 1], [], []>} : vector<2x32xf32>, vector<32x32xf32>, vector<2x32xf32> -> vector<2x32xf32>
    %c0_177 = arith.constant 0 : index
    %c0_178 = arith.constant 0 : index
    %369 = vector.load %arg17[%c0_177, %c0_178] : memref<1x32xf32, #tpu.memory_space<vmem>>, vector<1x32xf32>
    %370 = vector.broadcast %369 : vector<1x32xf32> to vector<2x32xf32>
    %371 = arith.addf %368, %370 : vector<2x32xf32>
    %372 = math.tanh %371 : vector<2x32xf32>
    %c0_179 = arith.constant 0 : index
    %c0_180 = arith.constant 0 : index
    %373 = vector.load %arg18[%c0_179, %c0_180] : memref<32x6xf32, #tpu.memory_space<vmem>>, vector<32x6xf32>
    %cst_181 = arith.constant dense<0.000000e+00> : vector<2x6xf32>
    %374 = tpu.matmul %372, %373, %cst_181 {dimension_numbers = #tpu.dot_dimension_numbers<[1], [0], [0], [1], [0, 0, 1, 1], [], []>} : vector<2x32xf32>, vector<32x6xf32>, vector<2x6xf32> -> vector<2x6xf32>
    %c0_182 = arith.constant 0 : index
    %c0_183 = arith.constant 0 : index
    %375 = vector.load %arg19[%c0_182, %c0_183] : memref<1x6xf32, #tpu.memory_space<vmem>>, vector<1x6xf32>
    %376 = vector.broadcast %375 : vector<1x6xf32> to vector<2x6xf32>
    %377 = arith.addf %374, %376 : vector<2x6xf32>
    %c0_184 = arith.constant 0 : index
    %c0_185 = arith.constant 0 : index
    %378 = vector.load %arg20[%c0_184, %c0_185] : memref<2x6xf32, #tpu.memory_space<vmem>>, vector<2x6xf32>
    tpu.vector_store %arg20[%c0_184, %c0_185], %377 {strides = array<i32>} : memref<2x6xf32, #tpu.memory_space<vmem>>, vector<2x6xf32>,
    return
  }
}

</mosaic_0001>

<llo_original>
// kernel: nli_forward.1
$region0: #{nli_forward.1}
  #allocation0 [shape = 'u32[]', space=smem, size = 0x4, offset = 0x4, fixed_abs, tag = 'smem constant byte address 0x4 - core index']
  #allocation1 [shape = 'u32[144,128]{1,0:T(1,128)}', space=vmem, size = 0x12000, scoped, tag = 'internal scratch']
  #allocation2 [shape = 'f32[16,32]{1,0:T(8,128)}', space=vmem, size = 0x2000, scoped, tag = 'scratch operand']
  %s0 = inlined_call_operand.vmem [shape: f32[16,32], index: 0, kind: input, shape index: {}]
  %s1 = inlined_call_operand.vmem [shape: f32[2,8], index: 1, kind: input, shape index: {}]
  %s2 = inlined_call_operand.vmem [shape: f32[1,32], index: 2, kind: input, shape index: {}]
  %s3 = inlined_call_operand.vmem [shape: f32[1,32], index: 3, kind: input, shape index: {}]
  %s4 = inlined_call_operand.vmem [shape: f32[2,32,96], index: 4, kind: input, shape index: {}]
  %s5 = inlined_call_operand.vmem [shape: f32[2,1,96], index: 5, kind: input, shape index: {}]
  %s6 = inlined_call_operand.vmem [shape: f32[2,32,32], index: 6, kind: input, shape index: {}]
  %s7 = inlined_call_operand.vmem [shape: f32[2,1,32], index: 7, kind: input, shape index: {}]
  %s8 = inlined_call_operand.vmem [shape: f32[2,1,32], index: 8, kind: input, shape index: {}]
  %s9 = inlined_call_operand.vmem [shape: f32[2,1,32], index: 9, kind: input, shape index: {}]
  %s10 = inlined_call_operand.vmem [shape: f32[2,32,64], index: 10, kind: input, shape index: {}]
  %s11 = inlined_call_operand.vmem [shape: f32[2,1,64], index: 11, kind: input, shape index: {}]
  %s12 = inlined_call_operand.vmem [shape: f32[2,64,32], index: 12, kind: input, shape index: {}]
  %s13 = inlined_call_operand.vmem [shape: f32[2,1,32], index: 13, kind: input, shape index: {}]
  %s14 = inlined_call_operand.vmem [shape: f32[2,1,32], index: 14, kind: input, shape index: {}]
  %s15 = inlined_call_operand.vmem [shape: f32[2,1,32], index: 15, kind: input, shape index: {}]
  %s16 = inlined_call_operand.vmem [shape: f32[32,32], index: 16, kind: input, shape index: {}]
  %s17 = inlined_call_operand.vmem [shape: f32[1,32], index: 17, kind: input, shape index: {}]
  %s18 = inlined_call_operand.vmem [shape: f32[32,6], index: 18, kind: input, shape index: {}]
  %s19 = inlined_call_operand.vmem [shape: f32[1,6], index: 19, kind: input, shape index: {}]
  %s20 = inlined_call_operand.hbm [shape: f32[2,6], index: 20, kind: output, shape index: {}]
  %s21 = sld [smem:[#allocation0]]
  $region90: #{nli_forward.1} parent=0
    _
  %s23 = ssub.s32 1, %s21
  %s24 = scalar_select 0, %s23, %s21
  $region1: #{nli_forward.1} parent=0
    #allocation3 [shape = 'u8[1024]{0}', space=vmem, size = 0x400, scoped, tag = 'output window, operand 0, single buffered']
    #allocation4 [shape = 's32[1]{0}', space=sflag, size = 0x4, scoped, tag = 'scoped memory for nli_forward.1']
    %25 = vsyncpa [#allocation4], 0
    // Predicated region
    $region2: #{nli_forward.1} parent=1 // pred_check
      _
    $region3: #{nli_forward.1} parent=1 // pred_check_branch
      %27 = sbr.rel (0) target = $region5
    $region4: #{nli_forward.1} parent=1 // pred_region
      _
    $region5: #{nli_forward.1} parent=1 // pred_fallthru
      _
    // Predicated region
    $region6: #{nli_forward.1} parent=1 // pred_check
      _
    $region7: #{nli_forward.1} parent=1 // pred_check_branch
      %29 = sbr.rel (0) target = $region9
    $region8: #{nli_forward.1} parent=1 // pred_region
      _
    $region9: #{nli_forward.1} parent=1 // pred_fallthru
      _
    // Predicated region
    $region10: #{nli_forward.1} parent=1 // pred_check
      _
    $region11: #{nli_forward.1} parent=1 // pred_check_branch
      %31 = sbr.rel (0) target = $region13
    $region12: #{nli_forward.1} parent=1 // pred_region
      _
    $region13: #{nli_forward.1} parent=1 // pred_fallthru
      _
    // Predicated region
    $region14: #{nli_forward.1} parent=1 // pred_check
      _
    $region15: #{nli_forward.1} parent=1 // pred_check_branch
      %33 = sbr.rel (0) target = $region17
    $region16: #{nli_forward.1} parent=1 // pred_region
      _
    $region17: #{nli_forward.1} parent=1 // pred_fallthru
      _
    // Predicated region
    $region18: #{nli_forward.1} parent=1 // pred_check
      _
    $region19: #{nli_forward.1} parent=1 // pred_check_branch
      %35 = sbr.rel (0) target = $region21
    $region20: #{nli_forward.1} parent=1 // pred_region
      _
    $region21: #{nli_forward.1} parent=1 // pred_fallthru
      _
    // Predicated region
    $region22: #{nli_forward.1} parent=1 // pred_check
      _
    $region23: #{nli_forward.1} parent=1 // pred_check_branch
      %37 = sbr.rel (0) target = $region25
    $region24: #{nli_forward.1} parent=1 // pred_region
      _
    $region25: #{nli_forward.1} parent=1 // pred_fallthru
      _
    // Predicated region
    $region26: #{nli_forward.1} parent=1 // pred_check
      _
    $region27: #{nli_forward.1} parent=1 // pred_check_branch
      %39 = sbr.rel (0) target = $region29
    $region28: #{nli_forward.1} parent=1 // pred_region
      _
    $region29: #{nli_forward.1} parent=1 // pred_fallthru
      _
    // Predicated region
    $region30: #{nli_forward.1} parent=1 // pred_check
      _
    $region31: #{nli_forward.1} parent=1 // pred_check_branch
      %41 = sbr.rel (0) target = $region33
    $region32: #{nli_forward.1} parent=1 // pred_region
      _
    $region33: #{nli_forward.1} parent=1 // pred_fallthru
      _
    // Predicated region
    $region34: #{nli_forward.1} parent=1 // pred_check
      _
    $region35: #{nli_forward.1} parent=1 // pred_check_branch
      %43 = sbr.rel (0) target = $region37
    $region36: #{nli_forward.1} parent=1 // pred_region
      _
    $region37: #{nli_forward.1} parent=1 // pred_fallthru
      _
    // Predicated region
    $region38: #{nli_forward.1} parent=1 // pred_check
      _
    $region39: #{nli_forward.1} parent=1 // pred_check_branch
      %45 = sbr.rel (0) target = $region41
    $region40: #{nli_forward.1} parent=1 // pred_region
      _
    $region41: #{nli_forward.1} parent=1 // pred_fallthru
      _
    // Predicated region
    $region42: #{nli_forward.1} parent=1 // pred_check
      _
    $region43: #{nli_forward.1} parent=1 // pred_check_branch
      %47 = sbr.rel (0) target = $region45
    $region44: #{nli_forward.1} parent=1 // pred_region
      _
    $region45: #{nli_forward.1} parent=1 // pred_fallthru
      _
    // Predicated region
    $region46: #{nli_forward.1} parent=1 // pred_check
      _
    $region47: #{nli_forward.1} parent=1 // pred_check_branch
      %49 = sbr.rel (0) target = $region49
    $region48: #{nli_forward.1} parent=1 // pred_region
      _
    $region49: #{nli_forward.1} parent=1 // pred_fallthru
      _
    // Predicated region
    $region50: #{nli_forward.1} parent=1 // pred_check
      _
    $region51: #{nli_forward.1} parent=1 // pred_check_branch
      %51 = sbr.rel (0) target = $region53
    $region52: #{nli_forward.1} parent=1 // pred_region
      _
    $region53: #{nli_forward.1} parent=1 // pred_fallthru
      _
    // Predicated region
    $region54: #{nli_forward.1} parent=1 // pred_check
      _
    $region55: #{nli_forward.1} parent=1 // pred_check_branch
      %53 = sbr.rel (0) target = $region57
    $region56: #{nli_forward.1} parent=1 // pred_region
      _
    $region57: #{nli_forward.1} parent=1 // pred_fallthru
      _
    // Predicated region
    $region58: #{nli_forward.1} parent=1 // pred_check
      _
    $region59: #{nli_forward.1} parent=1 // pred_check_branch
      %55 = sbr.rel (0) target = $region61
    $region60: #{nli_forward.1} parent=1 // pred_region
      _
    $region61: #{nli_forward.1} parent=1 // pred_fallthru
      _
    // Predicated region
    $region62: #{nli_forward.1} parent=1 // pred_check
      _
    $region63: #{nli_forward.1} parent=1 // pred_check_branch
      %57 = sbr.rel (0) target = $region65
    $region64: #{nli_forward.1} parent=1 // pred_region
      _
    $region65: #{nli_forward.1} parent=1 // pred_fallthru
      _
    // Predicated region
    $region66: #{nli_forward.1} parent=1 // pred_check
      _
    $region67: #{nli_forward.1} parent=1 // pred_check_branch
      %59 = sbr.rel (0) target = $region69
    $region68: #{nli_forward.1} parent=1 // pred_region
      _
    $region69: #{nli_forward.1} parent=1 // pred_fallthru
      _
    // Predicated region
    $region70: #{nli_forward.1} parent=1 // pred_check
      _
    $region71: #{nli_forward.1} parent=1 // pred_check_branch
      %61 = sbr.rel (0) target = $region73
    $region72: #{nli_forward.1} parent=1 // pred_region
      _
    $region73: #{nli_forward.1} parent=1 // pred_fallthru
      _
    // Predicated region
    $region74: #{nli_forward.1} parent=1 // pred_check
      _
    $region75: #{nli_forward.1} parent=1 // pred_check_branch
      %63 = sbr.rel (0) target = $region77
    $region76: #{nli_forward.1} parent=1 // pred_region
      _
    $region77: #{nli_forward.1} parent=1 // pred_fallthru
      _
    // Predicated region
    $region78: #{nli_forward.1} parent=1 // pred_check
      _
    $region79: #{nli_forward.1} parent=1 // pred_check_branch
      %65 = sbr.rel (0) target = $region81
    $region80: #{nli_forward.1} parent=1 // pred_region
      _
    $region81: #{nli_forward.1} parent=1 // pred_fallthru
      _
    %v66 = vld [vmem:[%s0] sm:$0xff]
    %v67 = vld [vmem:[%s0 + $0x8] sm:$0xff]
    %v68 = vld [vmem:[%s2] sm:$0x1]
    %v69 = vld [vmem:[%s3] sm:$0x1]
    %vm70 = vcmask 261120
    %v71 = vsel %vm70, %v66, 0.0
    %72 = vadd.xlane.f32.xlu0 %v71
    %v73 = vpop.xlane.xlu0 %72
    %v74 = vsel %vm70, %v67, 0.0
    %75 = vadd.xlane.f32.xlu0 %v74
    %v76 = vpop.xlane.xlu0 %75
    %v77 = vrcp.pop 32.0
    %v78 = vmul.f32 %v73, %v77
    %v79 = vmul.f32 %v76, %v77
    %v80 = vsub.f32 %v66, %v78
    %v81 = vsub.f32 %v67, %v79
    %v82 = vmul.f32 %v80, %v80
    %v83 = vmul.f32 %v81, %v81
    %v84 = vsel %vm70, %v82, 0.0
    %85 = vadd.xlane.f32.xlu0 %v84
    %v86 = vpop.xlane.xlu0 %85
    %v87 = vsel %vm70, %v83, 0.0
    %88 = vadd.xlane.f32.xlu0 %v87
    %v89 = vpop.xlane.xlu0 %88
    %v90 = vmul.f32 %v86, %v77
    %v91 = vmul.f32 %v89, %v77
    %v92 = vadd.f32 %v90, 1e-12
    %v93 = vadd.f32 %v91, 1e-12
    %v94 = vrsqrt.pop %v92
    %v95 = vrsqrt.pop %v93
    %v96 = vmul.f32 %v80, %v94
    %v97 = vmul.f32 %v81, %v95
    %v99 = vlaneseq
    %v100 = vshrl.u32 %v99, 7
    %v101 = vsub.s32 0, %v100
    %v102 = vrot.slane %v68, %v101
    %v104 = vmul.f32 %v96, %v102
    %v105 = vmul.f32 %v97, %v102
    %v107 = vlaneseq
    %v108 = vshrl.u32 %v107, 7
    %v109 = vsub.s32 0, %v108
    %v110 = vrot.slane %v69, %v109
    %v112 = vadd.f32 %v104, %v110
    %v113 = vadd.f32 %v105, %v110
    %v114 = vld [vmem:[%s1] sm:$0x3]
    %v115 = vld [vmem:[%s4] sm:$0xff]
    %v116 = vld [vmem:[%s4 + $0x8] sm:$0xff]
    %v117 = vld [vmem:[%s4 + $0x10] sm:$0xff]
    %v118 = vld [vmem:[%s4 + $0x18] sm:$0xff]
    %v119 = vld [vmem:[%s5] sm:$0x1]
    %v121 = vlaneseq
    %v122 = vshrl.u32 %v121, 7
    %v123 = vsub.s32 0, %v122
    %v124 = vrot.slane %v119, %v123
    %v127 = vsel %vm70, %v112, 0
    %v130 = vsel %vm70, %v113, 0
    %132 = vmatprep.subr.mxu0 0.0
    %133 = vmatpush1.msra.mxu0 %v115
    %134 = vmatprep.subr.mxu0 0.0
    %135 = vmatpush1.msra.mxu0 %v116
    %136 = vmatprep.subr.mxu0 0.0
    %137 = vmatpush1.msra.mxu0 %v117
    %138 = vmatprep.subr.mxu0 0.0
    %139 = vmatpush1.msra.mxu0 %v118
    %140 = vmatprep.subr.mxu0 0.0
    %141 = vmatpush1.msra.mxu0 0.0
    %142 = vmatprep.subr.mxu0 0.0
    %143 = vmatpush1.msra.mxu0 0.0
    %144 = vmatprep.subr.mxu0 0.0
    %145 = vmatpush1.msra.mxu0 0.0
    %146 = vmatprep.subr.mxu0 0.0
    %147 = vmatpush1.msra.mxu0 0.0
    %148 = vmatprep.subr.mxu0 0.0
    %149 = vmatpush1.msra.mxu0 0.0
    %150 = vmatprep.subr.mxu0 0.0
    %151 = vmatpush1.msra.mxu0 0.0
    %152 = vmatprep.subr.mxu0 0.0
    %153 = vmatpush1.msra.mxu0 0.0
    %154 = vmatprep.subr.mxu0 0.0
    %155 = vmatpush1.msra.mxu0 0.0
    %156 = vmatprep.subr.mxu0 0.0
    %157 = vmatpush1.msra.mxu0 0.0
    %158 = vmatprep.subr.mxu0 0.0
    %159 = vmatpush1.msra.mxu0 0.0
    %160 = vmatprep.subr.mxu0 0.0
    %161 = vmatpush1.msra.mxu0 0.0
    %162 = vmatprep.subr.mxu0 0.0
    %163 = vmatpush1.msra.mxu0 0.0
    %164 = vmatprep.subr.mxu0 0.0
    %165 = vmatpush1.msra.mxu0 0.0
    %166 = vmatprep.subr.mxu0 0.0
    %167 = vmatpush1.msra.mxu0 0.0
    %168 = vmatprep.subr.mxu0 0.0
    %169 = vmatpush1.msra.mxu0 0.0
    %170 = vmatprep.subr.mxu0 0.0
    %171 = vmatpush1.msra.mxu0 0.0
    %172 = vmatprep.subr.mxu0 0.0
    %173 = vmatpush1.msra.mxu0 0.0
    %174 = vmatprep.subr.mxu0 0.0
    %175 = vmatpush1.msra.mxu0 0.0
    %176 = vmatprep.subr.mxu0 0.0
    %177 = vmatpush1.msra.mxu0 0.0
    %178 = vmatprep.subr.mxu0 0.0
    %179 = vmatpush1.msra.mxu0 0.0
    %180 = vmatprep.subr.mxu0 0.0
    %181 = vmatpush1.msra.mxu0 0.0
    %182 = vmatprep.subr.mxu0 0.0
    %183 = vmatpush1.msra.mxu0 0.0
    %184 = vmatprep.subr.mxu0 0.0
    %185 = vmatpush1.msra.mxu0 0.0
    %186 = vmatprep.subr.mxu0 0.0
    %187 = vmatpush1.msra.mxu0 0.0
    %188 = vmatprep.subr.mxu0 0.0
    %189 = vmatpush1.msra.mxu0 0.0
    %190 = vmatprep.subr.mxu0 0.0
    %191 = vmatpush1.msra.mxu0 0.0
    %192 = vmatprep.subr.mxu0 0.0
    %193 = vmatpush1.msra.mxu0 0.0
    %194 = vmatprep.subr.mxu0 0.0
    %195 = vmatpush1.msra.mxu0 0.0
    %196 = vmatprep.mubr.f32.mxu0 0.0
    %197 = vmatmul.mubr.f32.gmra.mrb[0].mxu0 %v127
    %v198 = vpop.f32.mrb[0].mxu0
    %v199 = vadd.f32 %v124, %v198
    %v200 = vpop.f32.mrb[0].mxu0
    %201 = vmatprep.mubr.f32.mxu0 0.0
    %202 = vmatmul.mubr.f32.gmra.mrb[0].mxu0 %v130
    %v203 = vpop.f32.mrb[0].mxu0
    %v204 = vadd.f32 %v124, %v203
    %v205 = vpop.f32.mrb[0].mxu0
    %206 = vdwg.mxu0
    %208 = vrot.lane.b32.xlu0 %v199, 96
    %v209 = vpop.permute.xlu0 %208
    %vm210 = vcmask 130048
    %v211 = vsel %vm210, %v199, 0
    %v213 = vsel %vm210, %v209, 0
    %215 = vmatprep.subr.mxu0 0.0
    %216 = vmatpush1.xpose.msra.mxu0 %v213
    %217 = vmatprep.subr.mxu0 0.0
    %218 = vmatpush1.xpose.msra.mxu0 0.0
    %219 = vmatprep.subr.mxu0 0.0
    %220 = vmatpush1.xpose.msra.mxu0 0.0
    %221 = vmatprep.subr.mxu0 0.0
    %222 = vmatpush1.xpose.msra.mxu0 0.0
    %223 = vmatprep.subr.mxu0 0.0
    %224 = vmatpush1.xpose.msra.mxu0 0.0
    %225 = vmatprep.subr.mxu0 0.0
    %226 = vmatpush1.xpose.msra.mxu0 0.0
    %227 = vmatprep.subr.mxu0 0.0
    %228 = vmatpush1.xpose.msra.mxu0 0.0
    %229 = vmatprep.subr.mxu0 0.0
    %230 = vmatpush1.xpose.msra.mxu0 0.0
    %231 = vmatprep.subr.mxu0 0.0
    %232 = vmatpush1.xpose.msra.mxu0 0.0
    %233 = vmatprep.subr.mxu0 0.0
    %234 = vmatpush1.xpose.msra.mxu0 0.0
    %235 = vmatprep.subr.mxu0 0.0
    %236 = vmatpush1.xpose.msra.mxu0 0.0
    %237 = vmatprep.subr.mxu0 0.0
    %238 = vmatpush1.xpose.msra.mxu0 0.0
    %239 = vmatprep.subr.mxu0 0.0
    %240 = vmatpush1.xpose.msra.mxu0 0.0
    %241 = vmatprep.subr.mxu0 0.0
    %242 = vmatpush1.xpose.msra.mxu0 0.0
    %243 = vmatprep.subr.mxu0 0.0
    %244 = vmatpush1.xpose.msra.mxu0 0.0
    %245 = vmatprep.subr.mxu0 0.0
    %246 = vmatpush1.xpose.msra.mxu0 0.0
    %247 = vmatprep.subr.mxu0 0.0
    %248 = vmatpush1.xpose.msra.mxu0 0.0
    %249 = vmatprep.subr.mxu0 0.0
    %250 = vmatpush1.xpose.msra.mxu0 0.0
    %251 = vmatprep.subr.mxu0 0.0
    %252 = vmatpush1.xpose.msra.mxu0 0.0
    %253 = vmatprep.subr.mxu0 0.0
    %254 = vmatpush1.xpose.msra.mxu0 0.0
    %255 = vmatprep.subr.mxu0 0.0
    %256 = vmatpush1.xpose.msra.mxu0 0.0
    %257 = vmatprep.subr.mxu0 0.0
    %258 = vmatpush1.xpose.msra.mxu0 0.0
    %259 = vmatprep.subr.mxu0 0.0
    %260 = vmatpush1.xpose.msra.mxu0 0.0
    %261 = vmatprep.subr.mxu0 0.0
    %262 = vmatpush1.xpose.msra.mxu0 0.0
    %263 = vmatprep.subr.mxu0 0.0
    %264 = vmatpush1.xpose.msra.mxu0 0.0
    %265 = vmatprep.subr.mxu0 0.0
    %266 = vmatpush1.xpose.msra.mxu0 0.0
    %267 = vmatprep.subr.mxu0 0.0
    %268 = vmatpush1.xpose.msra.mxu0 0.0
    %269 = vmatprep.subr.mxu0 0.0
    %270 = vmatpush1.xpose.msra.mxu0 0.0
    %271 = vmatprep.subr.mxu0 0.0
    %272 = vmatpush1.xpose.msra.mxu0 0.0
    %273 = vmatprep.subr.mxu0 0.0
    %274 = vmatpush1.xpose.msra.mxu0 0.0
    %275 = vmatprep.subr.mxu0 0.0
    %276 = vmatpush1.xpose.msra.mxu0 0.0
    %277 = vmatprep.subr.mxu0 0.0
    %278 = vmatpush1.xpose.msra.mxu0 0.0
    %279 = vmatprep.mubr.f32.mxu0 0.0
    %280 = vmatmul.mubr.f32.gmra.mrb[0].mxu0 %v211
    %v281 = vpop.f32.mrb[0].mxu0
    %v282 = vadd.f32 0.0, %v281
    %v283 = vpop.f32.mrb[0].mxu0
    %284 = vdwg.mxu0
    %v285 = vmul.f32 %v282, 0.25
    %v286 = vlaneseq
    %v287 = vshrl.u32 %v286, 7
    %v288 = vsub.s32 0, %v287
    %v289 = vrot.slane %v114, %v288
    %v290 = vadd.f32 %v285, %v289
    %vm291 = vcmask 64512
    %v292 = vsel %vm291, %v290, -inf
    %293 = vmax.xlane.f32.xlu0 %v292
    %v294 = vpop.xlane.xlu0 %293
    %v295 = vsub.f32 %v290, %v294
    %v296 = vmul.f32 %v295, 1.442695
    %v297 = vpow.pop %v296
    %v298 = vsel %vm291, %v297, 0.0
    %299 = vadd.xlane.f32.xlu0 %v298
    %v300 = vpop.xlane.xlu0 %299
    %v301 = vrcp.pop %v300
    %v302 = vmul.f32 %v297, %v301
    %303 = vrot.lane.b32.xlu0 %v199, 64
    %v304 = vpop.permute.xlu0 %303
    %v307 = vsel %vm291, %v302, 0
    %309 = vmatprep.subr.mxu0 0.0
    %310 = vmatpush1.msra.mxu0 %v304
    %311 = vmatprep.subr.mxu0 0.0
    %312 = vmatpush1.msra.mxu0 0.0
    %313 = vmatprep.subr.mxu0 0.0
    %314 = vmatpush1.msra.mxu0 0.0
    %315 = vmatprep.subr.mxu0 0.0
    %316 = vmatpush1.msra.mxu0 0.0
    %317 = vmatprep.subr.mxu0 0.0
    %318 = vmatpush1.msra.mxu0 0.0
    %319 = vmatprep.subr.mxu0 0.0
    %320 = vmatpush1.msra.mxu0 0.0
    %321 = vmatprep.subr.mxu0 0.0
    %322 = vmatpush1.msra.mxu0 0.0
    %323 = vmatprep.subr.mxu0 0.0
    %324 = vmatpush1.msra.mxu0 0.0
    %325 = vmatprep.subr.mxu0 0.0
    %326 = vmatpush1.msra.mxu0 0.0
    %327 = vmatprep.subr.mxu0 0.0
    %328 = vmatpush1.msra.mxu0 0.0
    %329 = vmatprep.subr.mxu0 0.0
    %330 = vmatpush1.msra.mxu0 0.0
    %331 = vmatprep.subr.mxu0 0.0
    %332 = vmatpush1.msra.mxu0 0.0
    %333 = vmatprep.subr.mxu0 0.0
    %334 = vmatpush1.msra.mxu0 0.0
    %335 = vmatprep.subr.mxu0 0.0
    %336 = vmatpush1.msra.mxu0 0.0
    %337 = vmatprep.subr.mxu0 0.0
    %338 = vmatpush1.msra.mxu0 0.0
    %339 = vmatprep.subr.mxu0 0.0
    %340 = vmatpush1.msra.mxu0 0.0
    %341 = vmatprep.subr.mxu0 0.0
    %342 = vmatpush1.msra.mxu0 0.0
    %343 = vmatprep.subr.mxu0 0.0
    %344 = vmatpush1.msra.mxu0 0.0
    %345 = vmatprep.subr.mxu0 0.0
    %346 = vmatpush1.msra.mxu0 0.0
    %347 = vmatprep.subr.mxu0 0.0
    %348 = vmatpush1.msra.mxu0 0.0
    %349 = vmatprep.subr.mxu0 0.0
    %350 = vmatpush1.msra.mxu0 0.0
    %351 = vmatprep.subr.mxu0 0.0
    %352 = vmatpush1.msra.mxu0 0.0
    %353 = vmatprep.subr.mxu0 0.0
    %354 = vmatpush1.msra.mxu0 0.0
    %355 = vmatprep.subr.mxu0 0.0
    %356 = vmatpush1.msra.mxu0 0.0
    %357 = vmatprep.subr.mxu0 0.0
    %358 = vmatpush1.msra.mxu0 0.0
    %359 = vmatprep.subr.mxu0 0.0
    %360 = vmatpush1.msra.mxu0 0.0
    %361 = vmatprep.subr.mxu0 0.0
    %362 = vmatpush1.msra.mxu0 0.0
    %363 = vmatprep.subr.mxu0 0.0
    %364 = vmatpush1.msra.mxu0 0.0
    %365 = vmatprep.subr.mxu0 0.0
    %366 = vmatpush1.msra.mxu0 0.0
    %367 = vmatprep.subr.mxu0 0.0
    %368 = vmatpush1.msra.mxu0 0.0
    %369 = vmatprep.subr.mxu0 0.0
    %370 = vmatpush1.msra.mxu0 0.0
    %371 = vmatprep.subr.mxu0 0.0
    %372 = vmatpush1.msra.mxu0 0.0
    %373 = vmatprep.mubr.f32.mxu0 0.0
    %374 = vmatmul.mubr.f32.gmra.mrb[0].mxu0 %v307
    %v375 = vpop.f32.mrb[0].mxu0
    %v376 = vadd.f32 0.0, %v375
    %v377 = vpop.f32.mrb[0].mxu0
    %378 = vdwg.mxu0
    %379 = vst.msk [vmem:[#allocation2] sm:$0xff] %vm210, %v376
    %380 = vrot.lane.b32.xlu0 %v199, 112
    %v381 = vpop.permute.xlu0 %380
    %382 = vrot.lane.b32.xlu0 %v199, 80
    %v383 = vpop.permute.xlu0 %382
    %v384 = vsel %vm210, %v381, 0
    %v386 = vsel %vm210, %v383, 0
    %388 = vmatprep.subr.mxu0 0.0
    %389 = vmatpush1.xpose.msra.mxu0 %v386
    %390 = vmatprep.subr.mxu0 0.0
    %391 = vmatpush1.xpose.msra.mxu0 0.0
    %392 = vmatprep.subr.mxu0 0.0
    %393 = vmatpush1.xpose.msra.mxu0 0.0
    %394 = vmatprep.subr.mxu0 0.0
    %395 = vmatpush1.xpose.msra.mxu0 0.0
    %396 = vmatprep.subr.mxu0 0.0
    %397 = vmatpush1.xpose.msra.mxu0 0.0
    %398 = vmatprep.subr.mxu0 0.0
    %399 = vmatpush1.xpose.msra.mxu0 0.0
    %400 = vmatprep.subr.mxu0 0.0
    %401 = vmatpush1.xpose.msra.mxu0 0.0
    %402 = vmatprep.subr.mxu0 0.0
    %403 = vmatpush1.xpose.msra.mxu0 0.0
    %404 = vmatprep.subr.mxu0 0.0
    %405 = vmatpush1.xpose.msra.mxu0 0.0
    %406 = vmatprep.subr.mxu0 0.0
    %407 = vmatpush1.xpose.msra.mxu0 0.0
    %408 = vmatprep.subr.mxu0 0.0
    %409 = vmatpush1.xpose.msra.mxu0 0.0
    %410 = vmatprep.subr.mxu0 0.0
    %411 = vmatpush1.xpose.msra.mxu0 0.0
    %412 = vmatprep.subr.mxu0 0.0
    %413 = vmatpush1.xpose.msra.mxu0 0.0
    %414 = vmatprep.subr.mxu0 0.0
    %415 = vmatpush1.xpose.msra.mxu0 0.0
    %416 = vmatprep.subr.mxu0 0.0
    %417 = vmatpush1.xpose.msra.mxu0 0.0
    %418 = vmatprep.subr.mxu0 0.0
    %419 = vmatpush1.xpose.msra.mxu0 0.0
    %420 = vmatprep.subr.mxu0 0.0
    %421 = vmatpush1.xpose.msra.mxu0 0.0
    %422 = vmatprep.subr.mxu0 0.0
    %423 = vmatpush1.xpose.msra.mxu0 0.0
    %424 = vmatprep.subr.mxu0 0.0
    %425 = vmatpush1.xpose.msra.mxu0 0.0
    %426 = vmatprep.subr.mxu0 0.0
    %427 = vmatpush1.xpose.msra.mxu0 0.0
    %428 = vmatprep.subr.mxu0 0.0
    %429 = vmatpush1.xpose.msra.mxu0 0.0
    %430 = vmatprep.subr.mxu0 0.0
    %431 = vmatpush1.xpose.msra.mxu0 0.0
    %432 = vmatprep.subr.mxu0 0.0
    %433 = vmatpush1.xpose.msra.mxu0 0.0
    %434 = vmatprep.subr.mxu0 0.0
    %435 = vmatpush1.xpose.msra.mxu0 0.0
    %436 = vmatprep.subr.mxu0 0.0
    %437 = vmatpush1.xpose.msra.mxu0 0.0
    %438 = vmatprep.subr.mxu0 0.0
    %439 = vmatpush1.xpose.msra.mxu0 0.0
    %440 = vmatprep.subr.mxu0 0.0
    %441 = vmatpush1.xpose.msra.mxu0 0.0
    %442 = vmatprep.subr.mxu0 0.0
    %443 = vmatpush1.xpose.msra.mxu0 0.0
    %444 = vmatprep.subr.mxu0 0.0
    %445 = vmatpush1.xpose.msra.mxu0 0.0
    %446 = vmatprep.subr.mxu0 0.0
    %447 = vmatpush1.xpose.msra.mxu0 0.0
    %448 = vmatprep.subr.mxu0 0.0
    %449 = vmatpush1.xpose.msra.mxu0 0.0
    %450 = vmatprep.subr.mxu0 0.0
    %451 = vmatpush1.xpose.msra.mxu0 0.0
    %452 = vmatprep.mubr.f32.mxu0 0.0
    %453 = vmatmul.mubr.f32.gmra.mrb[0].mxu0 %v384
    %v454 = vpop.f32.mrb[0].mxu0
    %v455 = vadd.f32 0.0, %v454
    %v456 = vpop.f32.mrb[0].mxu0
    %457 = vdwg.mxu0
    %v458 = vmul.f32 %v455, 0.25
    %v459 = vadd.f32 %v458, %v289
    %v460 = vsel %vm291, %v459, -inf
    %461 = vmax.xlane.f32.xlu0 %v460
    %v462 = vpop.xlane.xlu0 %461
    %v463 = vsub.f32 %v459, %v462
    %v464 = vmul.f32 %v463, 1.442695
    %v465 = vpow.pop %v464
    %v466 = vsel %vm291, %v465, 0.0
    %467 = vadd.xlane.f32.xlu0 %v466
    %v468 = vpop.xlane.xlu0 %467
    %v469 = vrcp.pop %v468
    %v470 = vmul.f32 %v465, %v469
    %471 = vrot.lane.b32.xlu0 %v199, 48
    %v472 = vpop.permute.xlu0 %471
    %v475 = vsel %vm291, %v470, 0
    %477 = vmatprep.subr.mxu0 0.0
    %478 = vmatpush1.msra.mxu0 %v472
    %479 = vmatprep.subr.mxu0 0.0
    %480 = vmatpush1.msra.mxu0 0.0
    %481 = vmatprep.subr.mxu0 0.0
    %482 = vmatpush1.msra.mxu0 0.0
    %483 = vmatprep.subr.mxu0 0.0
    %484 = vmatpush1.msra.mxu0 0.0
    %485 = vmatprep.subr.mxu0 0.0
    %486 = vmatpush1.msra.mxu0 0.0
    %487 = vmatprep.subr.mxu0 0.0
    %488 = vmatpush1.msra.mxu0 0.0
    %489 = vmatprep.subr.mxu0 0.0
    %490 = vmatpush1.msra.mxu0 0.0
    %491 = vmatprep.subr.mxu0 0.0
    %492 = vmatpush1.msra.mxu0 0.0
    %493 = vmatprep.subr.mxu0 0.0
    %494 = vmatpush1.msra.mxu0 0.0
    %495 = vmatprep.subr.mxu0 0.0
    %496 = vmatpush1.msra.mxu0 0.0
    %497 = vmatprep.subr.mxu0 0.0
    %498 = vmatpush1.msra.mxu0 0.0
    %499 = vmatprep.subr.mxu0 0.0
    %500 = vmatpush1.msra.mxu0 0.0
    %501 = vmatprep.subr.mxu0 0.0
    %502 = vmatpush1.msra.mxu0 0.0
    %503 = vmatprep.subr.mxu0 0.0
    %504 = vmatpush1.msra.mxu0 0.0
    %505 = vmatprep.subr.mxu0 0.0
    %506 = vmatpush1.msra.mxu0 0.0
    %507 = vmatprep.subr.mxu0 0.0
    %508 = vmatpush1.msra.mxu0 0.0
    %509 = vmatprep.subr.mxu0 0.0
    %510 = vmatpush1.msra.mxu0 0.0
    %511 = vmatprep.subr.mxu0 0.0
    %512 = vmatpush1.msra.mxu0 0.0
    %513 = vmatprep.subr.mxu0 0.0
    %514 = vmatpush1.msra.mxu0 0.0
    %515 = vmatprep.subr.mxu0 0.0
    %516 = vmatpush1.msra.mxu0 0.0
    %517 = vmatprep.subr.mxu0 0.0
    %518 = vmatpush1.msra.mxu0 0.0
    %519 = vmatprep.subr.mxu0 0.0
    %520 = vmatpush1.msra.mxu0 0.0
    %521 = vmatprep.subr.mxu0 0.0
    %522 = vmatpush1.msra.mxu0 0.0
    %523 = vmatprep.subr.mxu0 0.0
    %524 = vmatpush1.msra.mxu0 0.0
    %525 = vmatprep.subr.mxu0 0.0
    %526 = vmatpush1.msra.mxu0 0.0
    %527 = vmatprep.subr.mxu0 0.0
    %528 = vmatpush1.msra.mxu0 0.0
    %529 = vmatprep.subr.mxu0 0.0
    %530 = vmatpush1.msra.mxu0 0.0
    %531 = vmatprep.subr.mxu0 0.0
    %532 = vmatpush1.msra.mxu0 0.0
    %533 = vmatprep.subr.mxu0 0.0
    %534 = vmatpush1.msra.mxu0 0.0
    %535 = vmatprep.subr.mxu0 0.0
    %536 = vmatpush1.msra.mxu0 0.0
    %537 = vmatprep.subr.mxu0 0.0
    %538 = vmatpush1.msra.mxu0 0.0
    %539 = vmatprep.subr.mxu0 0.0
    %540 = vmatpush1.msra.mxu0 0.0
    %541 = vmatprep.mubr.f32.mxu0 0.0
    %542 = vmatmul.mubr.f32.gmra.mrb[0].mxu0 %v475
    %v543 = vpop.f32.mrb[0].mxu0
    %v544 = vadd.f32 0.0, %v543
    %v545 = vpop.f32.mrb[0].mxu0
    %546 = vdwg.mxu0
    %548 = vrot.lane.b32.xlu0 %v544, 16
    %v549 = vpop.permute.xlu0 %548
    %vm551 = vcmask 261248
    %552 = vst.msk [vmem:[#allocation2] sm:$0xff] %vm551, %v549
    %554 = vrot.lane.b32.xlu0 %v204, 96
    %v555 = vpop.permute.xlu0 %554
    %v556 = vsel %vm210, %v204, 0
    %v558 = vsel %vm210, %v555, 0
    %560 = vmatprep.subr.mxu0 0.0
    %561 = vmatpush1.xpose.msra.mxu0 %v558
    %562 = vmatprep.subr.mxu0 0.0
    %563 = vmatpush1.xpose.msra.mxu0 0.0
    %564 = vmatprep.subr.mxu0 0.0
    %565 = vmatpush1.xpose.msra.mxu0 0.0
    %566 = vmatprep.subr.mxu0 0.0
    %567 = vmatpush1.xpose.msra.mxu0 0.0
    %568 = vmatprep.subr.mxu0 0.0
    %569 = vmatpush1.xpose.msra.mxu0 0.0
    %570 = vmatprep.subr.mxu0 0.0
    %571 = vmatpush1.xpose.msra.mxu0 0.0
    %572 = vmatprep.subr.mxu0 0.0
    %573 = vmatpush1.xpose.msra.mxu0 0.0
    %574 = vmatprep.subr.mxu0 0.0
    %575 = vmatpush1.xpose.msra.mxu0 0.0
    %576 = vmatprep.subr.mxu0 0.0
    %577 = vmatpush1.xpose.msra.mxu0 0.0
    %578 = vmatprep.subr.mxu0 0.0
    %579 = vmatpush1.xpose.msra.mxu0 0.0
    %580 = vmatprep.subr.mxu0 0.0
    %581 = vmatpush1.xpose.msra.mxu0 0.0
    %582 = vmatprep.subr.mxu0 0.0
    %583 = vmatpush1.xpose.msra.mxu0 0.0
    %584 = vmatprep.subr.mxu0 0.0
    %585 = vmatpush1.xpose.msra.mxu0 0.0
    %586 = vmatprep.subr.mxu0 0.0
    %587 = vmatpush1.xpose.msra.mxu0 0.0
    %588 = vmatprep.subr.mxu0 0.0
    %589 = vmatpush1.xpose.msra.mxu0 0.0
    %590 = vmatprep.subr.mxu0 0.0
    %591 = vmatpush1.xpose.msra.mxu0 0.0
    %592 = vmatprep.subr.mxu0 0.0
    %593 = vmatpush1.xpose.msra.mxu0 0.0
    %594 = vmatprep.subr.mxu0 0.0
    %595 = vmatpush1.xpose.msra.mxu0 0.0
    %596 = vmatprep.subr.mxu0 0.0
    %597 = vmatpush1.xpose.msra.mxu0 0.0
    %598 = vmatprep.subr.mxu0 0.0
    %599 = vmatpush1.xpose.msra.mxu0 0.0
    %600 = vmatprep.subr.mxu0 0.0
    %601 = vmatpush1.xpose.msra.mxu0 0.0
    %602 = vmatprep.subr.mxu0 0.0
    %603 = vmatpush1.xpose.msra.mxu0 0.0
    %604 = vmatprep.subr.mxu0 0.0
    %605 = vmatpush1.xpose.msra.mxu0 0.0
    %606 = vmatprep.subr.mxu0 0.0
    %607 = vmatpush1.xpose.msra.mxu0 0.0
    %608 = vmatprep.subr.mxu0 0.0
    %609 = vmatpush1.xpose.msra.mxu0 0.0
    %610 = vmatprep.subr.mxu0 0.0
    %611 = vmatpush1.xpose.msra.mxu0 0.0
    %612 = vmatprep.subr.mxu0 0.0
    %613 = vmatpush1.xpose.msra.mxu0 0.0
    %614 = vmatprep.subr.mxu0 0.0
    %615 = vmatpush1.xpose.msra.mxu0 0.0
    %616 = vmatprep.subr.mxu0 0.0
    %617 = vmatpush1.xpose.msra.mxu0 0.0
    %618 = vmatprep.subr.mxu0 0.0
    %619 = vmatpush1.xpose.msra.mxu0 0.0
    %620 = vmatprep.subr.mxu0 0.0
    %621 = vmatpush1.xpose.msra.mxu0 0.0
    %622 = vmatprep.subr.mxu0 0.0
    %623 = vmatpush1.xpose.msra.mxu0 0.0
    %624 = vmatprep.mubr.f32.mxu0 0.0
    %625 = vmatmul.mubr.f32.gmra.mrb[0].mxu0 %v556
    %v626 = vpop.f32.mrb[0].mxu0
    %v627 = vadd.f32 0.0, %v626
    %v628 = vpop.f32.mrb[0].mxu0
    %629 = vdwg.mxu0
    %v630 = vmul.f32 %v627, 0.25
    %v631 = vlaneseq
    %v632 = vshrl.u32 %v631, 7
    %v633 = vsub.s32 1, %v632
    %v634 = vrot.slane %v114, %v633
    %v635 = vadd.f32 %v630, %v634
    %v636 = vsel %vm291, %v635, -inf
    %637 = vmax.xlane.f32.xlu0 %v636
    %v638 = vpop.xlane.xlu0 %637
    %v639 = vsub.f32 %v635, %v638
    %v640 = vmul.f32 %v639, 1.442695
    %v641 = vpow.pop %v640
    %v642 = vsel %vm291, %v641, 0.0
    %643 = vadd.xlane.f32.xlu0 %v642
    %v644 = vpop.xlane.xlu0 %643
    %v645 = vrcp.pop %v644
    %v646 = vmul.f32 %v641, %v645
    %647 = vrot.lane.b32.xlu0 %v204, 64
    %v648 = vpop.permute.xlu0 %647
    %v651 = vsel %vm291, %v646, 0
    %653 = vmatprep.subr.mxu0 0.0
    %654 = vmatpush1.msra.mxu0 %v648
    %655 = vmatprep.subr.mxu0 0.0
    %656 = vmatpush1.msra.mxu0 0.0
    %657 = vmatprep.subr.mxu0 0.0
    %658 = vmatpush1.msra.mxu0 0.0
    %659 = vmatprep.subr.mxu0 0.0
    %660 = vmatpush1.msra.mxu0 0.0
    %661 = vmatprep.subr.mxu0 0.0
    %662 = vmatpush1.msra.mxu0 0.0
    %663 = vmatprep.subr.mxu0 0.0
    %664 = vmatpush1.msra.mxu0 0.0
    %665 = vmatprep.subr.mxu0 0.0
    %666 = vmatpush1.msra.mxu0 0.0
    %667 = vmatprep.subr.mxu0 0.0
    %668 = vmatpush1.msra.mxu0 0.0
    %669 = vmatprep.subr.mxu0 0.0
    %670 = vmatpush1.msra.mxu0 0.0
    %671 = vmatprep.subr.mxu0 0.0
    %672 = vmatpush1.msra.mxu0 0.0
    %673 = vmatprep.subr.mxu0 0.0
    %674 = vmatpush1.msra.mxu0 0.0
    %675 = vmatprep.subr.mxu0 0.0
    %676 = vmatpush1.msra.mxu0 0.0
    %677 = vmatprep.subr.mxu0 0.0
    %678 = vmatpush1.msra.mxu0 0.0
    %679 = vmatprep.subr.mxu0 0.0
    %680 = vmatpush1.msra.mxu0 0.0
    %681 = vmatprep.subr.mxu0 0.0
    %682 = vmatpush1.msra.mxu0 0.0
    %683 = vmatprep.subr.mxu0 0.0
    %684 = vmatpush1.msra.mxu0 0.0
    %685 = vmatprep.subr.mxu0 0.0
    %686 = vmatpush1.msra.mxu0 0.0
    %687 = vmatprep.subr.mxu0 0.0
    %688 = vmatpush1.msra.mxu0 0.0
    %689 = vmatprep.subr.mxu0 0.0
    %690 = vmatpush1.msra.mxu0 0.0
    %691 = vmatprep.subr.mxu0 0.0
    %692 = vmatpush1.msra.mxu0 0.0
    %693 = vmatprep.subr.mxu0 0.0
    %694 = vmatpush1.msra.mxu0 0.0
    %695 = vmatprep.subr.mxu0 0.0
    %696 = vmatpush1.msra.mxu0 0.0
    %697 = vmatprep.subr.mxu0 0.0
    %698 = vmatpush1.msra.mxu0 0.0
    %699 = vmatprep.subr.mxu0 0.0
    %700 = vmatpush1.msra.mxu0 0.0
    %701 = vmatprep.subr.mxu0 0.0
    %702 = vmatpush1.msra.mxu0 0.0
    %703 = vmatprep.subr.mxu0 0.0
    %704 = vmatpush1.msra.mxu0 0.0
    %705 = vmatprep.subr.mxu0 0.0
    %706 = vmatpush1.msra.mxu0 0.0
    %707 = vmatprep.subr.mxu0 0.0
    %708 = vmatpush1.msra.mxu0 0.0
    %709 = vmatprep.subr.mxu0 0.0
    %710 = vmatpush1.msra.mxu0 0.0
    %711 = vmatprep.subr.mxu0 0.0
    %712 = vmatpush1.msra.mxu0 0.0
    %713 = vmatprep.subr.mxu0 0.0
    %714 = vmatpush1.msra.mxu0 0.0
    %715 = vmatprep.subr.mxu0 0.0
    %716 = vmatpush1.msra.mxu0 0.0
    %717 = vmatprep.mubr.f32.mxu0 0.0
    %718 = vmatmul.mubr.f32.gmra.mrb[0].mxu0 %v651
    %v719 = vpop.f32.mrb[0].mxu0
    %v720 = vadd.f32 0.0, %v719
    %v721 = vpop.f32.mrb[0].mxu0
    %722 = vdwg.mxu0
    %723 = vst.msk [vmem:[#allocation2 + $0x8] sm:$0xff] %vm210, %v720
    %724 = vrot.lane.b32.xlu0 %v204, 112
    %v725 = vpop.permute.xlu0 %724
    %726 = vrot.lane.b32.xlu0 %v204, 80
    %v727 = vpop.permute.xlu0 %726
    %v728 = vsel %vm210, %v725, 0
    %v730 = vsel %vm210, %v727, 0
    %732 = vmatprep.subr.mxu0 0.0
    %733 = vmatpush1.xpose.msra.mxu0 %v730
    %734 = vmatprep.subr.mxu0 0.0
    %735 = vmatpush1.xpose.msra.mxu0 0.0
    %736 = vmatprep.subr.mxu0 0.0
    %737 = vmatpush1.xpose.msra.mxu0 0.0
    %738 = vmatprep.subr.mxu0 0.0
    %739 = vmatpush1.xpose.msra.mxu0 0.0
    %740 = vmatprep.subr.mxu0 0.0
    %741 = vmatpush1.xpose.msra.mxu0 0.0
    %742 = vmatprep.subr.mxu0 0.0
    %743 = vmatpush1.xpose.msra.mxu0 0.0
    %744 = vmatprep.subr.mxu0 0.0
    %745 = vmatpush1.xpose.msra.mxu0 0.0
    %746 = vmatprep.subr.mxu0 0.0
    %747 = vmatpush1.xpose.msra.mxu0 0.0
    %748 = vmatprep.subr.mxu0 0.0
    %749 = vmatpush1.xpose.msra.mxu0 0.0
    %750 = vmatprep.subr.mxu0 0.0
    %751 = vmatpush1.xpose.msra.mxu0 0.0
    %752 = vmatprep.subr.mxu0 0.0
    %753 = vmatpush1.xpose.msra.mxu0 0.0
    %754 = vmatprep.subr.mxu0 0.0
    %755 = vmatpush1.xpose.msra.mxu0 0.0
    %756 = vmatprep.subr.mxu0 0.0
    %757 = vmatpush1.xpose.msra.mxu0 0.0
    %758 = vmatprep.subr.mxu0 0.0
    %759 = vmatpush1.xpose.msra.mxu0 0.0
    %760 = vmatprep.subr.mxu0 0.0
    %761 = vmatpush1.xpose.msra.mxu0 0.0
    %762 = vmatprep.subr.mxu0 0.0
    %763 = vmatpush1.xpose.msra.mxu0 0.0
    %764 = vmatprep.subr.mxu0 0.0
    %765 = vmatpush1.xpose.msra.mxu0 0.0
    %766 = vmatprep.subr.mxu0 0.0
    %767 = vmatpush1.xpose.msra.mxu0 0.0
    %768 = vmatprep.subr.mxu0 0.0
    %769 = vmatpush1.xpose.msra.mxu0 0.0
    %770 = vmatprep.subr.mxu0 0.0
    %771 = vmatpush1.xpose.msra.mxu0 0.0
    %772 = vmatprep.subr.mxu0 0.0
    %773 = vmatpush1.xpose.msra.mxu0 0.0
    %774 = vmatprep.subr.mxu0 0.0
    %775 = vmatpush1.xpose.msra.mxu0 0.0
    %776 = vmatprep.subr.mxu0 0.0
    %777 = vmatpush1.xpose.msra.mxu0 0.0
    %778 = vmatprep.subr.mxu0 0.0
    %779 = vmatpush1.xpose.msra.mxu0 0.0
    %780 = vmatprep.subr.mxu0 0.0
    %781 = vmatpush1.xpose.msra.mxu0 0.0
    %782 = vmatprep.subr.mxu0 0.0
    %783 = vmatpush1.xpose.msra.mxu0 0.0
    %784 = vmatprep.subr.mxu0 0.0
    %785 = vmatpush1.xpose.msra.mxu0 0.0
    %786 = vmatprep.subr.mxu0 0.0
    %787 = vmatpush1.xpose.msra.mxu0 0.0
    %788 = vmatprep.subr.mxu0 0.0
    %789 = vmatpush1.xpose.msra.mxu0 0.0
    %790 = vmatprep.subr.mxu0 0.0
    %791 = vmatpush1.xpose.msra.mxu0 0.0
    %792 = vmatprep.subr.mxu0 0.0
    %793 = vmatpush1.xpose.msra.mxu0 0.0
    %794 = vmatprep.subr.mxu0 0.0
    %795 = vmatpush1.xpose.msra.mxu0 0.0
    %796 = vmatprep.mubr.f32.mxu0 0.0
    %797 = vmatmul.mubr.f32.gmra.mrb[0].mxu0 %v728
    %v798 = vpop.f32.mrb[0].mxu0
    %v799 = vadd.f32 0.0, %v798
    %v800 = vpop.f32.mrb[0].mxu0
    %801 = vdwg.mxu0
    %v802 = vmul.f32 %v799, 0.25
    %v803 = vadd.f32 %v802, %v634
    %v804 = vsel %vm291, %v803, -inf
    %805 = vmax.xlane.f32.xlu0 %v804
    %v806 = vpop.xlane.xlu0 %805
    %v807 = vsub.f32 %v803, %v806
    %v808 = vmul.f32 %v807, 1.442695
    %v809 = vpow.pop %v808
    %v810 = vsel %vm291, %v809, 0.0
    %811 = vadd.xlane.f32.xlu0 %v810
    %v812 = vpop.xlane.xlu0 %811
    %v813 = vrcp.pop %v812
    %v814 = vmul.f32 %v809, %v813
    %815 = vrot.lane.b32.xlu0 %v204, 48
    %v816 = vpop.permute.xlu0 %815
    %v819 = vsel %vm291, %v814, 0
    %821 = vmatprep.subr.mxu0 0.0
    %822 = vmatpush1.msra.mxu0 %v816
    %823 = vmatprep.subr.mxu0 0.0
    %824 = vmatpush1.msra.mxu0 0.0
    %825 = vmatprep.subr.mxu0 0.0
    %826 = vmatpush1.msra.mxu0 0.0
    %827 = vmatprep.subr.mxu0 0.0
    %828 = vmatpush1.msra.mxu0 0.0
    %829 = vmatprep.subr.mxu0 0.0
    %830 = vmatpush1.msra.mxu0 0.0
    %831 = vmatprep.subr.mxu0 0.0
    %832 = vmatpush1.msra.mxu0 0.0
    %833 = vmatprep.subr.mxu0 0.0
    %834 = vmatpush1.msra.mxu0 0.0
    %835 = vmatprep.subr.mxu0 0.0
    %836 = vmatpush1.msra.mxu0 0.0
    %837 = vmatprep.subr.mxu0 0.0
    %838 = vmatpush1.msra.mxu0 0.0
    %839 = vmatprep.subr.mxu0 0.0
    %840 = vmatpush1.msra.mxu0 0.0
    %841 = vmatprep.subr.mxu0 0.0
    %842 = vmatpush1.msra.mxu0 0.0
    %843 = vmatprep.subr.mxu0 0.0
    %844 = vmatpush1.msra.mxu0 0.0
    %845 = vmatprep.subr.mxu0 0.0
    %846 = vmatpush1.msra.mxu0 0.0
    %847 = vmatprep.subr.mxu0 0.0
    %848 = vmatpush1.msra.mxu0 0.0
    %849 = vmatprep.subr.mxu0 0.0
    %850 = vmatpush1.msra.mxu0 0.0
    %851 = vmatprep.subr.mxu0 0.0
    %852 = vmatpush1.msra.mxu0 0.0
    %853 = vmatprep.subr.mxu0 0.0
    %854 = vmatpush1.msra.mxu0 0.0
    %855 = vmatprep.subr.mxu0 0.0
    %856 = vmatpush1.msra.mxu0 0.0
    %857 = vmatprep.subr.mxu0 0.0
    %858 = vmatpush1.msra.mxu0 0.0
    %859 = vmatprep.subr.mxu0 0.0
    %860 = vmatpush1.msra.mxu0 0.0
    %861 = vmatprep.subr.mxu0 0.0
    %862 = vmatpush1.msra.mxu0 0.0
    %863 = vmatprep.subr.mxu0 0.0
    %864 = vmatpush1.msra.mxu0 0.0
    %865 = vmatprep.subr.mxu0 0.0
    %866 = vmatpush1.msra.mxu0 0.0
    %867 = vmatprep.subr.mxu0 0.0
    %868 = vmatpush1.msra.mxu0 0.0
    %869 = vmatprep.subr.mxu0 0.0
    %870 = vmatpush1.msra.mxu0 0.0
    %871 = vmatprep.subr.mxu0 0.0
    %872 = vmatpush1.msra.mxu0 0.0
    %873 = vmatprep.subr.mxu0 0.0
    %874 = vmatpush1.msra.mxu0 0.0
    %875 = vmatprep.subr.mxu0 0.0
    %876 = vmatpush1.msra.mxu0 0.0
    %877 = vmatprep.subr.mxu0 0.0
    %878 = vmatpush1.msra.mxu0 0.0
    %879 = vmatprep.subr.mxu0 0.0
    %880 = vmatpush1.msra.mxu0 0.0
    %881 = vmatprep.subr.mxu0 0.0
    %882 = vmatpush1.msra.mxu0 0.0
    %883 = vmatprep.subr.mxu0 0.0
    %884 = vmatpush1.msra.mxu0 0.0
    %885 = vmatprep.mubr.f32.mxu0 0.0
    %886 = vmatmul.mubr.f32.gmra.mrb[0].mxu0 %v819
    %v887 = vpop.f32.mrb[0].mxu0
    %v888 = vadd.f32 0.0, %v887
    %v889 = vpop.f32.mrb[0].mxu0
    %890 = vdwg.mxu0
    %892 = vrot.lane.b32.xlu0 %v888, 16
    %v893 = vpop.permute.xlu0 %892
    %895 = vst.msk [vmem:[#allocation2 + $0x8] sm:$0xff] %vm551, %v893
    %v896 = vld [vmem:[#allocation2] sm:$0xff]
    %v897 = vld [vmem:[#allocation2 + $0x8] sm:$0xff]
    %v898 = vld [vmem:[%s6] sm:$0xff]
    %v899 = vld [vmem:[%s6 + $0x8] sm:$0xff]
    %v900 = vld [vmem:[%s6 + $0x10] sm:$0xff]
    %v901 = vld [vmem:[%s6 + $0x18] sm:$0xff]
    %v902 = vld [vmem:[%s7] sm:$0x1]
    %v904 = vlaneseq
    %v905 = vshrl.u32 %v904, 7
    %v906 = vsub.s32 0, %v905
    %v907 = vrot.slane %v902, %v906
    %v910 = vsel %vm70, %v896, 0
    %v913 = vsel %vm70, %v897, 0
    %915 = vmatprep.subr.mxu0 0.0
    %916 = vmatpush1.msra.mxu0 %v898
    %917 = vmatprep.subr.mxu0 0.0
    %918 = vmatpush1.msra.mxu0 %v899
    %919 = vmatprep.subr.mxu0 0.0
    %920 = vmatpush1.msra.mxu0 %v900
    %921 = vmatprep.subr.mxu0 0.0
    %922 = vmatpush1.msra.mxu0 %v901
    %923 = vmatprep.subr.mxu0 0.0
    %924 = vmatpush1.msra.mxu0 0.0
    %925 = vmatprep.subr.mxu0 0.0
    %926 = vmatpush1.msra.mxu0 0.0
    %927 = vmatprep.subr.mxu0 0.0
    %928 = vmatpush1.msra.mxu0 0.0
    %929 = vmatprep.subr.mxu0 0.0
    %930 = vmatpush1.msra.mxu0 0.0
    %931 = vmatprep.subr.mxu0 0.0
    %932 = vmatpush1.msra.mxu0 0.0
    %933 = vmatprep.subr.mxu0 0.0
    %934 = vmatpush1.msra.mxu0 0.0
    %935 = vmatprep.subr.mxu0 0.0
    %936 = vmatpush1.msra.mxu0 0.0
    %937 = vmatprep.subr.mxu0 0.0
    %938 = vmatpush1.msra.mxu0 0.0
    %939 = vmatprep.subr.mxu0 0.0
    %940 = vmatpush1.msra.mxu0 0.0
    %941 = vmatprep.subr.mxu0 0.0
    %942 = vmatpush1.msra.mxu0 0.0
    %943 = vmatprep.subr.mxu0 0.0
    %944 = vmatpush1.msra.mxu0 0.0
    %945 = vmatprep.subr.mxu0 0.0
    %946 = vmatpush1.msra.mxu0 0.0
    %947 = vmatprep.subr.mxu0 0.0
    %948 = vmatpush1.msra.mxu0 0.0
    %949 = vmatprep.subr.mxu0 0.0
    %950 = vmatpush1.msra.mxu0 0.0
    %951 = vmatprep.subr.mxu0 0.0
    %952 = vmatpush1.msra.mxu0 0.0
    %953 = vmatprep.subr.mxu0 0.0
    %954 = vmatpush1.msra.mxu0 0.0
    %955 = vmatprep.subr.mxu0 0.0
    %956 = vmatpush1.msra.mxu0 0.0
    %957 = vmatprep.subr.mxu0 0.0
    %958 = vmatpush1.msra.mxu0 0.0
    %959 = vmatprep.subr.mxu0 0.0
    %960 = vmatpush1.msra.mxu0 0.0
    %961 = vmatprep.subr.mxu0 0.0
    %962 = vmatpush1.msra.mxu0 0.0
    %963 = vmatprep.subr.mxu0 0.0
    %964 = vmatpush1.msra.mxu0 0.0
    %965 = vmatprep.subr.mxu0 0.0
    %966 = vmatpush1.msra.mxu0 0.0
    %967 = vmatprep.subr.mxu0 0.0
    %968 = vmatpush1.msra.mxu0 0.0
    %969 = vmatprep.subr.mxu0 0.0
    %970 = vmatpush1.msra.mxu0 0.0
    %971 = vmatprep.subr.mxu0 0.0
    %972 = vmatpush1.msra.mxu0 0.0
    %973 = vmatprep.subr.mxu0 0.0
    %974 = vmatpush1.msra.mxu0 0.0
    %975 = vmatprep.subr.mxu0 0.0
    %976 = vmatpush1.msra.mxu0 0.0
    %977 = vmatprep.subr.mxu0 0.0
    %978 = vmatpush1.msra.mxu0 0.0
    %979 = vmatprep.mubr.f32.mxu0 0.0
    %980 = vmatmul.mubr.f32.gmra.mrb[0].mxu0 %v910
    %v981 = vpop.f32.mrb[0].mxu0
    %v982 = vadd.f32 %v907, %v981
    %v983 = vpop.f32.mrb[0].mxu0
    %984 = vmatprep.mubr.f32.mxu0 0.0
    %985 = vmatmul.mubr.f32.gmra.mrb[0].mxu0 %v913
    %v986 = vpop.f32.mrb[0].mxu0
    %v987 = vadd.f32 %v907, %v986
    %v988 = vpop.f32.mrb[0].mxu0
    %989 = vdwg.mxu0
    %v990 = vadd.f32 %v982, %v112
    %v991 = vadd.f32 %v987, %v113
    %v992 = vld [vmem:[%s8] sm:$0x1]
    %v993 = vld [vmem:[%s9] sm:$0x1]
    %v994 = vsel %vm70, %v990, 0.0
    %995 = vadd.xlane.f32.xlu0 %v994
    %v996 = vpop.xlane.xlu0 %995
    %v997 = vsel %vm70, %v991, 0.0
    %998 = vadd.xlane.f32.xlu0 %v997
    %v999 = vpop.xlane.xlu0 %998
    %v1000 = vmul.f32 %v996, %v77
    %v1001 = vmul.f32 %v999, %v77
    %v1002 = vsub.f32 %v990, %v1000
    %v1003 = vsub.f32 %v991, %v1001
    %v1004 = vmul.f32 %v1002, %v1002
    %v1005 = vmul.f32 %v1003, %v1003
    %v1006 = vsel %vm70, %v1004, 0.0
    %1007 = vadd.xlane.f32.xlu0 %v1006
    %v1008 = vpop.xlane.xlu0 %1007
    %v1009 = vsel %vm70, %v1005, 0.0
    %1010 = vadd.xlane.f32.xlu0 %v1009
    %v1011 = vpop.xlane.xlu0 %1010
    %v1012 = vmul.f32 %v1008, %v77
    %v1013 = vmul.f32 %v1011, %v77
    %v1014 = vadd.f32 %v1012, 1e-12
    %v1015 = vadd.f32 %v1013, 1e-12
    %v1016 = vrsqrt.pop %v1014
    %v1017 = vrsqrt.pop %v1015
    %v1018 = vmul.f32 %v1002, %v1016
    %v1019 = vmul.f32 %v1003, %v1017
    %v1021 = vlaneseq
    %v1022 = vshrl.u32 %v1021, 7
    %v1023 = vsub.s32 0, %v1022
    %v1024 = vrot.slane %v992, %v1023
    %v1026 = vmul.f32 %v1018, %v1024
    %v1027 = vmul.f32 %v1019, %v1024
    %v1029 = vlaneseq
    %v1030 = vshrl.u32 %v1029, 7
    %v1031 = vsub.s32 0, %v1030
    %v1032 = vrot.slane %v993, %v1031
    %v1034 = vadd.f32 %v1026, %v1032
    %v1035 = vadd.f32 %v1027, %v1032
    %v1036 = vld [vmem:[%s10] sm:$0xff]
    %v1037 = vld [vmem:[%s10 + $0x8] sm:$0xff]
    %v1038 = vld [vmem:[%s10 + $0x10] sm:$0xff]
    %v1039 = vld [vmem:[%s10 + $0x18] sm:$0xff]
    %v1040 = vld [vmem:[%s11] sm:$0x1]
    %v1042 = vlaneseq
    %v1043 = vshrl.u32 %v1042, 7
    %v1044 = vsub.s32 0, %v1043
    %v1045 = vrot.slane %v1040, %v1044
    %v1048 = vsel %vm70, %v1034, 0
    %v1051 = vsel %vm70, %v1035, 0
    %1053 = vmatprep.subr.mxu0 0.0
    %1054 = vmatpush1.msra.mxu0 %v1036
    %1055 = vmatprep.subr.mxu0 0.0
    %1056 = vmatpush1.msra.mxu0 %v1037
    %1057 = vmatprep.subr.mxu0 0.0
    %1058 = vmatpush1.msra.mxu0 %v1038
    %1059 = vmatprep.subr.mxu0 0.0
    %1060 = vmatpush1.msra.mxu0 %v1039
    %1061 = vmatprep.subr.mxu0 0.0
    %1062 = vmatpush1.msra.mxu0 0.0
    %1063 = vmatprep.subr.mxu0 0.0
    %1064 = vmatpush1.msra.mxu0 0.0
    %1065 = vmatprep.subr.mxu0 0.0
    %1066 = vmatpush1.msra.mxu0 0.0
    %1067 = vmatprep.subr.mxu0 0.0
    %1068 = vmatpush1.msra.mxu0 0.0
    %1069 = vmatprep.subr.mxu0 0.0
    %1070 = vmatpush1.msra.mxu0 0.0
    %1071 = vmatprep.subr.mxu0 0.0
    %1072 = vmatpush1.msra.mxu0 0.0
    %1073 = vmatprep.subr.mxu0 0.0
    %1074 = vmatpush1.msra.mxu0 0.0
    %1075 = vmatprep.subr.mxu0 0.0
    %1076 = vmatpush1.msra.mxu0 0.0
    %1077 = vmatprep.subr.mxu0 0.0
    %1078 = vmatpush1.msra.mxu0 0.0
    %1079 = vmatprep.subr.mxu0 0.0
    %1080 = vmatpush1.msra.mxu0 0.0
    %1081 = vmatprep.subr.mxu0 0.0
    %1082 = vmatpush1.msra.mxu0 0.0
    %1083 = vmatprep.subr.mxu0 0.0
    %1084 = vmatpush1.msra.mxu0 0.0
    %1085 = vmatprep.subr.mxu0 0.0
    %1086 = vmatpush1.msra.mxu0 0.0
    %1087 = vmatprep.subr.mxu0 0.0
    %1088 = vmatpush1.msra.mxu0 0.0
    %1089 = vmatprep.subr.mxu0 0.0
    %1090 = vmatpush1.msra.mxu0 0.0
    %1091 = vmatprep.subr.mxu0 0.0
    %1092 = vmatpush1.msra.mxu0 0.0
    %1093 = vmatprep.subr.mxu0 0.0
    %1094 = vmatpush1.msra.mxu0 0.0
    %1095 = vmatprep.subr.mxu0 0.0
    %1096 = vmatpush1.msra.mxu0 0.0
    %1097 = vmatprep.subr.mxu0 0.0
    %1098 = vmatpush1.msra.mxu0 0.0
    %1099 = vmatprep.subr.mxu0 0.0
    %1100 = vmatpush1.msra.mxu0 0.0
    %1101 = vmatprep.subr.mxu0 0.0
    %1102 = vmatpush1.msra.mxu0 0.0
    %1103 = vmatprep.subr.mxu0 0.0
    %1104 = vmatpush1.msra.mxu0 0.0
    %1105 = vmatprep.subr.mxu0 0.0
    %1106 = vmatpush1.msra.mxu0 0.0
    %1107 = vmatprep.subr.mxu0 0.0
    %1108 = vmatpush1.msra.mxu0 0.0
    %1109 = vmatprep.subr.mxu0 0.0
    %1110 = vmatpush1.msra.mxu0 0.0
    %1111 = vmatprep.subr.mxu0 0.0
    %1112 = vmatpush1.msra.mxu0 0.0
    %1113 = vmatprep.subr.mxu0 0.0
    %1114 = vmatpush1.msra.mxu0 0.0
    %1115 = vmatprep.subr.mxu0 0.0
    %1116 = vmatpush1.msra.mxu0 0.0
    %1117 = vmatprep.mubr.f32.mxu0 0.0
    %1118 = vmatmul.mubr.f32.gmra.mrb[0].mxu0 %v1048
    %v1119 = vpop.f32.mrb[0].mxu0
    %v1120 = vadd.f32 %v1045, %v1119
    %v1121 = vpop.f32.mrb[0].mxu0
    %1122 = vmatprep.mubr.f32.mxu0 0.0
    %1123 = vmatmul.mubr.f32.gmra.mrb[0].mxu0 %v1051
    %v1124 = vpop.f32.mrb[0].mxu0
    %v1125 = vadd.f32 %v1045, %v1124
    %v1126 = vpop.f32.mrb[0].mxu0
    %1127 = vdwg.mxu0
    %v1128 = vmul.f32 %v1120, 0.5
    %v1129 = vmul.f32 %v1125, 0.5
    %v1130 = vmul.f32 %v1120, 0.70710677
    %v1131 = vmul.f32 %v1125, 0.70710677
    %v1132 = verf.f32.pop %v1130
    %v1133 = verf.f32.pop %v1131
    %v1134 = vadd.f32 %v1132, 1.0
    %v1135 = vadd.f32 %v1133, 1.0
    %v1136 = vmul.f32 %v1128, %v1134
    %v1137 = vmul.f32 %v1129, %v1135
    %v1138 = vld [vmem:[%s12] sm:$0xff]
    %v1139 = vld [vmem:[%s12 + $0x8] sm:$0xff]
    %v1140 = vld [vmem:[%s12 + $0x10] sm:$0xff]
    %v1141 = vld [vmem:[%s12 + $0x18] sm:$0xff]
    %v1142 = vld [vmem:[%s12 + $0x20] sm:$0xff]
    %v1143 = vld [vmem:[%s12 + $0x28] sm:$0xff]
    %v1144 = vld [vmem:[%s12 + $0x30] sm:$0xff]
    %v1145 = vld [vmem:[%s12 + $0x38] sm:$0xff]
    %v1146 = vld [vmem:[%s13] sm:$0x1]
    %v1148 = vlaneseq
    %v1149 = vshrl.u32 %v1148, 7
    %v1150 = vsub.s32 0, %v1149
    %v1151 = vrot.slane %v1146, %v1150
    %vm1153 = vcmask 523264
    %v1155 = vsel %vm1153, %v1136, 0
    %v1158 = vsel %vm1153, %v1137, 0
    %1160 = vmatprep.subr.mxu0 0.0
    %1161 = vmatpush1.msra.mxu0 %v1138
    %1162 = vmatprep.subr.mxu0 0.0
    %1163 = vmatpush1.msra.mxu0 %v1139
    %1164 = vmatprep.subr.mxu0 0.0
    %1165 = vmatpush1.msra.mxu0 %v1140
    %1166 = vmatprep.subr.mxu0 0.0
    %1167 = vmatpush1.msra.mxu0 %v1141
    %1168 = vmatprep.subr.mxu0 0.0
    %1169 = vmatpush1.msra.mxu0 %v1142
    %1170 = vmatprep.subr.mxu0 0.0
    %1171 = vmatpush1.msra.mxu0 %v1143
    %1172 = vmatprep.subr.mxu0 0.0
    %1173 = vmatpush1.msra.mxu0 %v1144
    %1174 = vmatprep.subr.mxu0 0.0
    %1175 = vmatpush1.msra.mxu0 %v1145
    %1176 = vmatprep.subr.mxu0 0.0
    %1177 = vmatpush1.msra.mxu0 0.0
    %1178 = vmatprep.subr.mxu0 0.0
    %1179 = vmatpush1.msra.mxu0 0.0
    %1180 = vmatprep.subr.mxu0 0.0
    %1181 = vmatpush1.msra.mxu0 0.0
    %1182 = vmatprep.subr.mxu0 0.0
    %1183 = vmatpush1.msra.mxu0 0.0
    %1184 = vmatprep.subr.mxu0 0.0
    %1185 = vmatpush1.msra.mxu0 0.0
    %1186 = vmatprep.subr.mxu0 0.0
    %1187 = vmatpush1.msra.mxu0 0.0
    %1188 = vmatprep.subr.mxu0 0.0
    %1189 = vmatpush1.msra.mxu0 0.0
    %1190 = vmatprep.subr.mxu0 0.0
    %1191 = vmatpush1.msra.mxu0 0.0
    %1192 = vmatprep.subr.mxu0 0.0
    %1193 = vmatpush1.msra.mxu0 0.0
    %1194 = vmatprep.subr.mxu0 0.0
    %1195 = vmatpush1.msra.mxu0 0.0
    %1196 = vmatprep.subr.mxu0 0.0
    %1197 = vmatpush1.msra.mxu0 0.0
    %1198 = vmatprep.subr.mxu0 0.0
    %1199 = vmatpush1.msra.mxu0 0.0
    %1200 = vmatprep.subr.mxu0 0.0
    %1201 = vmatpush1.msra.mxu0 0.0
    %1202 = vmatprep.subr.mxu0 0.0
    %1203 = vmatpush1.msra.mxu0 0.0
    %1204 = vmatprep.subr.mxu0 0.0
    %1205 = vmatpush1.msra.mxu0 0.0
    %1206 = vmatprep.subr.mxu0 0.0
    %1207 = vmatpush1.msra.mxu0 0.0
    %1208 = vmatprep.subr.mxu0 0.0
    %1209 = vmatpush1.msra.mxu0 0.0
    %1210 = vmatprep.subr.mxu0 0.0
    %1211 = vmatpush1.msra.mxu0 0.0
    %1212 = vmatprep.subr.mxu0 0.0
    %1213 = vmatpush1.msra.mxu0 0.0
    %1214 = vmatprep.subr.mxu0 0.0
    %1215 = vmatpush1.msra.mxu0 0.0
    %1216 = vmatprep.subr.mxu0 0.0
    %1217 = vmatpush1.msra.mxu0 0.0
    %1218 = vmatprep.subr.mxu0 0.0
    %1219 = vmatpush1.msra.mxu0 0.0
    %1220 = vmatprep.subr.mxu0 0.0
    %1221 = vmatpush1.msra.mxu0 0.0
    %1222 = vmatprep.subr.mxu0 0.0
    %1223 = vmatpush1.msra.mxu0 0.0
    %1224 = vmatprep.mubr.f32.mxu0 0.0
    %1225 = vmatmul.mubr.f32.gmra.mrb[0].mxu0 %v1155
    %v1226 = vpop.f32.mrb[0].mxu0
    %v1227 = vadd.f32 %v1151, %v1226
    %v1228 = vpop.f32.mrb[0].mxu0
    %1229 = vmatprep.mubr.f32.mxu0 0.0
    %1230 = vmatmul.mubr.f32.gmra.mrb[0].mxu0 %v1158
    %v1231 = vpop.f32.mrb[0].mxu0
    %v1232 = vadd.f32 %v1151, %v1231
    %v1233 = vpop.f32.mrb[0].mxu0
    %1234 = vdwg.mxu0
    %v1235 = vadd.f32 %v1227, %v1034
    %v1236 = vadd.f32 %v1232, %v1035
    %v1237 = vld [vmem:[%s14] sm:$0x1]
    %v1238 = vld [vmem:[%s15] sm:$0x1]
    %v1239 = vsel %vm70, %v1235, 0.0
    %1240 = vadd.xlane.f32.xlu0 %v1239
    %v1241 = vpop.xlane.xlu0 %1240
    %v1242 = vsel %vm70, %v1236, 0.0
    %1243 = vadd.xlane.f32.xlu0 %v1242
    %v1244 = vpop.xlane.xlu0 %1243
    %v1245 = vmul.f32 %v1241, %v77
    %v1246 = vmul.f32 %v1244, %v77
    %v1247 = vsub.f32 %v1235, %v1245
    %v1248 = vsub.f32 %v1236, %v1246
    %v1249 = vmul.f32 %v1247, %v1247
    %v1250 = vmul.f32 %v1248, %v1248
    %v1251 = vsel %vm70, %v1249, 0.0
    %1252 = vadd.xlane.f32.xlu0 %v1251
    %v1253 = vpop.xlane.xlu0 %1252
    %v1254 = vsel %vm70, %v1250, 0.0
    %1255 = vadd.xlane.f32.xlu0 %v1254
    %v1256 = vpop.xlane.xlu0 %1255
    %v1257 = vmul.f32 %v1253, %v77
    %v1258 = vmul.f32 %v1256, %v77
    %v1259 = vadd.f32 %v1257, 1e-12
    %v1260 = vadd.f32 %v1258, 1e-12
    %v1261 = vrsqrt.pop %v1259
    %v1262 = vrsqrt.pop %v1260
    %v1263 = vmul.f32 %v1247, %v1261
    %v1264 = vmul.f32 %v1248, %v1262
    %v1266 = vlaneseq
    %v1267 = vshrl.u32 %v1266, 7
    %v1268 = vsub.s32 0, %v1267
    %v1269 = vrot.slane %v1237, %v1268
    %v1271 = vmul.f32 %v1263, %v1269
    %v1272 = vmul.f32 %v1264, %v1269
    %v1274 = vlaneseq
    %v1275 = vshrl.u32 %v1274, 7
    %v1276 = vsub.s32 0, %v1275
    %v1277 = vrot.slane %v1238, %v1276
    %v1279 = vadd.f32 %v1271, %v1277
    %v1280 = vadd.f32 %v1272, %v1277
    %s1281 = scalar_lea.vmem %s4, 32
    %v1282 = vld [vmem:[%s1281] sm:$0xff]
    %v1283 = vld [vmem:[%s1281 + $0x8] sm:$0xff]
    %v1284 = vld [vmem:[%s1281 + $0x10] sm:$0xff]
    %v1285 = vld [vmem:[%s1281 + $0x18] sm:$0xff]
    %s1286 = scalar_lea.vmem %s5, 1
    %v1287 = vld [vmem:[%s1286] sm:$0x1]
    %v1289 = vlaneseq
    %v1290 = vshrl.u32 %v1289, 7
    %v1291 = vsub.s32 0, %v1290
    %v1292 = vrot.slane %v1287, %v1291
    %v1295 = vsel %vm70, %v1279, 0
    %v1298 = vsel %vm70, %v1280, 0
    %1300 = vmatprep.subr.mxu0 0.0
    %1301 = vmatpush1.msra.mxu0 %v1282
    %1302 = vmatprep.subr.mxu0 0.0
    %1303 = vmatpush1.msra.mxu0 %v1283
    %1304 = vmatprep.subr.mxu0 0.0
    %1305 = vmatpush1.msra.mxu0 %v1284
    %1306 = vmatprep.subr.mxu0 0.0
    %1307 = vmatpush1.msra.mxu0 %v1285
    %1308 = vmatprep.subr.mxu0 0.0
    %1309 = vmatpush1.msra.mxu0 0.0
    %1310 = vmatprep.subr.mxu0 0.0
    %1311 = vmatpush1.msra.mxu0 0.0
    %1312 = vmatprep.subr.mxu0 0.0
    %1313 = vmatpush1.msra.mxu0 0.0
    %1314 = vmatprep.subr.mxu0 0.0
    %1315 = vmatpush1.msra.mxu0 0.0
    %1316 = vmatprep.subr.mxu0 0.0
    %1317 = vmatpush1.msra.mxu0 0.0
    %1318 = vmatprep.subr.mxu0 0.0
    %1319 = vmatpush1.msra.mxu0 0.0
    %1320 = vmatprep.subr.mxu0 0.0
    %1321 = vmatpush1.msra.mxu0 0.0
    %1322 = vmatprep.subr.mxu0 0.0
    %1323 = vmatpush1.msra.mxu0 0.0
    %1324 = vmatprep.subr.mxu0 0.0
    %1325 = vmatpush1.msra.mxu0 0.0
    %1326 = vmatprep.subr.mxu0 0.0
    %1327 = vmatpush1.msra.mxu0 0.0
    %1328 = vmatprep.subr.mxu0 0.0
    %1329 = vmatpush1.msra.mxu0 0.0
    %1330 = vmatprep.subr.mxu0 0.0
    %1331 = vmatpush1.msra.mxu0 0.0
    %1332 = vmatprep.subr.mxu0 0.0
    %1333 = vmatpush1.msra.mxu0 0.0
    %1334 = vmatprep.subr.mxu0 0.0
    %1335 = vmatpush1.msra.mxu0 0.0
    %1336 = vmatprep.subr.mxu0 0.0
    %1337 = vmatpush1.msra.mxu0 0.0
    %1338 = vmatprep.subr.mxu0 0.0
    %1339 = vmatpush1.msra.mxu0 0.0
    %1340 = vmatprep.subr.mxu0 0.0
    %1341 = vmatpush1.msra.mxu0 0.0
    %1342 = vmatprep.subr.mxu0 0.0
    %1343 = vmatpush1.msra.mxu0 0.0
    %1344 = vmatprep.subr.mxu0 0.0
    %1345 = vmatpush1.msra.mxu0 0.0
    %1346 = vmatprep.subr.mxu0 0.0
    %1347 = vmatpush1.msra.mxu0 0.0
    %1348 = vmatprep.subr.mxu0 0.0
    %1349 = vmatpush1.msra.mxu0 0.0
    %1350 = vmatprep.subr.mxu0 0.0
    %1351 = vmatpush1.msra.mxu0 0.0
    %1352 = vmatprep.subr.mxu0 0.0
    %1353 = vmatpush1.msra.mxu0 0.0
    %1354 = vmatprep.subr.mxu0 0.0
    %1355 = vmatpush1.msra.mxu0 0.0
    %1356 = vmatprep.subr.mxu0 0.0
    %1357 = vmatpush1.msra.mxu0 0.0
    %1358 = vmatprep.subr.mxu0 0.0
    %1359 = vmatpush1.msra.mxu0 0.0
    %1360 = vmatprep.subr.mxu0 0.0
    %1361 = vmatpush1.msra.mxu0 0.0
    %1362 = vmatprep.subr.mxu0 0.0
    %1363 = vmatpush1.msra.mxu0 0.0
    %1364 = vmatprep.mubr.f32.mxu0 0.0
    %1365 = vmatmul.mubr.f32.gmra.mrb[0].mxu0 %v1295
    %v1366 = vpop.f32.mrb[0].mxu0
    %v1367 = vadd.f32 %v1292, %v1366
    %v1368 = vpop.f32.mrb[0].mxu0
    %1369 = vmatprep.mubr.f32.mxu0 0.0
    %1370 = vmatmul.mubr.f32.gmra.mrb[0].mxu0 %v1298
    %v1371 = vpop.f32.mrb[0].mxu0
    %v1372 = vadd.f32 %v1292, %v1371
    %v1373 = vpop.f32.mrb[0].mxu0
    %1374 = vdwg.mxu0
    %1376 = vrot.lane.b32.xlu0 %v1367, 96
    %v1377 = vpop.permute.xlu0 %1376
    %v1378 = vsel %vm210, %v1367, 0
    %v1380 = vsel %vm210, %v1377, 0
    %1382 = vmatprep.subr.mxu0 0.0
    %1383 = vmatpush1.xpose.msra.mxu0 %v1380
    %1384 = vmatprep.subr.mxu0 0.0
    %1385 = vmatpush1.xpose.msra.mxu0 0.0
    %1386 = vmatprep.subr.mxu0 0.0
    %1387 = vmatpush1.xpose.msra.mxu0 0.0
    %1388 = vmatprep.subr.mxu0 0.0
    %1389 = vmatpush1.xpose.msra.mxu0 0.0
    %1390 = vmatprep.subr.mxu0 0.0
    %1391 = vmatpush1.xpose.msra.mxu0 0.0
    %1392 = vmatprep.subr.mxu0 0.0
    %1393 = vmatpush1.xpose.msra.mxu0 0.0
    %1394 = vmatprep.subr.mxu0 0.0
    %1395 = vmatpush1.xpose.msra.mxu0 0.0
    %1396 = vmatprep.subr.mxu0 0.0
    %1397 = vmatpush1.xpose.msra.mxu0 0.0
    %1398 = vmatprep.subr.mxu0 0.0
    %1399 = vmatpush1.xpose.msra.mxu0 0.0
    %1400 = vmatprep.subr.mxu0 0.0
    %1401 = vmatpush1.xpose.msra.mxu0 0.0
    %1402 = vmatprep.subr.mxu0 0.0
    %1403 = vmatpush1.xpose.msra.mxu0 0.0
    %1404 = vmatprep.subr.mxu0 0.0
    %1405 = vmatpush1.xpose.msra.mxu0 0.0
    %1406 = vmatprep.subr.mxu0 0.0
    %1407 = vmatpush1.xpose.msra.mxu0 0.0
    %1408 = vmatprep.subr.mxu0 0.0
    %1409 = vmatpush1.xpose.msra.mxu0 0.0
    %1410 = vmatprep.subr.mxu0 0.0
    %1411 = vmatpush1.xpose.msra.mxu0 0.0
    %1412 = vmatprep.subr.mxu0 0.0
    %1413 = vmatpush1.xpose.msra.mxu0 0.0
    %1414 = vmatprep.subr.mxu0 0.0
    %1415 = vmatpush1.xpose.msra.mxu0 0.0
    %1416 = vmatprep.subr.mxu0 0.0
    %1417 = vmatpush1.xpose.msra.mxu0 0.0
    %1418 = vmatprep.subr.mxu0 0.0
    %1419 = vmatpush1.xpose.msra.mxu0 0.0
    %1420 = vmatprep.subr.mxu0 0.0
    %1421 = vmatpush1.xpose.msra.mxu0 0.0
    %1422 = vmatprep.subr.mxu0 0.0
    %1423 = vmatpush1.xpose.msra.mxu0 0.0
    %1424 = vmatprep.subr.mxu0 0.0
    %1425 = vmatpush1.xpose.msra.mxu0 0.0
    %1426 = vmatprep.subr.mxu0 0.0
    %1427 = vmatpush1.xpose.msra.mxu0 0.0
    %1428 = vmatprep.subr.mxu0 0.0
    %1429 = vmatpush1.xpose.msra.mxu0 0.0
    %1430 = vmatprep.subr.mxu0 0.0
    %1431 = vmatpush1.xpose.msra.mxu0 0.0
    %1432 = vmatprep.subr.mxu0 0.0
    %1433 = vmatpush1.xpose.msra.mxu0 0.0
    %1434 = vmatprep.subr.mxu0 0.0
    %1435 = vmatpush1.xpose.msra.mxu0 0.0
    %1436 = vmatprep.subr.mxu0 0.0
    %1437 = vmatpush1.xpose.msra.mxu0 0.0
    %1438 = vmatprep.subr.mxu0 0.0
    %1439 = vmatpush1.xpose.msra.mxu0 0.0
    %1440 = vmatprep.subr.mxu0 0.0
    %1441 = vmatpush1.xpose.msra.mxu0 0.0
    %1442 = vmatprep.subr.mxu0 0.0
    %1443 = vmatpush1.xpose.msra.mxu0 0.0
    %1444 = vmatprep.subr.mxu0 0.0
    %1445 = vmatpush1.xpose.msra.mxu0 0.0
    %1446 = vmatprep.mubr.f32.mxu0 0.0
    %1447 = vmatmul.mubr.f32.gmra.mrb[0].mxu0 %v1378
    %v1448 = vpop.f32.mrb[0].mxu0
    %v1449 = vadd.f32 0.0, %v1448
    %v1450 = vpop.f32.mrb[0].mxu0
    %1451 = vdwg.mxu0
    %v1452 = vmul.f32 %v1449, 0.25
    %v1453 = vadd.f32 %v1452, %v289
    %v1454 = vsel %vm291, %v1453, -inf
    %1455 = vmax.xlane.f32.xlu0 %v1454
    %v1456 = vpop.xlane.xlu0 %1455
    %v1457 = vsub.f32 %v1453, %v1456
    %v1458 = vmul.f32 %v1457, 1.442695
    %v1459 = vpow.pop %v1458
    %v1460 = vsel %vm291, %v1459, 0.0
    %1461 = vadd.xlane.f32.xlu0 %v1460
    %v1462 = vpop.xlane.xlu0 %1461
    %v1463 = vrcp.pop %v1462
    %v1464 = vmul.f32 %v1459, %v1463
    %1465 = vrot.lane.b32.xlu0 %v1367, 64
    %v1466 = vpop.permute.xlu0 %1465
    %v1469 = vsel %vm291, %v1464, 0
    %1471 = vmatprep.subr.mxu0 0.0
    %1472 = vmatpush1.msra.mxu0 %v1466
    %1473 = vmatprep.subr.mxu0 0.0
    %1474 = vmatpush1.msra.mxu0 0.0
    %1475 = vmatprep.subr.mxu0 0.0
    %1476 = vmatpush1.msra.mxu0 0.0
    %1477 = vmatprep.subr.mxu0 0.0
    %1478 = vmatpush1.msra.mxu0 0.0
    %1479 = vmatprep.subr.mxu0 0.0
    %1480 = vmatpush1.msra.mxu0 0.0
    %1481 = vmatprep.subr.mxu0 0.0
    %1482 = vmatpush1.msra.mxu0 0.0
    %1483 = vmatprep.subr.mxu0 0.0
    %1484 = vmatpush1.msra.mxu0 0.0
    %1485 = vmatprep.subr.mxu0 0.0
    %1486 = vmatpush1.msra.mxu0 0.0
    %1487 = vmatprep.subr.mxu0 0.0
    %1488 = vmatpush1.msra.mxu0 0.0
    %1489 = vmatprep.subr.mxu0 0.0
    %1490 = vmatpush1.msra.mxu0 0.0
    %1491 = vmatprep.subr.mxu0 0.0
    %1492 = vmatpush1.msra.mxu0 0.0
    %1493 = vmatprep.subr.mxu0 0.0
    %1494 = vmatpush1.msra.mxu0 0.0
    %1495 = vmatprep.subr.mxu0 0.0
    %1496 = vmatpush1.msra.mxu0 0.0
    %1497 = vmatprep.subr.mxu0 0.0
    %1498 = vmatpush1.msra.mxu0 0.0
    %1499 = vmatprep.subr.mxu0 0.0
    %1500 = vmatpush1.msra.mxu0 0.0
    %1501 = vmatprep.subr.mxu0 0.0
    %1502 = vmatpush1.msra.mxu0 0.0
    %1503 = vmatprep.subr.mxu0 0.0
    %1504 = vmatpush1.msra.mxu0 0.0
    %1505 = vmatprep.subr.mxu0 0.0
    %1506 = vmatpush1.msra.mxu0 0.0
    %1507 = vmatprep.subr.mxu0 0.0
    %1508 = vmatpush1.msra.mxu0 0.0
    %1509 = vmatprep.subr.mxu0 0.0
    %1510 = vmatpush1.msra.mxu0 0.0
    %1511 = vmatprep.subr.mxu0 0.0
    %1512 = vmatpush1.msra.mxu0 0.0
    %1513 = vmatprep.subr.mxu0 0.0
    %1514 = vmatpush1.msra.mxu0 0.0
    %1515 = vmatprep.subr.mxu0 0.0
    %1516 = vmatpush1.msra.mxu0 0.0
    %1517 = vmatprep.subr.mxu0 0.0
    %1518 = vmatpush1.msra.mxu0 0.0
    %1519 = vmatprep.subr.mxu0 0.0
    %1520 = vmatpush1.msra.mxu0 0.0
    %1521 = vmatprep.subr.mxu0 0.0
    %1522 = vmatpush1.msra.mxu0 0.0
    %1523 = vmatprep.subr.mxu0 0.0
    %1524 = vmatpush1.msra.mxu0 0.0
    %1525 = vmatprep.subr.mxu0 0.0
    %1526 = vmatpush1.msra.mxu0 0.0
    %1527 = vmatprep.subr.mxu0 0.0
    %1528 = vmatpush1.msra.mxu0 0.0
    %1529 = vmatprep.subr.mxu0 0.0
    %1530 = vmatpush1.msra.mxu0 0.0
    %1531 = vmatprep.subr.mxu0 0.0
    %1532 = vmatpush1.msra.mxu0 0.0
    %1533 = vmatprep.subr.mxu0 0.0
    %1534 = vmatpush1.msra.mxu0 0.0
    %1535 = vmatprep.mubr.f32.mxu0 0.0
    %1536 = vmatmul.mubr.f32.gmra.mrb[0].mxu0 %v1469
    %v1537 = vpop.f32.mrb[0].mxu0
    %v1538 = vadd.f32 0.0, %v1537
    %v1539 = vpop.f32.mrb[0].mxu0
    %1540 = vdwg.mxu0
    %1541 = vst.msk [vmem:[#allocation2] sm:$0xff] %vm210, %v1538
    %1542 = vrot.lane.b32.xlu0 %v1367, 112
    %v1543 = vpop.permute.xlu0 %1542
    %1544 = vrot.lane.b32.xlu0 %v1367, 80
    %v1545 = vpop.permute.xlu0 %1544
    %v1546 = vsel %vm210, %v1543, 0
    %v1548 = vsel %vm210, %v1545, 0
    %1550 = vmatprep.subr.mxu0 0.0
    %1551 = vmatpush1.xpose.msra.mxu0 %v1548
    %1552 = vmatprep.subr.mxu0 0.0
    %1553 = vmatpush1.xpose.msra.mxu0 0.0
    %1554 = vmatprep.subr.mxu0 0.0
    %1555 = vmatpush1.xpose.msra.mxu0 0.0
    %1556 = vmatprep.subr.mxu0 0.0
    %1557 = vmatpush1.xpose.msra.mxu0 0.0
    %1558 = vmatprep.subr.mxu0 0.0
    %1559 = vmatpush1.xpose.msra.mxu0 0.0
    %1560 = vmatprep.subr.mxu0 0.0
    %1561 = vmatpush1.xpose.msra.mxu0 0.0
    %1562 = vmatprep.subr.mxu0 0.0
    %1563 = vmatpush1.xpose.msra.mxu0 0.0
    %1564 = vmatprep.subr.mxu0 0.0
    %1565 = vmatpush1.xpose.msra.mxu0 0.0
    %1566 = vmatprep.subr.mxu0 0.0
    %1567 = vmatpush1.xpose.msra.mxu0 0.0
    %1568 = vmatprep.subr.mxu0 0.0
    %1569 = vmatpush1.xpose.msra.mxu0 0.0
    %1570 = vmatprep.subr.mxu0 0.0
    %1571 = vmatpush1.xpose.msra.mxu0 0.0
    %1572 = vmatprep.subr.mxu0 0.0
    %1573 = vmatpush1.xpose.msra.mxu0 0.0
    %1574 = vmatprep.subr.mxu0 0.0
    %1575 = vmatpush1.xpose.msra.mxu0 0.0
    %1576 = vmatprep.subr.mxu0 0.0
    %1577 = vmatpush1.xpose.msra.mxu0 0.0
    %1578 = vmatprep.subr.mxu0 0.0
    %1579 = vmatpush1.xpose.msra.mxu0 0.0
    %1580 = vmatprep.subr.mxu0 0.0
    %1581 = vmatpush1.xpose.msra.mxu0 0.0
    %1582 = vmatprep.subr.mxu0 0.0
    %1583 = vmatpush1.xpose.msra.mxu0 0.0
    %1584 = vmatprep.subr.mxu0 0.0
    %1585 = vmatpush1.xpose.msra.mxu0 0.0
    %1586 = vmatprep.subr.mxu0 0.0
    %1587 = vmatpush1.xpose.msra.mxu0 0.0
    %1588 = vmatprep.subr.mxu0 0.0
    %1589 = vmatpush1.xpose.msra.mxu0 0.0
    %1590 = vmatprep.subr.mxu0 0.0
    %1591 = vmatpush1.xpose.msra.mxu0 0.0
    %1592 = vmatprep.subr.mxu0 0.0
    %1593 = vmatpush1.xpose.msra.mxu0 0.0
    %1594 = vmatprep.subr.mxu0 0.0
    %1595 = vmatpush1.xpose.msra.mxu0 0.0
    %1596 = vmatprep.subr.mxu0 0.0
    %1597 = vmatpush1.xpose.msra.mxu0 0.0
    %1598 = vmatprep.subr.mxu0 0.0
    %1599 = vmatpush1.xpose.msra.mxu0 0.0
    %1600 = vmatprep.subr.mxu0 0.0
    %1601 = vmatpush1.xpose.msra.mxu0 0.0
    %1602 = vmatprep.subr.mxu0 0.0
    %1603 = vmatpush1.xpose.msra.mxu0 0.0
    %1604 = vmatprep.subr.mxu0 0.0
    %1605 = vmatpush1.xpose.msra.mxu0 0.0
    %1606 = vmatprep.subr.mxu0 0.0
    %1607 = vmatpush1.xpose.msra.mxu0 0.0
    %1608 = vmatprep.subr.mxu0 0.0
    %1609 = vmatpush1.xpose.msra.mxu0 0.0
    %1610 = vmatprep.subr.mxu0 0.0
    %1611 = vmatpush1.xpose.msra.mxu0 0.0
    %1612 = vmatprep.subr.mxu0 0.0
    %1613 = vmatpush1.xpose.msra.mxu0 0.0
    %1614 = vmatprep.mubr.f32.mxu0 0.0
    %1615 = vmatmul.mubr.f32.gmra.mrb[0].mxu0 %v1546
    %v1616 = vpop.f32.mrb[0].mxu0
    %v1617 = vadd.f32 0.0, %v1616
    %v1618 = vpop.f32.mrb[0].mxu0
    %1619 = vdwg.mxu0
    %v1620 = vmul.f32 %v1617, 0.25
    %v1621 = vadd.f32 %v1620, %v289
    %v1622 = vsel %vm291, %v1621, -inf
    %1623 = vmax.xlane.f32.xlu0 %v1622
    %v1624 = vpop.xlane.xlu0 %1623
    %v1625 = vsub.f32 %v1621, %v1624
    %v1626 = vmul.f32 %v1625, 1.442695
    %v1627 = vpow.pop %v1626
    %v1628 = vsel %vm291, %v1627, 0.0
    %1629 = vadd.xlane.f32.xlu0 %v1628
    %v1630 = vpop.xlane.xlu0 %1629
    %v1631 = vrcp.pop %v1630
    %v1632 = vmul.f32 %v1627, %v1631
    %1633 = vrot.lane.b32.xlu0 %v1367, 48
    %v1634 = vpop.permute.xlu0 %1633
    %v1637 = vsel %vm291, %v1632, 0
    %1639 = vmatprep.subr.mxu0 0.0
    %1640 = vmatpush1.msra.mxu0 %v1634
    %1641 = vmatprep.subr.mxu0 0.0
    %1642 = vmatpush1.msra.mxu0 0.0
    %1643 = vmatprep.subr.mxu0 0.0
    %1644 = vmatpush1.msra.mxu0 0.0
    %1645 = vmatprep.subr.mxu0 0.0
    %1646 = vmatpush1.msra.mxu0 0.0
    %1647 = vmatprep.subr.mxu0 0.0
    %1648 = vmatpush1.msra.mxu0 0.0
    %1649 = vmatprep.subr.mxu0 0.0
    %1650 = vmatpush1.msra.mxu0 0.0
    %1651 = vmatprep.subr.mxu0 0.0
    %1652 = vmatpush1.msra.mxu0 0.0
    %1653 = vmatprep.subr.mxu0 0.0
    %1654 = vmatpush1.msra.mxu0 0.0
    %1655 = vmatprep.subr.mxu0 0.0
    %1656 = vmatpush1.msra.mxu0 0.0
    %1657 = vmatprep.subr.mxu0 0.0
    %1658 = vmatpush1.msra.mxu0 0.0
    %1659 = vmatprep.subr.mxu0 0.0
    %1660 = vmatpush1.msra.mxu0 0.0
    %1661 = vmatprep.subr.mxu0 0.0
    %1662 = vmatpush1.msra.mxu0 0.0
    %1663 = vmatprep.subr.mxu0 0.0
    %1664 = vmatpush1.msra.mxu0 0.0
    %1665 = vmatprep.subr.mxu0 0.0
    %1666 = vmatpush1.msra.mxu0 0.0
    %1667 = vmatprep.subr.mxu0 0.0
    %1668 = vmatpush1.msra.mxu0 0.0
    %1669 = vmatprep.subr.mxu0 0.0
    %1670 = vmatpush1.msra.mxu0 0.0
    %1671 = vmatprep.subr.mxu0 0.0
    %1672 = vmatpush1.msra.mxu0 0.0
    %1673 = vmatprep.subr.mxu0 0.0
    %1674 = vmatpush1.msra.mxu0 0.0
    %1675 = vmatprep.subr.mxu0 0.0
    %1676 = vmatpush1.msra.mxu0 0.0
    %1677 = vmatprep.subr.mxu0 0.0
    %1678 = vmatpush1.msra.mxu0 0.0
    %1679 = vmatprep.subr.mxu0 0.0
    %1680 = vmatpush1.msra.mxu0 0.0
    %1681 = vmatprep.subr.mxu0 0.0
    %1682 = vmatpush1.msra.mxu0 0.0
    %1683 = vmatprep.subr.mxu0 0.0
    %1684 = vmatpush1.msra.mxu0 0.0
    %1685 = vmatprep.subr.mxu0 0.0
    %1686 = vmatpush1.msra.mxu0 0.0
    %1687 = vmatprep.subr.mxu0 0.0
    %1688 = vmatpush1.msra.mxu0 0.0
    %1689 = vmatprep.subr.mxu0 0.0
    %1690 = vmatpush1.msra.mxu0 0.0
    %1691 = vmatprep.subr.mxu0 0.0
    %1692 = vmatpush1.msra.mxu0 0.0
    %1693 = vmatprep.subr.mxu0 0.0
    %1694 = vmatpush1.msra.mxu0 0.0
    %1695 = vmatprep.subr.mxu0 0.0
    %1696 = vmatpush1.msra.mxu0 0.0
    %1697 = vmatprep.subr.mxu0 0.0
    %1698 = vmatpush1.msra.mxu0 0.0
    %1699 = vmatprep.subr.mxu0 0.0
    %1700 = vmatpush1.msra.mxu0 0.0
    %1701 = vmatprep.subr.mxu0 0.0
    %1702 = vmatpush1.msra.mxu0 0.0
    %1703 = vmatprep.mubr.f32.mxu0 0.0
    %1704 = vmatmul.mubr.f32.gmra.mrb[0].mxu0 %v1637
    %v1705 = vpop.f32.mrb[0].mxu0
    %v1706 = vadd.f32 0.0, %v1705
    %v1707 = vpop.f32.mrb[0].mxu0
    %1708 = vdwg.mxu0
    %1710 = vrot.lane.b32.xlu0 %v1706, 16
    %v1711 = vpop.permute.xlu0 %1710
    %1713 = vst.msk [vmem:[#allocation2] sm:$0xff] %vm551, %v1711
    %1715 = vrot.lane.b32.xlu0 %v1372, 96
    %v1716 = vpop.permute.xlu0 %1715
    %v1717 = vsel %vm210, %v1372, 0
    %v1719 = vsel %vm210, %v1716, 0
    %1721 = vmatprep.subr.mxu0 0.0
    %1722 = vmatpush1.xpose.msra.mxu0 %v1719
    %1723 = vmatprep.subr.mxu0 0.0
    %1724 = vmatpush1.xpose.msra.mxu0 0.0
    %1725 = vmatprep.subr.mxu0 0.0
    %1726 = vmatpush1.xpose.msra.mxu0 0.0
    %1727 = vmatprep.subr.mxu0 0.0
    %1728 = vmatpush1.xpose.msra.mxu0 0.0
    %1729 = vmatprep.subr.mxu0 0.0
    %1730 = vmatpush1.xpose.msra.mxu0 0.0
    %1731 = vmatprep.subr.mxu0 0.0
    %1732 = vmatpush1.xpose.msra.mxu0 0.0
    %1733 = vmatprep.subr.mxu0 0.0
    %1734 = vmatpush1.xpose.msra.mxu0 0.0
    %1735 = vmatprep.subr.mxu0 0.0
    %1736 = vmatpush1.xpose.msra.mxu0 0.0
    %1737 = vmatprep.subr.mxu0 0.0
    %1738 = vmatpush1.xpose.msra.mxu0 0.0
    %1739 = vmatprep.subr.mxu0 0.0
    %1740 = vmatpush1.xpose.msra.mxu0 0.0
    %1741 = vmatprep.subr.mxu0 0.0
    %1742 = vmatpush1.xpose.msra.mxu0 0.0
    %1743 = vmatprep.subr.mxu0 0.0
    %1744 = vmatpush1.xpose.msra.mxu0 0.0
    %1745 = vmatprep.subr.mxu0 0.0
    %1746 = vmatpush1.xpose.msra.mxu0 0.0
    %1747 = vmatprep.subr.mxu0 0.0
    %1748 = vmatpush1.xpose.msra.mxu0 0.0
    %1749 = vmatprep.subr.mxu0 0.0
    %1750 = vmatpush1.xpose.msra.mxu0 0.0
    %1751 = vmatprep.subr.mxu0 0.0
    %1752 = vmatpush1.xpose.msra.mxu0 0.0
    %1753 = vmatprep.subr.mxu0 0.0
    %1754 = vmatpush1.xpose.msra.mxu0 0.0
    %1755 = vmatprep.subr.mxu0 0.0
    %1756 = vmatpush1.xpose.msra.mxu0 0.0
    %1757 = vmatprep.subr.mxu0 0.0
    %1758 = vmatpush1.xpose.msra.mxu0 0.0
    %1759 = vmatprep.subr.mxu0 0.0
    %1760 = vmatpush1.xpose.msra.mxu0 0.0
    %1761 = vmatprep.subr.mxu0 0.0
    %1762 = vmatpush1.xpose.msra.mxu0 0.0
    %1763 = vmatprep.subr.mxu0 0.0
    %1764 = vmatpush1.xpose.msra.mxu0 0.0
    %1765 = vmatprep.subr.mxu0 0.0
    %1766 = vmatpush1.xpose.msra.mxu0 0.0
    %1767 = vmatprep.subr.mxu0 0.0
    %1768 = vmatpush1.xpose.msra.mxu0 0.0
    %1769 = vmatprep.subr.mxu0 0.0
    %1770 = vmatpush1.xpose.msra.mxu0 0.0
    %1771 = vmatprep.subr.mxu0 0.0
    %1772 = vmatpush1.xpose.msra.mxu0 0.0
    %1773 = vmatprep.subr.mxu0 0.0
    %1774 = vmatpush1.xpose.msra.mxu0 0.0
    %1775 = vmatprep.subr.mxu0 0.0
    %1776 = vmatpush1.xpose.msra.mxu0 0.0
    %1777 = vmatprep.subr.mxu0 0.0
    %1778 = vmatpush1.xpose.msra.mxu0 0.0
    %1779 = vmatprep.subr.mxu0 0.0
    %1780 = vmatpush1.xpose.msra.mxu0 0.0
    %1781 = vmatprep.subr.mxu0 0.0
    %1782 = vmatpush1.xpose.msra.mxu0 0.0
    %1783 = vmatprep.subr.mxu0 0.0
    %1784 = vmatpush1.xpose.msra.mxu0 0.0
    %1785 = vmatprep.mubr.f32.mxu0 0.0
    %1786 = vmatmul.mubr.f32.gmra.mrb[0].mxu0 %v1717
    %v1787 = vpop.f32.mrb[0].mxu0
    %v1788 = vadd.f32 0.0, %v1787
    %v1789 = vpop.f32.mrb[0].mxu0
    %1790 = vdwg.mxu0
    %v1791 = vmul.f32 %v1788, 0.25
    %v1792 = vadd.f32 %v1791, %v634
    %v1793 = vsel %vm291, %v1792, -inf
    %1794 = vmax.xlane.f32.xlu0 %v1793
    %v1795 = vpop.xlane.xlu0 %1794
    %v1796 = vsub.f32 %v1792, %v1795
    %v1797 = vmul.f32 %v1796, 1.442695
    %v1798 = vpow.pop %v1797
    %v1799 = vsel %vm291, %v1798, 0.0
    %1800 = vadd.xlane.f32.xlu0 %v1799
    %v1801 = vpop.xlane.xlu0 %1800
    %v1802 = vrcp.pop %v1801
    %v1803 = vmul.f32 %v1798, %v1802
    %1804 = vrot.lane.b32.xlu0 %v1372, 64
    %v1805 = vpop.permute.xlu0 %1804
    %v1808 = vsel %vm291, %v1803, 0
    %1810 = vmatprep.subr.mxu0 0.0
    %1811 = vmatpush1.msra.mxu0 %v1805
    %1812 = vmatprep.subr.mxu0 0.0
    %1813 = vmatpush1.msra.mxu0 0.0
    %1814 = vmatprep.subr.mxu0 0.0
    %1815 = vmatpush1.msra.mxu0 0.0
    %1816 = vmatprep.subr.mxu0 0.0
    %1817 = vmatpush1.msra.mxu0 0.0
    %1818 = vmatprep.subr.mxu0 0.0
    %1819 = vmatpush1.msra.mxu0 0.0
    %1820 = vmatprep.subr.mxu0 0.0
    %1821 = vmatpush1.msra.mxu0 0.0
    %1822 = vmatprep.subr.mxu0 0.0
    %1823 = vmatpush1.msra.mxu0 0.0
    %1824 = vmatprep.subr.mxu0 0.0
    %1825 = vmatpush1.msra.mxu0 0.0
    %1826 = vmatprep.subr.mxu0 0.0
    %1827 = vmatpush1.msra.mxu0 0.0
    %1828 = vmatprep.subr.mxu0 0.0
    %1829 = vmatpush1.msra.mxu0 0.0
    %1830 = vmatprep.subr.mxu0 0.0
    %1831 = vmatpush1.msra.mxu0 0.0
    %1832 = vmatprep.subr.mxu0 0.0
    %1833 = vmatpush1.msra.mxu0 0.0
    %1834 = vmatprep.subr.mxu0 0.0
    %1835 = vmatpush1.msra.mxu0 0.0
    %1836 = vmatprep.subr.mxu0 0.0
    %1837 = vmatpush1.msra.mxu0 0.0
    %1838 = vmatprep.subr.mxu0 0.0
    %1839 = vmatpush1.msra.mxu0 0.0
    %1840 = vmatprep.subr.mxu0 0.0
    %1841 = vmatpush1.msra.mxu0 0.0
    %1842 = vmatprep.subr.mxu0 0.0
    %1843 = vmatpush1.msra.mxu0 0.0
    %1844 = vmatprep.subr.mxu0 0.0
    %1845 = vmatpush1.msra.mxu0 0.0
    %1846 = vmatprep.subr.mxu0 0.0
    %1847 = vmatpush1.msra.mxu0 0.0
    %1848 = vmatprep.subr.mxu0 0.0
    %1849 = vmatpush1.msra.mxu0 0.0
    %1850 = vmatprep.subr.mxu0 0.0
    %1851 = vmatpush1.msra.mxu0 0.0
    %1852 = vmatprep.subr.mxu0 0.0
    %1853 = vmatpush1.msra.mxu0 0.0
    %1854 = vmatprep.subr.mxu0 0.0
    %1855 = vmatpush1.msra.mxu0 0.0
    %1856 = vmatprep.subr.mxu0 0.0
    %1857 = vmatpush1.msra.mxu0 0.0
    %1858 = vmatprep.subr.mxu0 0.0
    %1859 = vmatpush1.msra.mxu0 0.0
    %1860 = vmatprep.subr.mxu0 0.0
    %1861 = vmatpush1.msra.mxu0 0.0
    %1862 = vmatprep.subr.mxu0 0.0
    %1863 = vmatpush1.msra.mxu0 0.0
    %1864 = vmatprep.subr.mxu0 0.0
    %1865 = vmatpush1.msra.mxu0 0.0
    %1866 = vmatprep.subr.mxu0 0.0
    %1867 = vmatpush1.msra.mxu0 0.0
    %1868 = vmatprep.subr.mxu0 0.0
    %1869 = vmatpush1.msra.mxu0 0.0
    %1870 = vmatprep.subr.mxu0 0.0
    %1871 = vmatpush1.msra.mxu0 0.0
    %1872 = vmatprep.subr.mxu0 0.0
    %1873 = vmatpush1.msra.mxu0 0.0
    %1874 = vmatprep.mubr.f32.mxu0 0.0
    %1875 = vmatmul.mubr.f32.gmra.mrb[0].mxu0 %v1808
    %v1876 = vpop.f32.mrb[0].mxu0
    %v1877 = vadd.f32 0.0, %v1876
    %v1878 = vpop.f32.mrb[0].mxu0
    %1879 = vdwg.mxu0
    %1880 = vst.msk [vmem:[#allocation2 + $0x8] sm:$0xff] %vm210, %v1877
    %1881 = vrot.lane.b32.xlu0 %v1372, 112
    %v1882 = vpop.permute.xlu0 %1881
    %1883 = vrot.lane.b32.xlu0 %v1372, 80
    %v1884 = vpop.permute.xlu0 %1883
    %v1885 = vsel %vm210, %v1882, 0
    %v1887 = vsel %vm210, %v1884, 0
    %1889 = vmatprep.subr.mxu0 0.0
    %1890 = vmatpush1.xpose.msra.mxu0 %v1887
    %1891 = vmatprep.subr.mxu0 0.0
    %1892 = vmatpush1.xpose.msra.mxu0 0.0
    %1893 = vmatprep.subr.mxu0 0.0
    %1894 = vmatpush1.xpose.msra.mxu0 0.0
    %1895 = vmatprep.subr.mxu0 0.0
    %1896 = vmatpush1.xpose.msra.mxu0 0.0
    %1897 = vmatprep.subr.mxu0 0.0
    %1898 = vmatpush1.xpose.msra.mxu0 0.0
    %1899 = vmatprep.subr.mxu0 0.0
    %1900 = vmatpush1.xpose.msra.mxu0 0.0
    %1901 = vmatprep.subr.mxu0 0.0
    %1902 = vmatpush1.xpose.msra.mxu0 0.0
    %1903 = vmatprep.subr.mxu0 0.0
    %1904 = vmatpush1.xpose.msra.mxu0 0.0
    %1905 = vmatprep.subr.mxu0 0.0
    %1906 = vmatpush1.xpose.msra.mxu0 0.0
    %1907 = vmatprep.subr.mxu0 0.0
    %1908 = vmatpush1.xpose.msra.mxu0 0.0
    %1909 = vmatprep.subr.mxu0 0.0
    %1910 = vmatpush1.xpose.msra.mxu0 0.0
    %1911 = vmatprep.subr.mxu0 0.0
    %1912 = vmatpush1.xpose.msra.mxu0 0.0
    %1913 = vmatprep.subr.mxu0 0.0
    %1914 = vmatpush1.xpose.msra.mxu0 0.0
    %1915 = vmatprep.subr.mxu0 0.0
    %1916 = vmatpush1.xpose.msra.mxu0 0.0
    %1917 = vmatprep.subr.mxu0 0.0
    %1918 = vmatpush1.xpose.msra.mxu0 0.0
    %1919 = vmatprep.subr.mxu0 0.0
    %1920 = vmatpush1.xpose.msra.mxu0 0.0
    %1921 = vmatprep.subr.mxu0 0.0
    %1922 = vmatpush1.xpose.msra.mxu0 0.0
    %1923 = vmatprep.subr.mxu0 0.0
    %1924 = vmatpush1.xpose.msra.mxu0 0.0
    %1925 = vmatprep.subr.mxu0 0.0
    %1926 = vmatpush1.xpose.msra.mxu0 0.0
    %1927 = vmatprep.subr.mxu0 0.0
    %1928 = vmatpush1.xpose.msra.mxu0 0.0
    %1929 = vmatprep.subr.mxu0 0.0
    %1930 = vmatpush1.xpose.msra.mxu0 0.0
    %1931 = vmatprep.subr.mxu0 0.0
    %1932 = vmatpush1.xpose.msra.mxu0 0.0
    %1933 = vmatprep.subr.mxu0 0.0
    %1934 = vmatpush1.xpose.msra.mxu0 0.0
    %1935 = vmatprep.subr.mxu0 0.0
    %1936 = vmatpush1.xpose.msra.mxu0 0.0
    %1937 = vmatprep.subr.mxu0 0.0
    %1938 = vmatpush1.xpose.msra.mxu0 0.0
    %1939 = vmatprep.subr.mxu0 0.0
    %1940 = vmatpush1.xpose.msra.mxu0 0.0
    %1941 = vmatprep.subr.mxu0 0.0
    %1942 = vmatpush1.xpose.msra.mxu0 0.0
    %1943 = vmatprep.subr.mxu0 0.0
    %1944 = vmatpush1.xpose.msra.mxu0 0.0
    %1945 = vmatprep.subr.mxu0 0.0
    %1946 = vmatpush1.xpose.msra.mxu0 0.0
    %1947 = vmatprep.subr.mxu0 0.0
    %1948 = vmatpush1.xpose.msra.mxu0 0.0
    %1949 = vmatprep.subr.mxu0 0.0
    %1950 = vmatpush1.xpose.msra.mxu0 0.0
    %1951 = vmatprep.subr.mxu0 0.0
    %1952 = vmatpush1.xpose.msra.mxu0 0.0
    %1953 = vmatprep.mubr.f32.mxu0 0.0
    %1954 = vmatmul.mubr.f32.gmra.mrb[0].mxu0 %v1885
    %v1955 = vpop.f32.mrb[0].mxu0
    %v1956 = vadd.f32 0.0, %v1955
    %v1957 = vpop.f32.mrb[0].mxu0
    %1958 = vdwg.mxu0
    %v1959 = vmul.f32 %v1956, 0.25
    %v1960 = vadd.f32 %v1959, %v634
    %v1961 = vsel %vm291, %v1960, -inf
    %1962 = vmax.xlane.f32.xlu0 %v1961
    %v1963 = vpop.xlane.xlu0 %1962
    %v1964 = vsub.f32 %v1960, %v1963
    %v1965 = vmul.f32 %v1964, 1.442695
    %v1966 = vpow.pop %v1965
    %v1967 = vsel %vm291, %v1966, 0.0
    %1968 = vadd.xlane.f32.xlu0 %v1967
    %v1969 = vpop.xlane.xlu0 %1968
    %v1970 = vrcp.pop %v1969
    %v1971 = vmul.f32 %v1966, %v1970
    %1972 = vrot.lane.b32.xlu0 %v1372, 48
    %v1973 = vpop.permute.xlu0 %1972
    %v1976 = vsel %vm291, %v1971, 0
    %1978 = vmatprep.subr.mxu0 0.0
    %1979 = vmatpush1.msra.mxu0 %v1973
    %1980 = vmatprep.subr.mxu0 0.0
    %1981 = vmatpush1.msra.mxu0 0.0
    %1982 = vmatprep.subr.mxu0 0.0
    %1983 = vmatpush1.msra.mxu0 0.0
    %1984 = vmatprep.subr.mxu0 0.0
    %1985 = vmatpush1.msra.mxu0 0.0
    %1986 = vmatprep.subr.mxu0 0.0
    %1987 = vmatpush1.msra.mxu0 0.0
    %1988 = vmatprep.subr.mxu0 0.0
    %1989 = vmatpush1.msra.mxu0 0.0
    %1990 = vmatprep.subr.mxu0 0.0
    %1991 = vmatpush1.msra.mxu0 0.0
    %1992 = vmatprep.subr.mxu0 0.0
    %1993 = vmatpush1.msra.mxu0 0.0
    %1994 = vmatprep.subr.mxu0 0.0
    %1995 = vmatpush1.msra.mxu0 0.0
    %1996 = vmatprep.subr.mxu0 0.0
    %1997 = vmatpush1.msra.mxu0 0.0
    %1998 = vmatprep.subr.mxu0 0.0
    %1999 = vmatpush1.msra.mxu0 0.0
    %2000 = vmatprep.subr.mxu0 0.0
    %2001 = vmatpush1.msra.mxu0 0.0
    %2002 = vmatprep.subr.mxu0 0.0
    %2003 = vmatpush1.msra.mxu0 0.0
    %2004 = vmatprep.subr.mxu0 0.0
    %2005 = vmatpush1.msra.mxu0 0.0
    %2006 = vmatprep.subr.mxu0 0.0
    %2007 = vmatpush1.msra.mxu0 0.0
    %2008 = vmatprep.subr.mxu0 0.0
    %2009 = vmatpush1.msra.mxu0 0.0
    %2010 = vmatprep.subr.mxu0 0.0
    %2011 = vmatpush1.msra.mxu0 0.0
    %2012 = vmatprep.subr.mxu0 0.0
    %2013 = vmatpush1.msra.mxu0 0.0
    %2014 = vmatprep.subr.mxu0 0.0
    %2015 = vmatpush1.msra.mxu0 0.0
    %2016 = vmatprep.subr.mxu0 0.0
    %2017 = vmatpush1.msra.mxu0 0.0
    %2018 = vmatprep.subr.mxu0 0.0
    %2019 = vmatpush1.msra.mxu0 0.0
    %2020 = vmatprep.subr.mxu0 0.0
    %2021 = vmatpush1.msra.mxu0 0.0
    %2022 = vmatprep.subr.mxu0 0.0
    %2023 = vmatpush1.msra.mxu0 0.0
    %2024 = vmatprep.subr.mxu0 0.0
    %2025 = vmatpush1.msra.mxu0 0.0
    %2026 = vmatprep.subr.mxu0 0.0
    %2027 = vmatpush1.msra.mxu0 0.0
    %2028 = vmatprep.subr.mxu0 0.0
    %2029 = vmatpush1.msra.mxu0 0.0
    %2030 = vmatprep.subr.mxu0 0.0
    %2031 = vmatpush1.msra.mxu0 0.0
    %2032 = vmatprep.subr.mxu0 0.0
    %2033 = vmatpush1.msra.mxu0 0.0
    %2034 = vmatprep.subr.mxu0 0.0
    %2035 = vmatpush1.msra.mxu0 0.0
    %2036 = vmatprep.subr.mxu0 0.0
    %2037 = vmatpush1.msra.mxu0 0.0
    %2038 = vmatprep.subr.mxu0 0.0
    %2039 = vmatpush1.msra.mxu0 0.0
    %2040 = vmatprep.subr.mxu0 0.0
    %2041 = vmatpush1.msra.mxu0 0.0
    %2042 = vmatprep.mubr.f32.mxu0 0.0
    %2043 = vmatmul.mubr.f32.gmra.mrb[0].mxu0 %v1976
    %v2044 = vpop.f32.mrb[0].mxu0
    %v2045 = vadd.f32 0.0, %v2044
    %v2046 = vpop.f32.mrb[0].mxu0
    %2047 = vdwg.mxu0
    %2049 = vrot.lane.b32.xlu0 %v2045, 16
    %v2050 = vpop.permute.xlu0 %2049
    %2052 = vst.msk [vmem:[#allocation2 + $0x8] sm:$0xff] %vm551, %v2050
    %v2053 = vld [vmem:[#allocation2] sm:$0xff]
    %v2054 = vld [vmem:[#allocation2 + $0x8] sm:$0xff]
    %s2055 = scalar_lea.vmem %s6, 32
    %v2056 = vld [vmem:[%s2055] sm:$0xff]
    %v2057 = vld [vmem:[%s2055 + $0x8] sm:$0xff]
    %v2058 = vld [vmem:[%s2055 + $0x10] sm:$0xff]
    %v2059 = vld [vmem:[%s2055 + $0x18] sm:$0xff]
    %s2060 = scalar_lea.vmem %s7, 1
    %v2061 = vld [vmem:[%s2060] sm:$0x1]
    %v2063 = vlaneseq
    %v2064 = vshrl.u32 %v2063, 7
    %v2065 = vsub.s32 0, %v2064
    %v2066 = vrot.slane %v2061, %v2065
    %v2069 = vsel %vm70, %v2053, 0
    %v2072 = vsel %vm70, %v2054, 0
    %2074 = vmatprep.subr.mxu0 0.0
    %2075 = vmatpush1.msra.mxu0 %v2056
    %2076 = vmatprep.subr.mxu0 0.0
    %2077 = vmatpush1.msra.mxu0 %v2057
    %2078 = vmatprep.subr.mxu0 0.0
    %2079 = vmatpush1.msra.mxu0 %v2058
    %2080 = vmatprep.subr.mxu0 0.0
    %2081 = vmatpush1.msra.mxu0 %v2059
    %2082 = vmatprep.subr.mxu0 0.0
    %2083 = vmatpush1.msra.mxu0 0.0
    %2084 = vmatprep.subr.mxu0 0.0
    %2085 = vmatpush1.msra.mxu0 0.0
    %2086 = vmatprep.subr.mxu0 0.0
    %2087 = vmatpush1.msra.mxu0 0.0
    %2088 = vmatprep.subr.mxu0 0.0
    %2089 = vmatpush1.msra.mxu0 0.0
    %2090 = vmatprep.subr.mxu0 0.0
    %2091 = vmatpush1.msra.mxu0 0.0
    %2092 = vmatprep.subr.mxu0 0.0
    %2093 = vmatpush1.msra.mxu0 0.0
    %2094 = vmatprep.subr.mxu0 0.0
    %2095 = vmatpush1.msra.mxu0 0.0
    %2096 = vmatprep.subr.mxu0 0.0
    %2097 = vmatpush1.msra.mxu0 0.0
    %2098 = vmatprep.subr.mxu0 0.0
    %2099 = vmatpush1.msra.mxu0 0.0
    %2100 = vmatprep.subr.mxu0 0.0
    %2101 = vmatpush1.msra.mxu0 0.0
    %2102 = vmatprep.subr.mxu0 0.0
    %2103 = vmatpush1.msra.mxu0 0.0
    %2104 = vmatprep.subr.mxu0 0.0
    %2105 = vmatpush1.msra.mxu0 0.0
    %2106 = vmatprep.subr.mxu0 0.0
    %2107 = vmatpush1.msra.mxu0 0.0
    %2108 = vmatprep.subr.mxu0 0.0
    %2109 = vmatpush1.msra.mxu0 0.0
    %2110 = vmatprep.subr.mxu0 0.0
    %2111 = vmatpush1.msra.mxu0 0.0
    %2112 = vmatprep.subr.mxu0 0.0
    %2113 = vmatpush1.msra.mxu0 0.0
    %2114 = vmatprep.subr.mxu0 0.0
    %2115 = vmatpush1.msra.mxu0 0.0
    %2116 = vmatprep.subr.mxu0 0.0
    %2117 = vmatpush1.msra.mxu0 0.0
    %2118 = vmatprep.subr.mxu0 0.0
    %2119 = vmatpush1.msra.mxu0 0.0
    %2120 = vmatprep.subr.mxu0 0.0
    %2121 = vmatpush1.msra.mxu0 0.0
    %2122 = vmatprep.subr.mxu0 0.0
    %2123 = vmatpush1.msra.mxu0 0.0
    %2124 = vmatprep.subr.mxu0 0.0
    %2125 = vmatpush1.msra.mxu0 0.0
    %2126 = vmatprep.subr.mxu0 0.0
    %2127 = vmatpush1.msra.mxu0 0.0
    %2128 = vmatprep.subr.mxu0 0.0
    %2129 = vmatpush1.msra.mxu0 0.0
    %2130 = vmatprep.subr.mxu0 0.0
    %2131 = vmatpush1.msra.mxu0 0.0
    %2132 = vmatprep.subr.mxu0 0.0
    %2133 = vmatpush1.msra.mxu0 0.0
    %2134 = vmatprep.subr.mxu0 0.0
    %2135 = vmatpush1.msra.mxu0 0.0
    %2136 = vmatprep.subr.mxu0 0.0
    %2137 = vmatpush1.msra.mxu0 0.0
    %2138 = vmatprep.mubr.f32.mxu0 0.0
    %2139 = vmatmul.mubr.f32.gmra.mrb[0].mxu0 %v2069
    %v2140 = vpop.f32.mrb[0].mxu0
    %v2141 = vadd.f32 %v2066, %v2140
    %v2142 = vpop.f32.mrb[0].mxu0
    %2143 = vmatprep.mubr.f32.mxu0 0.0
    %2144 = vmatmul.mubr.f32.gmra.mrb[0].mxu0 %v2072
    %v2145 = vpop.f32.mrb[0].mxu0
    %v2146 = vadd.f32 %v2066, %v2145
    %v2147 = vpop.f32.mrb[0].mxu0
    %2148 = vdwg.mxu0
    %v2149 = vadd.f32 %v2141, %v1279
    %v2150 = vadd.f32 %v2146, %v1280
    %s2151 = scalar_lea.vmem %s8, 1
    %v2152 = vld [vmem:[%s2151] sm:$0x1]
    %s2153 = scalar_lea.vmem %s9, 1
    %v2154 = vld [vmem:[%s2153] sm:$0x1]
    %v2155 = vsel %vm70, %v2149, 0.0
    %2156 = vadd.xlane.f32.xlu0 %v2155
    %v2157 = vpop.xlane.xlu0 %2156
    %v2158 = vsel %vm70, %v2150, 0.0
    %2159 = vadd.xlane.f32.xlu0 %v2158
    %v2160 = vpop.xlane.xlu0 %2159
    %v2161 = vmul.f32 %v2157, %v77
    %v2162 = vmul.f32 %v2160, %v77
    %v2163 = vsub.f32 %v2149, %v2161
    %v2164 = vsub.f32 %v2150, %v2162
    %v2165 = vmul.f32 %v2163, %v2163
    %v2166 = vmul.f32 %v2164, %v2164
    %v2167 = vsel %vm70, %v2165, 0.0
    %2168 = vadd.xlane.f32.xlu0 %v2167
    %v2169 = vpop.xlane.xlu0 %2168
    %v2170 = vsel %vm70, %v2166, 0.0
    %2171 = vadd.xlane.f32.xlu0 %v2170
    %v2172 = vpop.xlane.xlu0 %2171
    %v2173 = vmul.f32 %v2169, %v77
    %v2174 = vmul.f32 %v2172, %v77
    %v2175 = vadd.f32 %v2173, 1e-12
    %v2176 = vadd.f32 %v2174, 1e-12
    %v2177 = vrsqrt.pop %v2175
    %v2178 = vrsqrt.pop %v2176
    %v2179 = vmul.f32 %v2163, %v2177
    %v2180 = vmul.f32 %v2164, %v2178
    %v2182 = vlaneseq
    %v2183 = vshrl.u32 %v2182, 7
    %v2184 = vsub.s32 0, %v2183
    %v2185 = vrot.slane %v2152, %v2184
    %v2187 = vmul.f32 %v2179, %v2185
    %v2188 = vmul.f32 %v2180, %v2185
    %v2190 = vlaneseq
    %v2191 = vshrl.u32 %v2190, 7
    %v2192 = vsub.s32 0, %v2191
    %v2193 = vrot.slane %v2154, %v2192
    %v2195 = vadd.f32 %v2187, %v2193
    %v2196 = vadd.f32 %v2188, %v2193
    %s2197 = scalar_lea.vmem %s10, 32
    %v2198 = vld [vmem:[%s2197] sm:$0xff]
    %v2199 = vld [vmem:[%s2197 + $0x8] sm:$0xff]
    %v2200 = vld [vmem:[%s2197 + $0x10] sm:$0xff]
    %v2201 = vld [vmem:[%s2197 + $0x18] sm:$0xff]
    %s2202 = scalar_lea.vmem %s11, 1
    %v2203 = vld [vmem:[%s2202] sm:$0x1]
    %v2205 = vlaneseq
    %v2206 = vshrl.u32 %v2205, 7
    %v2207 = vsub.s32 0, %v2206
    %v2208 = vrot.slane %v2203, %v2207
    %v2211 = vsel %vm70, %v2195, 0
    %v2214 = vsel %vm70, %v2196, 0
    %2216 = vmatprep.subr.mxu0 0.0
    %2217 = vmatpush1.msra.mxu0 %v2198
    %2218 = vmatprep.subr.mxu0 0.0
    %2219 = vmatpush1.msra.mxu0 %v2199
    %2220 = vmatprep.subr.mxu0 0.0
    %2221 = vmatpush1.msra.mxu0 %v2200
    %2222 = vmatprep.subr.mxu0 0.0
    %2223 = vmatpush1.msra.mxu0 %v2201
    %2224 = vmatprep.subr.mxu0 0.0
    %2225 = vmatpush1.msra.mxu0 0.0
    %2226 = vmatprep.subr.mxu0 0.0
    %2227 = vmatpush1.msra.mxu0 0.0
    %2228 = vmatprep.subr.mxu0 0.0
    %2229 = vmatpush1.msra.mxu0 0.0
    %2230 = vmatprep.subr.mxu0 0.0
    %2231 = vmatpush1.msra.mxu0 0.0
    %2232 = vmatprep.subr.mxu0 0.0
    %2233 = vmatpush1.msra.mxu0 0.0
    %2234 = vmatprep.subr.mxu0 0.0
    %2235 = vmatpush1.msra.mxu0 0.0
    %2236 = vmatprep.subr.mxu0 0.0
    %2237 = vmatpush1.msra.mxu0 0.0
    %2238 = vmatprep.subr.mxu0 0.0
    %2239 = vmatpush1.msra.mxu0 0.0
    %2240 = vmatprep.subr.mxu0 0.0
    %2241 = vmatpush1.msra.mxu0 0.0
    %2242 = vmatprep.subr.mxu0 0.0
    %2243 = vmatpush1.msra.mxu0 0.0
    %2244 = vmatprep.subr.mxu0 0.0
    %2245 = vmatpush1.msra.mxu0 0.0
    %2246 = vmatprep.subr.mxu0 0.0
    %2247 = vmatpush1.msra.mxu0 0.0
    %2248 = vmatprep.subr.mxu0 0.0
    %2249 = vmatpush1.msra.mxu0 0.0
    %2250 = vmatprep.subr.mxu0 0.0
    %2251 = vmatpush1.msra.mxu0 0.0
    %2252 = vmatprep.subr.mxu0 0.0
    %2253 = vmatpush1.msra.mxu0 0.0
    %2254 = vmatprep.subr.mxu0 0.0
    %2255 = vmatpush1.msra.mxu0 0.0
    %2256 = vmatprep.subr.mxu0 0.0
    %2257 = vmatpush1.msra.mxu0 0.0
    %2258 = vmatprep.subr.mxu0 0.0
    %2259 = vmatpush1.msra.mxu0 0.0
    %2260 = vmatprep.subr.mxu0 0.0
    %2261 = vmatpush1.msra.mxu0 0.0
    %2262 = vmatprep.subr.mxu0 0.0
    %2263 = vmatpush1.msra.mxu0 0.0
    %2264 = vmatprep.subr.mxu0 0.0
    %2265 = vmatpush1.msra.mxu0 0.0
    %2266 = vmatprep.subr.mxu0 0.0
    %2267 = vmatpush1.msra.mxu0 0.0
    %2268 = vmatprep.subr.mxu0 0.0
    %2269 = vmatpush1.msra.mxu0 0.0
    %2270 = vmatprep.subr.mxu0 0.0
    %2271 = vmatpush1.msra.mxu0 0.0
    %2272 = vmatprep.subr.mxu0 0.0
    %2273 = vmatpush1.msra.mxu0 0.0
    %2274 = vmatprep.subr.mxu0 0.0
    %2275 = vmatpush1.msra.mxu0 0.0
    %2276 = vmatprep.subr.mxu0 0.0
    %2277 = vmatpush1.msra.mxu0 0.0
    %2278 = vmatprep.subr.mxu0 0.0
    %2279 = vmatpush1.msra.mxu0 0.0
    %2280 = vmatprep.mubr.f32.mxu0 0.0
    %2281 = vmatmul.mubr.f32.gmra.mrb[0].mxu0 %v2211
    %v2282 = vpop.f32.mrb[0].mxu0
    %v2283 = vadd.f32 %v2208, %v2282
    %v2284 = vpop.f32.mrb[0].mxu0
    %2285 = vmatprep.mubr.f32.mxu0 0.0
    %2286 = vmatmul.mubr.f32.gmra.mrb[0].mxu0 %v2214
    %v2287 = vpop.f32.mrb[0].mxu0
    %v2288 = vadd.f32 %v2208, %v2287
    %v2289 = vpop.f32.mrb[0].mxu0
    %2290 = vdwg.mxu0
    %v2291 = vmul.f32 %v2283, 0.5
    %v2292 = vmul.f32 %v2288, 0.5
    %v2293 = vmul.f32 %v2283, 0.70710677
    %v2294 = vmul.f32 %v2288, 0.70710677
    %v2295 = verf.f32.pop %v2293
    %v2296 = verf.f32.pop %v2294
    %v2297 = vadd.f32 %v2295, 1.0
    %v2298 = vadd.f32 %v2296, 1.0
    %v2299 = vmul.f32 %v2291, %v2297
    %v2300 = vmul.f32 %v2292, %v2298
    %s2301 = scalar_lea.vmem %s12, 64
    %v2302 = vld [vmem:[%s2301] sm:$0xff]
    %v2303 = vld [vmem:[%s2301 + $0x8] sm:$0xff]
    %v2304 = vld [vmem:[%s2301 + $0x10] sm:$0xff]
    %v2305 = vld [vmem:[%s2301 + $0x18] sm:$0xff]
    %v2306 = vld [vmem:[%s2301 + $0x20] sm:$0xff]
    %v2307 = vld [vmem:[%s2301 + $0x28] sm:$0xff]
    %v2308 = vld [vmem:[%s2301 + $0x30] sm:$0xff]
    %v2309 = vld [vmem:[%s2301 + $0x38] sm:$0xff]
    %s2310 = scalar_lea.vmem %s13, 1
    %v2311 = vld [vmem:[%s2310] sm:$0x1]
    %v2313 = vlaneseq
    %v2314 = vshrl.u32 %v2313, 7
    %v2315 = vsub.s32 0, %v2314
    %v2316 = vrot.slane %v2311, %v2315
    %v2319 = vsel %vm1153, %v2299, 0
    %v2322 = vsel %vm1153, %v2300, 0
    %2324 = vmatprep.subr.mxu0 0.0
    %2325 = vmatpush1.msra.mxu0 %v2302
    %2326 = vmatprep.subr.mxu0 0.0
    %2327 = vmatpush1.msra.mxu0 %v2303
    %2328 = vmatprep.subr.mxu0 0.0
    %2329 = vmatpush1.msra.mxu0 %v2304
    %2330 = vmatprep.subr.mxu0 0.0
    %2331 = vmatpush1.msra.mxu0 %v2305
    %2332 = vmatprep.subr.mxu0 0.0
    %2333 = vmatpush1.msra.mxu0 %v2306
    %2334 = vmatprep.subr.mxu0 0.0
    %2335 = vmatpush1.msra.mxu0 %v2307
    %2336 = vmatprep.subr.mxu0 0.0
    %2337 = vmatpush1.msra.mxu0 %v2308
    %2338 = vmatprep.subr.mxu0 0.0
    %2339 = vmatpush1.msra.mxu0 %v2309
    %2340 = vmatprep.subr.mxu0 0.0
    %2341 = vmatpush1.msra.mxu0 0.0
    %2342 = vmatprep.subr.mxu0 0.0
    %2343 = vmatpush1.msra.mxu0 0.0
    %2344 = vmatprep.subr.mxu0 0.0
    %2345 = vmatpush1.msra.mxu0 0.0
    %2346 = vmatprep.subr.mxu0 0.0
    %2347 = vmatpush1.msra.mxu0 0.0
    %2348 = vmatprep.subr.mxu0 0.0
    %2349 = vmatpush1.msra.mxu0 0.0
    %2350 = vmatprep.subr.mxu0 0.0
    %2351 = vmatpush1.msra.mxu0 0.0
    %2352 = vmatprep.subr.mxu0 0.0
    %2353 = vmatpush1.msra.mxu0 0.0
    %2354 = vmatprep.subr.mxu0 0.0
    %2355 = vmatpush1.msra.mxu0 0.0
    %2356 = vmatprep.subr.mxu0 0.0
    %2357 = vmatpush1.msra.mxu0 0.0
    %2358 = vmatprep.subr.mxu0 0.0
    %2359 = vmatpush1.msra.mxu0 0.0
    %2360 = vmatprep.subr.mxu0 0.0
    %2361 = vmatpush1.msra.mxu0 0.0
    %2362 = vmatprep.subr.mxu0 0.0
    %2363 = vmatpush1.msra.mxu0 0.0
    %2364 = vmatprep.subr.mxu0 0.0
    %2365 = vmatpush1.msra.mxu0 0.0
    %2366 = vmatprep.subr.mxu0 0.0
    %2367 = vmatpush1.msra.mxu0 0.0
    %2368 = vmatprep.subr.mxu0 0.0
    %2369 = vmatpush1.msra.mxu0 0.0
    %2370 = vmatprep.subr.mxu0 0.0
    %2371 = vmatpush1.msra.mxu0 0.0
    %2372 = vmatprep.subr.mxu0 0.0
    %2373 = vmatpush1.msra.mxu0 0.0
    %2374 = vmatprep.subr.mxu0 0.0
    %2375 = vmatpush1.msra.mxu0 0.0
    %2376 = vmatprep.subr.mxu0 0.0
    %2377 = vmatpush1.msra.mxu0 0.0
    %2378 = vmatprep.subr.mxu0 0.0
    %2379 = vmatpush1.msra.mxu0 0.0
    %2380 = vmatprep.subr.mxu0 0.0
    %2381 = vmatpush1.msra.mxu0 0.0
    %2382 = vmatprep.subr.mxu0 0.0
    %2383 = vmatpush1.msra.mxu0 0.0
    %2384 = vmatprep.subr.mxu0 0.0
    %2385 = vmatpush1.msra.mxu0 0.0
    %2386 = vmatprep.subr.mxu0 0.0
    %2387 = vmatpush1.msra.mxu0 0.0
    %2388 = vmatprep.mubr.f32.mxu0 0.0
    %2389 = vmatmul.mubr.f32.gmra.mrb[0].mxu0 %v2319
    %v2390 = vpop.f32.mrb[0].mxu0
    %v2391 = vadd.f32 %v2316, %v2390
    %v2392 = vpop.f32.mrb[0].mxu0
    %2393 = vmatprep.mubr.f32.mxu0 0.0
    %2394 = vmatmul.mubr.f32.gmra.mrb[0].mxu0 %v2322
    %v2395 = vpop.f32.mrb[0].mxu0
    %v2396 = vadd.f32 %v2316, %v2395
    %v2397 = vpop.f32.mrb[0].mxu0
    %2398 = vdwg.mxu0
    %v2399 = vadd.f32 %v2391, %v2195
    %v2400 = vadd.f32 %v2396, %v2196
    %s2401 = scalar_lea.vmem %s14, 1
    %v2402 = vld [vmem:[%s2401] sm:$0x1]
    %s2403 = scalar_lea.vmem %s15, 1
    %v2404 = vld [vmem:[%s2403] sm:$0x1]
    %v2405 = vsel %vm70, %v2399, 0.0
    %2406 = vadd.xlane.f32.xlu0 %v2405
    %v2407 = vpop.xlane.xlu0 %2406
    %v2408 = vsel %vm70, %v2400, 0.0
    %2409 = vadd.xlane.f32.xlu0 %v2408
    %v2410 = vpop.xlane.xlu0 %2409
    %v2411 = vmul.f32 %v2407, %v77
    %v2412 = vmul.f32 %v2410, %v77
    %v2413 = vsub.f32 %v2399, %v2411
    %v2414 = vsub.f32 %v2400, %v2412
    %v2415 = vmul.f32 %v2413, %v2413
    %v2416 = vmul.f32 %v2414, %v2414
    %v2417 = vsel %vm70, %v2415, 0.0
    %2418 = vadd.xlane.f32.xlu0 %v2417
    %v2419 = vpop.xlane.xlu0 %2418
    %v2420 = vsel %vm70, %v2416, 0.0
    %2421 = vadd.xlane.f32.xlu0 %v2420
    %v2422 = vpop.xlane.xlu0 %2421
    %v2423 = vmul.f32 %v2419, %v77
    %v2424 = vmul.f32 %v2422, %v77
    %v2425 = vadd.f32 %v2423, 1e-12
    %v2426 = vadd.f32 %v2424, 1e-12
    %v2427 = vrsqrt.pop %v2425
    %v2428 = vrsqrt.pop %v2426
    %v2429 = vmul.f32 %v2413, %v2427
    %v2430 = vmul.f32 %v2414, %v2428
    %v2432 = vlaneseq
    %v2433 = vshrl.u32 %v2432, 7
    %v2434 = vsub.s32 0, %v2433
    %v2435 = vrot.slane %v2402, %v2434
    %v2437 = vmul.f32 %v2429, %v2435
    %v2438 = vmul.f32 %v2430, %v2435
    %v2440 = vlaneseq
    %v2441 = vshrl.u32 %v2440, 7
    %v2442 = vsub.s32 0, %v2441
    %v2443 = vrot.slane %v2404, %v2442
    %v2445 = vadd.f32 %v2437, %v2443
    %v2446 = vadd.f32 %v2438, %v2443
    %v2448 = vrot.slane %v2446, 7
    %vm2450 = vcmask 1040384
    %v2451 = vsel %vm2450, %v2445, %v2448
    %v2452 = vld [vmem:[%s16] sm:$0xff]
    %v2453 = vld [vmem:[%s16 + $0x8] sm:$0xff]
    %v2454 = vld [vmem:[%s16 + $0x10] sm:$0xff]
    %v2455 = vld [vmem:[%s16 + $0x18] sm:$0xff]
    %v2456 = vld [vmem:[%s17] sm:$0x1]
    %v2458 = vlaneseq
    %v2459 = vshrl.u32 %v2458, 7
    %v2460 = vsub.s32 0, %v2459
    %v2461 = vrot.slane %v2456, %v2460
    %v2464 = vsel %vm70, %v2451, 0
    %2466 = vmatprep.subr.mxu0 0.0
    %2467 = vmatpush1.msra.mxu0 %v2452
    %2468 = vmatprep.subr.mxu0 0.0
    %2469 = vmatpush1.msra.mxu0 %v2453
    %2470 = vmatprep.subr.mxu0 0.0
    %2471 = vmatpush1.msra.mxu0 %v2454
    %2472 = vmatprep.subr.mxu0 0.0
    %2473 = vmatpush1.msra.mxu0 %v2455
    %2474 = vmatprep.subr.mxu0 0.0
    %2475 = vmatpush1.msra.mxu0 0.0
    %2476 = vmatprep.subr.mxu0 0.0
    %2477 = vmatpush1.msra.mxu0 0.0
    %2478 = vmatprep.subr.mxu0 0.0
    %2479 = vmatpush1.msra.mxu0 0.0
    %2480 = vmatprep.subr.mxu0 0.0
    %2481 = vmatpush1.msra.mxu0 0.0
    %2482 = vmatprep.subr.mxu0 0.0
    %2483 = vmatpush1.msra.mxu0 0.0
    %2484 = vmatprep.subr.mxu0 0.0
    %2485 = vmatpush1.msra.mxu0 0.0
    %2486 = vmatprep.subr.mxu0 0.0
    %2487 = vmatpush1.msra.mxu0 0.0
    %2488 = vmatprep.subr.mxu0 0.0
    %2489 = vmatpush1.msra.mxu0 0.0
    %2490 = vmatprep.subr.mxu0 0.0
    %2491 = vmatpush1.msra.mxu0 0.0
    %2492 = vmatprep.subr.mxu0 0.0
    %2493 = vmatpush1.msra.mxu0 0.0
    %2494 = vmatprep.subr.mxu0 0.0
    %2495 = vmatpush1.msra.mxu0 0.0
    %2496 = vmatprep.subr.mxu0 0.0
    %2497 = vmatpush1.msra.mxu0 0.0
    %2498 = vmatprep.subr.mxu0 0.0
    %2499 = vmatpush1.msra.mxu0 0.0
    %2500 = vmatprep.subr.mxu0 0.0
    %2501 = vmatpush1.msra.mxu0 0.0
    %2502 = vmatprep.subr.mxu0 0.0
    %2503 = vmatpush1.msra.mxu0 0.0
    %2504 = vmatprep.subr.mxu0 0.0
    %2505 = vmatpush1.msra.mxu0 0.0
    %2506 = vmatprep.subr.mxu0 0.0
    %2507 = vmatpush1.msra.mxu0 0.0
    %2508 = vmatprep.subr.mxu0 0.0
    %2509 = vmatpush1.msra.mxu0 0.0
    %2510 = vmatprep.subr.mxu0 0.0
    %2511 = vmatpush1.msra.mxu0 0.0
    %2512 = vmatprep.subr.mxu0 0.0
    %2513 = vmatpush1.msra.mxu0 0.0
    %2514 = vmatprep.subr.mxu0 0.0
    %2515 = vmatpush1.msra.mxu0 0.0
    %2516 = vmatprep.subr.mxu0 0.0
    %2517 = vmatpush1.msra.mxu0 0.0
    %2518 = vmatprep.subr.mxu0 0.0
    %2519 = vmatpush1.msra.mxu0 0.0
    %2520 = vmatprep.subr.mxu0 0.0
    %2521 = vmatpush1.msra.mxu0 0.0
    %2522 = vmatprep.subr.mxu0 0.0
    %2523 = vmatpush1.msra.mxu0 0.0
    %2524 = vmatprep.subr.mxu0 0.0
    %2525 = vmatpush1.msra.mxu0 0.0
    %2526 = vmatprep.subr.mxu0 0.0
    %2527 = vmatpush1.msra.mxu0 0.0
    %2528 = vmatprep.subr.mxu0 0.0
    %2529 = vmatpush1.msra.mxu0 0.0
    %2530 = vmatprep.mubr.f32.mxu0 0.0
    %2531 = vmatmul.mubr.f32.gmra.mrb[0].mxu0 %v2464
    %v2532 = vpop.f32.mrb[0].mxu0
    %v2533 = vadd.f32 %v2461, %v2532
    %v2534 = vpop.f32.mrb[0].mxu0
    %2535 = vdwg.mxu0
    %v2536 = vtanh.pop %v2533
    %v2537 = vld [vmem:[%s18] sm:$0xff]
    %v2538 = vld [vmem:[%s18 + $0x8] sm:$0xff]
    %v2539 = vld [vmem:[%s18 + $0x10] sm:$0xff]
    %v2540 = vld [vmem:[%s18 + $0x18] sm:$0xff]
    %v2541 = vld [vmem:[%s19] sm:$0x1]
    %v2543 = vlaneseq
    %v2544 = vshrl.u32 %v2543, 7
    %v2545 = vsub.s32 0, %v2544
    %v2546 = vrot.slane %v2541, %v2545
    %v2549 = vsel %vm70, %v2536, 0
    %2551 = vmatprep.subr.mxu0 0.0
    %2552 = vmatpush1.msra.mxu0 %v2537
    %2553 = vmatprep.subr.mxu0 0.0
    %2554 = vmatpush1.msra.mxu0 %v2538
    %2555 = vmatprep.subr.mxu0 0.0
    %2556 = vmatpush1.msra.mxu0 %v2539
    %2557 = vmatprep.subr.mxu0 0.0
    %2558 = vmatpush1.msra.mxu0 %v2540
    %2559 = vmatprep.subr.mxu0 0.0
    %2560 = vmatpush1.msra.mxu0 0.0
    %2561 = vmatprep.subr.mxu0 0.0
    %2562 = vmatpush1.msra.mxu0 0.0
    %2563 = vmatprep.subr.mxu0 0.0
    %2564 = vmatpush1.msra.mxu0 0.0
    %2565 = vmatprep.subr.mxu0 0.0
    %2566 = vmatpush1.msra.mxu0 0.0
    %2567 = vmatprep.subr.mxu0 0.0
    %2568 = vmatpush1.msra.mxu0 0.0
    %2569 = vmatprep.subr.mxu0 0.0
    %2570 = vmatpush1.msra.mxu0 0.0
    %2571 = vmatprep.subr.mxu0 0.0
    %2572 = vmatpush1.msra.mxu0 0.0
    %2573 = vmatprep.subr.mxu0 0.0
    %2574 = vmatpush1.msra.mxu0 0.0
    %2575 = vmatprep.subr.mxu0 0.0
    %2576 = vmatpush1.msra.mxu0 0.0
    %2577 = vmatprep.subr.mxu0 0.0
    %2578 = vmatpush1.msra.mxu0 0.0
    %2579 = vmatprep.subr.mxu0 0.0
    %2580 = vmatpush1.msra.mxu0 0.0
    %2581 = vmatprep.subr.mxu0 0.0
    %2582 = vmatpush1.msra.mxu0 0.0
    %2583 = vmatprep.subr.mxu0 0.0
    %2584 = vmatpush1.msra.mxu0 0.0
    %2585 = vmatprep.subr.mxu0 0.0
    %2586 = vmatpush1.msra.mxu0 0.0
    %2587 = vmatprep.subr.mxu0 0.0
    %2588 = vmatpush1.msra.mxu0 0.0
    %2589 = vmatprep.subr.mxu0 0.0
    %2590 = vmatpush1.msra.mxu0 0.0
    %2591 = vmatprep.subr.mxu0 0.0
    %2592 = vmatpush1.msra.mxu0 0.0
    %2593 = vmatprep.subr.mxu0 0.0
    %2594 = vmatpush1.msra.mxu0 0.0
    %2595 = vmatprep.subr.mxu0 0.0
    %2596 = vmatpush1.msra.mxu0 0.0
    %2597 = vmatprep.subr.mxu0 0.0
    %2598 = vmatpush1.msra.mxu0 0.0
    %2599 = vmatprep.subr.mxu0 0.0
    %2600 = vmatpush1.msra.mxu0 0.0
    %2601 = vmatprep.subr.mxu0 0.0
    %2602 = vmatpush1.msra.mxu0 0.0
    %2603 = vmatprep.subr.mxu0 0.0
    %2604 = vmatpush1.msra.mxu0 0.0
    %2605 = vmatprep.subr.mxu0 0.0
    %2606 = vmatpush1.msra.mxu0 0.0
    %2607 = vmatprep.subr.mxu0 0.0
    %2608 = vmatpush1.msra.mxu0 0.0
    %2609 = vmatprep.subr.mxu0 0.0
    %2610 = vmatpush1.msra.mxu0 0.0
    %2611 = vmatprep.subr.mxu0 0.0
    %2612 = vmatpush1.msra.mxu0 0.0
    %2613 = vmatprep.subr.mxu0 0.0
    %2614 = vmatpush1.msra.mxu0 0.0
    %2615 = vmatprep.mubr.f32.mxu0 0.0
    %2616 = vmatmul.mubr.f32.gmra.mrb[0].mxu0 %v2549
    %v2617 = vpop.f32.mrb[0].mxu0
    %v2618 = vadd.f32 %v2546, %v2617
    %v2619 = vpop.f32.mrb[0].mxu0
    %2620 = vdwg.mxu0
    %vm2621 = vcmask 41984
    %2622 = vst.msk [vmem:[#allocation3] sm:$0x3] %vm2621, %v2618
    // Predicated region
    $region82: #{nli_forward.1} parent=1 // pred_check
      _
    $region83: #{nli_forward.1} parent=1 // pred_check_branch
      %2624 = sbr.rel (0) target = $region85
    $region84: #{nli_forward.1} parent=1 // pred_region
      %s2626 = ssub.s32 32, 32
      %2627 = vsyncadd [#allocation4], %s2626
      %s2629 = sshll.u32 [#allocation3], 4
      %s2630 = int_to_ptr.vmem [resolvable:$true] %s2629
      %2632 = dma.vmem_to_hbm [thread:$0]  %s2630, 32, %s20, [#allocation4]
    $region85: #{nli_forward.1} parent=1 // pred_fallthru
      _
    // Predicated region
    $region86: #{nli_forward.1} parent=1 // pred_check
      _
    $region87: #{nli_forward.1} parent=1 // pred_check_branch
      %2634 = sbr.rel (0) target = $region89
    $region88: #{nli_forward.1} parent=1 // pred_region
      %2635 = dma.done [#allocation4], 32
    $region89: #{nli_forward.1} parent=1 // pred_fallthru
      _
    %2636 = vsyncpa [#allocation4], 1

</llo_original>
